<compile_context>
chip_gen: v7x
topology: tpu7x:2x2x1
jax: 0.10.0
libtpu: 0.0.40
codegen_flags: <defaults>
</compile_context>

<pallas_src>
import jax
import jax.numpy as jnp
from jax.experimental import pallas as pl
from jax.experimental.pallas import tpu as pltpu  # noqa: F401  (TPU backend)

# ---------------- config (small, consistent with a BERT encoder) -------------
BATCH = 2
SEQ = 8
HIDDEN = 32
NUM_HEADS = 4
HEAD_DIM = HIDDEN // NUM_HEADS
INTERMEDIATE = 64
NUM_LAYERS = 2
VOCAB = 100
MAX_POS = 16
TYPE_VOCAB = 2
NUM_CLASSES = 6           # emotion classes
LOGITS_PAD = 128          # lane-friendly padded classifier width
LN_EPS = 1e-12
TOKENS = BATCH * SEQ


# ---------------- fused Pallas kernel -----------------------------------------
def _layernorm(x, g, b):
    """Row-wise LayerNorm over the hidden dim (f32 stats)."""
    mean = jnp.mean(x, axis=-1, keepdims=True)
    var = jnp.mean(jnp.square(x - mean), axis=-1, keepdims=True)
    return (x - mean) * jax.lax.rsqrt(var + LN_EPS) * g + b


def _bert_kernel(emb_ref, mask_ref,
                 emb_g_ref, emb_b_ref,
                 wqkv_ref, bqkv_ref, wo_ref, bo_ref,
                 aln_g_ref, aln_b_ref,
                 w1_ref, b1_ref, w2_ref, b2_ref,
                 fln_g_ref, fln_b_ref,
                 pool_w_ref, pool_b_ref,
                 fc_w_ref, fc_b_ref,
                 out_ref):
    f32 = jnp.float32
    scale = 1.0 / (HEAD_DIM ** 0.5)
    mask = mask_ref[...]                                     # [T, T] additive

    # Embedding LayerNorm.
    h = _layernorm(emb_ref[...].astype(f32), emb_g_ref[...], emb_b_ref[...])

    for l in range(NUM_LAYERS):                              # static unroll
        # ---- self-attention: single fused QKV projection -------------------
        qkv = jnp.dot(h, wqkv_ref[l], preferred_element_type=f32) + bqkv_ref[l]
        wo_l = wo_ref[l]                                     # [H, H]
        attn_out = jnp.zeros((TOKENS, HIDDEN), f32)
        for hd in range(NUM_HEADS):                          # static unroll
            lo, hi = hd * HEAD_DIM, (hd + 1) * HEAD_DIM
            q = qkv[:, lo:hi]                                # [T, Dh]
            k = qkv[:, HIDDEN + lo:HIDDEN + hi]
            v = qkv[:, 2 * HIDDEN + lo:2 * HIDDEN + hi]
            # scores: contract last dims directly (no explicit transpose of K)
            s = jax.lax.dot_general(q, k, (((1,), (1,)), ((), ())),
                                    preferred_element_type=f32)
            s = s * scale + mask                             # [T, T]
            p = jax.nn.softmax(s, axis=-1)
            ctx_h = jnp.dot(p, v, preferred_element_type=f32)            # [T, Dh]
            # Fold this head's context straight into the output projection:
            # concat_h(ctx_h) @ Wo == sum_h ctx_h @ Wo[h*Dh:(h+1)*Dh, :]
            attn_out = attn_out + jnp.dot(ctx_h, wo_l[lo:hi, :],
                                          preferred_element_type=f32)
        attn_out = attn_out + bo_ref[l]
        # residual add fused into the LayerNorm
        h = _layernorm(attn_out + h, aln_g_ref[l], aln_b_ref[l])

        # ---- feed-forward ---------------------------------------------------
        inter = jnp.dot(h, w1_ref[l], preferred_element_type=f32) + b1_ref[l]
        # TODO(synk): HF BERT uses exact (erf) GELU; tanh approximation used here.
        inter = jax.nn.gelu(inter, approximate=True)
        ffn_out = jnp.dot(inter, w2_ref[l], preferred_element_type=f32) + b2_ref[l]
        h = _layernorm(ffn_out + h, fln_g_ref[l], fln_b_ref[l])

    # ---- pooler on the [CLS] rows (row b*SEQ), selected via a tiny matmul ---
    col = jax.lax.broadcasted_iota(jnp.int32, (BATCH, TOKENS), 1)
    row = jax.lax.broadcasted_iota(jnp.int32, (BATCH, TOKENS), 0)
    sel = (col == row * SEQ).astype(f32)                     # [B, T] one-hot
    cls = jnp.dot(sel, h, preferred_element_type=f32)        # [B, H]
    pooled = jnp.tanh(jnp.dot(cls, pool_w_ref[...],
                              preferred_element_type=f32) + pool_b_ref[...])

    # ---- classification head (padded to 128 lanes for a dense store) -------
    logits = jnp.dot(pooled, fc_w_ref[...],
                     preferred_element_type=f32) + fc_b_ref[...]
    out_ref[...] = logits.astype(out_ref.dtype)


# ---------------- deterministic parameter init --------------------------------
def init_params(seed=0):
    key = jax.random.PRNGKey(seed)

    def nk():
        nonlocal key
        key, sub = jax.random.split(key)
        return sub

    def normal(shape):
        return (0.02 * jax.random.normal(nk(), shape)).astype(jnp.float32)

    def zeros(shape):
        return jnp.zeros(shape, jnp.float32)

    def ones(shape):
        return jnp.ones(shape, jnp.float32)

    wqkv, bqkv, wo, bo = [], [], [], []
    aln_g, aln_b = [], []
    w1, b1, w2, b2 = [], [], [], []
    fln_g, fln_b = [], []
    for _ in range(NUM_LAYERS):
        wq = normal((HIDDEN, HIDDEN))
        wk = normal((HIDDEN, HIDDEN))
        wv = normal((HIDDEN, HIDDEN))
        wqkv.append(jnp.concatenate([wq, wk, wv], axis=1))   # [H, 3H]
        bqkv.append(zeros((1, 3 * HIDDEN)))
        wo.append(normal((HIDDEN, HIDDEN)))
        bo.append(zeros((1, HIDDEN)))
        aln_g.append(ones((1, HIDDEN)))
        aln_b.append(zeros((1, HIDDEN)))
        w1.append(normal((HIDDEN, INTERMEDIATE)))
        b1.append(zeros((1, INTERMEDIATE)))
        w2.append(normal((INTERMEDIATE, HIDDEN)))
        b2.append(zeros((1, HIDDEN)))
        fln_g.append(ones((1, HIDDEN)))
        fln_b.append(zeros((1, HIDDEN)))

    fc_w = normal((HIDDEN, NUM_CLASSES))
    fc_w_pad = jnp.zeros((HIDDEN, LOGITS_PAD), jnp.float32).at[:, :NUM_CLASSES].set(fc_w)
    fc_b_pad = jnp.zeros((1, LOGITS_PAD), jnp.float32)

    return {
        "word_emb": normal((VOCAB, HIDDEN)),
        "pos_emb": normal((MAX_POS, HIDDEN)),
        "type_emb": normal((TYPE_VOCAB, HIDDEN)),
        "emb_ln_g": ones((1, HIDDEN)), "emb_ln_b": zeros((1, HIDDEN)),
        "wqkv": jnp.stack(wqkv), "bqkv": jnp.stack(bqkv),
        "wo": jnp.stack(wo), "bo": jnp.stack(bo),
        "attn_ln_g": jnp.stack(aln_g), "attn_ln_b": jnp.stack(aln_b),
        "w1": jnp.stack(w1), "b1": jnp.stack(b1),
        "w2": jnp.stack(w2), "b2": jnp.stack(b2),
        "ffn_ln_g": jnp.stack(fln_g), "ffn_ln_b": jnp.stack(fln_b),
        "pooler_w": normal((HIDDEN, HIDDEN)), "pooler_b": zeros((1, HIDDEN)),
        "fc_w": fc_w_pad, "fc_b": fc_b_pad,
    }


# ---------------- forward pass (gathers in JAX glue, everything else fused) ---
def bert_for_classification(params, input_ids, attention_mask=None, token_type_ids=None):
    B, S = input_ids.shape
    if attention_mask is None:
        attention_mask = jnp.ones((B, S), jnp.int32)
    if token_type_ids is None:
        token_type_ids = jnp.zeros((B, S), jnp.int32)

    # Embedding gathers stay in plain JAX (glue).
    pos_ids = jnp.arange(S)
    emb = (params["word_emb"][input_ids]
           + params["pos_emb"][pos_ids][None, :, :]
           + params["type_emb"][token_type_ids]).reshape(B * S, HIDDEN)

    # Combined additive attention mask over the flattened token axis:
    #   -10000 on padded keys within a batch (HF semantics), -1e9 across
    #   batches so a single [B*S, B*S] softmax reproduces per-batch attention.
    bid = jnp.arange(B * S) // S
    same_batch = bid[:, None] == bid[None, :]
    key_pad = (1.0 - attention_mask.astype(jnp.float32).reshape(B * S)) * -10000.0
    big_mask = jnp.where(same_batch, key_pad[None, :], -1e9).astype(jnp.float32)

    # One grid-less pallas_call for the whole encoder + pooler + head.
    logits_pad = pl.pallas_call(
        _bert_kernel,
        out_shape=jax.ShapeDtypeStruct((B, LOGITS_PAD), jnp.float32),
    )(emb, big_mask,
      params["emb_ln_g"], params["emb_ln_b"],
      params["wqkv"], params["bqkv"], params["wo"], params["bo"],
      params["attn_ln_g"], params["attn_ln_b"],
      params["w1"], params["b1"], params["w2"], params["b2"],
      params["ffn_ln_g"], params["ffn_ln_b"],
      params["pooler_w"], params["pooler_b"],
      params["fc_w"], params["fc_b"])

    return logits_pad[:, :NUM_CLASSES]


if __name__ == "__main__":
    key = jax.random.PRNGKey(0)
    k_ids, _ = jax.random.split(key)
    input_ids = jax.random.randint(k_ids, (BATCH, SEQ), 0, VOCAB, dtype=jnp.int32)
    attention_mask = jnp.array([[1] * SEQ,
                                [1] * (SEQ - 2) + [0, 0]], dtype=jnp.int32)
    token_type_ids = jnp.zeros((BATCH, SEQ), jnp.int32)

    params = init_params(0)
    logits = jax.jit(bert_for_classification)(params, input_ids,
                                              attention_mask, token_type_ids)
    jax.block_until_ready(logits)
    assert logits.shape == (BATCH, NUM_CLASSES)
    assert bool(jnp.all(jnp.isfinite(logits)))
    print("KERNEL_OK")
</pallas_src>

<mosaic_0001>
module attributes {stable_mosaic.version = 11 : i64} {
  func.func @_bert_kernel(%arg0: memref<16x32xf32, #tpu.memory_space<vmem>>, %arg1: memref<16x16xf32, #tpu.memory_space<vmem>>, %arg2: memref<1x32xf32, #tpu.memory_space<vmem>>, %arg3: memref<1x32xf32, #tpu.memory_space<vmem>>, %arg4: memref<2x32x96xf32, #tpu.memory_space<vmem>>, %arg5: memref<2x1x96xf32, #tpu.memory_space<vmem>>, %arg6: memref<2x32x32xf32, #tpu.memory_space<vmem>>, %arg7: memref<2x1x32xf32, #tpu.memory_space<vmem>>, %arg8: memref<2x1x32xf32, #tpu.memory_space<vmem>>, %arg9: memref<2x1x32xf32, #tpu.memory_space<vmem>>, %arg10: memref<2x32x64xf32, #tpu.memory_space<vmem>>, %arg11: memref<2x1x64xf32, #tpu.memory_space<vmem>>, %arg12: memref<2x64x32xf32, #tpu.memory_space<vmem>>, %arg13: memref<2x1x32xf32, #tpu.memory_space<vmem>>, %arg14: memref<2x1x32xf32, #tpu.memory_space<vmem>>, %arg15: memref<2x1x32xf32, #tpu.memory_space<vmem>>, %arg16: memref<32x32xf32, #tpu.memory_space<vmem>>, %arg17: memref<1x32xf32, #tpu.memory_space<vmem>>, %arg18: memref<32x128xf32, #tpu.memory_space<vmem>>, %arg19: memref<1x128xf32, #tpu.memory_space<vmem>>, %arg20: memref<2x128xf32, #tpu.memory_space<vmem>>) attributes {dimension_semantics = [], scalar_prefetch = 0 : i64, scratch_operands = 0 : i64, tpu.core_type = #tpu.core_type<tc>} {
    %c0 = arith.constant 0 : index
    %c0_0 = arith.constant 0 : index
    %0 = vector.load %arg1[%c0, %c0_0] : memref<16x16xf32, #tpu.memory_space<vmem>>, vector<16x16xf32>
    %c0_1 = arith.constant 0 : index
    %c0_2 = arith.constant 0 : index
    %1 = vector.load %arg0[%c0_1, %c0_2] : memref<16x32xf32, #tpu.memory_space<vmem>>, vector<16x32xf32>
    %c0_3 = arith.constant 0 : index
    %c0_4 = arith.constant 0 : index
    %2 = vector.load %arg2[%c0_3, %c0_4] : memref<1x32xf32, #tpu.memory_space<vmem>>, vector<1x32xf32>
    %c0_5 = arith.constant 0 : index
    %c0_6 = arith.constant 0 : index
    %3 = vector.load %arg3[%c0_5, %c0_6] : memref<1x32xf32, #tpu.memory_space<vmem>>, vector<1x32xf32>
    %cst = arith.constant dense<0.000000e+00> : vector<16xf32>
    %4 = vector.multi_reduction <add>, %1, %cst [1] : vector<16x32xf32> to vector<16xf32>
    %5 = vector.shape_cast %4 : vector<16xf32> to vector<16x1xf32>
    %cst_7 = arith.constant 3.200000e+01 : f32
    %6 = vector.broadcast %cst_7 : f32 to vector<16x1xf32>
    %7 = arith.divf %5, %6 : vector<16x1xf32>
    %8 = vector.broadcast %7 : vector<16x1xf32> to vector<16x32xf32>
    %9 = arith.subf %1, %8 : vector<16x32xf32>
    %10 = arith.mulf %9, %9 : vector<16x32xf32>
    %cst_8 = arith.constant dense<0.000000e+00> : vector<16xf32>
    %11 = vector.multi_reduction <add>, %10, %cst_8 [1] : vector<16x32xf32> to vector<16xf32>
    %12 = vector.shape_cast %11 : vector<16xf32> to vector<16x1xf32>
    %cst_9 = arith.constant 3.200000e+01 : f32
    %13 = vector.broadcast %cst_9 : f32 to vector<16x1xf32>
    %14 = arith.divf %12, %13 : vector<16x1xf32>
    %15 = vector.broadcast %7 : vector<16x1xf32> to vector<16x32xf32>
    %16 = arith.subf %1, %15 : vector<16x32xf32>
    %cst_10 = arith.constant 9.99999996E-13 : f32
    %17 = vector.broadcast %cst_10 : f32 to vector<16x1xf32>
    %18 = arith.addf %14, %17 : vector<16x1xf32>
    %19 = math.rsqrt %18 : vector<16x1xf32>
    %20 = vector.broadcast %19 : vector<16x1xf32> to vector<16x32xf32>
    %21 = arith.mulf %16, %20 : vector<16x32xf32>
    %22 = vector.broadcast %2 : vector<1x32xf32> to vector<16x32xf32>
    %23 = arith.mulf %21, %22 : vector<16x32xf32>
    %24 = vector.broadcast %3 : vector<1x32xf32> to vector<16x32xf32>
    %25 = arith.addf %23, %24 : vector<16x32xf32>
    %c0_11 = arith.constant 0 : index
    %c0_12 = arith.constant 0 : index
    %c0_13 = arith.constant 0 : index
    %26 = vector.load %arg4[%c0_11, %c0_12, %c0_13] : memref<2x32x96xf32, #tpu.memory_space<vmem>>, vector<1x32x96xf32>
    %27 = vector.shape_cast %26 : vector<1x32x96xf32> to vector<32x96xf32>
    %cst_14 = arith.constant dense<0.000000e+00> : vector<16x96xf32>
    %28 = tpu.matmul %25, %27, %cst_14 {dimension_numbers = #tpu.dot_dimension_numbers<[1], [0], [0], [1], [0, 0, 1, 1], [], []>} : vector<16x32xf32>, vector<32x96xf32>, vector<16x96xf32> -> vector<16x96xf32>
    %c0_15 = arith.constant 0 : index
    %c0_16 = arith.constant 0 : index
    %c0_17 = arith.constant 0 : index
    %29 = vector.load %arg5[%c0_15, %c0_16, %c0_17] : memref<2x1x96xf32, #tpu.memory_space<vmem>>, vector<1x1x96xf32>
    %30 = vector.shape_cast %29 : vector<1x1x96xf32> to vector<1x96xf32>
    %31 = vector.broadcast %30 : vector<1x96xf32> to vector<16x96xf32>
    %32 = arith.addf %28, %31 : vector<16x96xf32>
    %c0_18 = arith.constant 0 : index
    %c0_19 = arith.constant 0 : index
    %c0_20 = arith.constant 0 : index
    %33 = vector.load %arg6[%c0_18, %c0_19, %c0_20] : memref<2x32x32xf32, #tpu.memory_space<vmem>>, vector<1x32x32xf32>
    %34 = vector.shape_cast %33 : vector<1x32x32xf32> to vector<32x32xf32>
    %cst_21 = arith.constant 0.000000e+00 : f32
    %35 = vector.broadcast %cst_21 : f32 to vector<16x32xf32>
    %36 = vector.extract_strided_slice %32 {offsets = [0, 0], sizes = [16, 8], strides = [1, 1]} : vector<16x96xf32> to vector<16x8xf32>
    %37 = vector.extract_strided_slice %32 {offsets = [0, 32], sizes = [16, 8], strides = [1, 1]} : vector<16x96xf32> to vector<16x8xf32>
    %38 = vector.extract_strided_slice %32 {offsets = [0, 64], sizes = [16, 8], strides = [1, 1]} : vector<16x96xf32> to vector<16x8xf32>
    %cst_22 = arith.constant dense<0.000000e+00> : vector<16x16xf32>
    %39 = tpu.matmul %36, %37, %cst_22 {dimension_numbers = #tpu.dot_dimension_numbers<[1], [1], [0], [0], [0, 0, 1, 0], [], []>} : vector<16x8xf32>, vector<16x8xf32>, vector<16x16xf32> -> vector<16x16xf32>
    %cst_23 = arith.constant 0.353553385 : f32
    %40 = vector.broadcast %cst_23 : f32 to vector<16x16xf32>
    %41 = arith.mulf %39, %40 : vector<16x16xf32>
    %42 = arith.addf %41, %0 : vector<16x16xf32>
    %cst_24 = arith.constant dense<0xFF800000> : vector<16xf32>
    %43 = vector.multi_reduction <maximumf>, %42, %cst_24 [1] : vector<16x16xf32> to vector<16xf32>
    %cst_25 = arith.constant 0xFF800000 : f32
    %44 = vector.broadcast %cst_25 : f32 to vector<16xf32>
    %45 = arith.maximumf %44, %43 : vector<16xf32>
    %46 = vector.shape_cast %45 : vector<16xf32> to vector<16x1xf32>
    %47 = vector.broadcast %46 : vector<16x1xf32> to vector<16x16xf32>
    %48 = arith.subf %42, %47 : vector<16x16xf32>
    %49 = math.exp %48 : vector<16x16xf32>
    %cst_26 = arith.constant dense<0.000000e+00> : vector<16xf32>
    %50 = vector.multi_reduction <add>, %49, %cst_26 [1] : vector<16x16xf32> to vector<16xf32>
    %51 = vector.shape_cast %50 : vector<16xf32> to vector<16x1xf32>
    %52 = vector.broadcast %51 : vector<16x1xf32> to vector<16x16xf32>
    %53 = arith.divf %49, %52 : vector<16x16xf32>
    %cst_27 = arith.constant dense<0.000000e+00> : vector<16x8xf32>
    %54 = tpu.matmul %53, %38, %cst_27 {dimension_numbers = #tpu.dot_dimension_numbers<[1], [0], [0], [1], [0, 0, 1, 1], [], []>} : vector<16x16xf32>, vector<16x8xf32>, vector<16x8xf32> -> vector<16x8xf32>
    %55 = vector.extract_strided_slice %34 {offsets = [0, 0], sizes = [8, 32], strides = [1, 1]} : vector<32x32xf32> to vector<8x32xf32>
    %cst_28 = arith.constant dense<0.000000e+00> : vector<16x32xf32>
    %56 = tpu.matmul %54, %55, %cst_28 {dimension_numbers = #tpu.dot_dimension_numbers<[1], [0], [0], [1], [0, 0, 1, 1], [], []>} : vector<16x8xf32>, vector<8x32xf32>, vector<16x32xf32> -> vector<16x32xf32>
    %57 = arith.addf %35, %56 : vector<16x32xf32>
    %58 = vector.extract_strided_slice %32 {offsets = [0, 8], sizes = [16, 8], strides = [1, 1]} : vector<16x96xf32> to vector<16x8xf32>
    %59 = vector.extract_strided_slice %32 {offsets = [0, 40], sizes = [16, 8], strides = [1, 1]} : vector<16x96xf32> to vector<16x8xf32>
    %60 = vector.extract_strided_slice %32 {offsets = [0, 72], sizes = [16, 8], strides = [1, 1]} : vector<16x96xf32> to vector<16x8xf32>
    %cst_29 = arith.constant dense<0.000000e+00> : vector<16x16xf32>
    %61 = tpu.matmul %58, %59, %cst_29 {dimension_numbers = #tpu.dot_dimension_numbers<[1], [1], [0], [0], [0, 0, 1, 0], [], []>} : vector<16x8xf32>, vector<16x8xf32>, vector<16x16xf32> -> vector<16x16xf32>
    %cst_30 = arith.constant 0.353553385 : f32
    %62 = vector.broadcast %cst_30 : f32 to vector<16x16xf32>
    %63 = arith.mulf %61, %62 : vector<16x16xf32>
    %64 = arith.addf %63, %0 : vector<16x16xf32>
    %cst_31 = arith.constant dense<0xFF800000> : vector<16xf32>
    %65 = vector.multi_reduction <maximumf>, %64, %cst_31 [1] : vector<16x16xf32> to vector<16xf32>
    %cst_32 = arith.constant 0xFF800000 : f32
    %66 = vector.broadcast %cst_32 : f32 to vector<16xf32>
    %67 = arith.maximumf %66, %65 : vector<16xf32>
    %68 = vector.shape_cast %67 : vector<16xf32> to vector<16x1xf32>
    %69 = vector.broadcast %68 : vector<16x1xf32> to vector<16x16xf32>
    %70 = arith.subf %64, %69 : vector<16x16xf32>
    %71 = math.exp %70 : vector<16x16xf32>
    %cst_33 = arith.constant dense<0.000000e+00> : vector<16xf32>
    %72 = vector.multi_reduction <add>, %71, %cst_33 [1] : vector<16x16xf32> to vector<16xf32>
    %73 = vector.shape_cast %72 : vector<16xf32> to vector<16x1xf32>
    %74 = vector.broadcast %73 : vector<16x1xf32> to vector<16x16xf32>
    %75 = arith.divf %71, %74 : vector<16x16xf32>
    %cst_34 = arith.constant dense<0.000000e+00> : vector<16x8xf32>
    %76 = tpu.matmul %75, %60, %cst_34 {dimension_numbers = #tpu.dot_dimension_numbers<[1], [0], [0], [1], [0, 0, 1, 1], [], []>} : vector<16x16xf32>, vector<16x8xf32>, vector<16x8xf32> -> vector<16x8xf32>
    %77 = vector.extract_strided_slice %34 {offsets = [8, 0], sizes = [8, 32], strides = [1, 1]} : vector<32x32xf32> to vector<8x32xf32>
    %cst_35 = arith.constant dense<0.000000e+00> : vector<16x32xf32>
    %78 = tpu.matmul %76, %77, %cst_35 {dimension_numbers = #tpu.dot_dimension_numbers<[1], [0], [0], [1], [0, 0, 1, 1], [], []>} : vector<16x8xf32>, vector<8x32xf32>, vector<16x32xf32> -> vector<16x32xf32>
    %79 = arith.addf %57, %78 : vector<16x32xf32>
    %80 = vector.extract_strided_slice %32 {offsets = [0, 16], sizes = [16, 8], strides = [1, 1]} : vector<16x96xf32> to vector<16x8xf32>
    %81 = vector.extract_strided_slice %32 {offsets = [0, 48], sizes = [16, 8], strides = [1, 1]} : vector<16x96xf32> to vector<16x8xf32>
    %82 = vector.extract_strided_slice %32 {offsets = [0, 80], sizes = [16, 8], strides = [1, 1]} : vector<16x96xf32> to vector<16x8xf32>
    %cst_36 = arith.constant dense<0.000000e+00> : vector<16x16xf32>
    %83 = tpu.matmul %80, %81, %cst_36 {dimension_numbers = #tpu.dot_dimension_numbers<[1], [1], [0], [0], [0, 0, 1, 0], [], []>} : vector<16x8xf32>, vector<16x8xf32>, vector<16x16xf32> -> vector<16x16xf32>
    %cst_37 = arith.constant 0.353553385 : f32
    %84 = vector.broadcast %cst_37 : f32 to vector<16x16xf32>
    %85 = arith.mulf %83, %84 : vector<16x16xf32>
    %86 = arith.addf %85, %0 : vector<16x16xf32>
    %cst_38 = arith.constant dense<0xFF800000> : vector<16xf32>
    %87 = vector.multi_reduction <maximumf>, %86, %cst_38 [1] : vector<16x16xf32> to vector<16xf32>
    %cst_39 = arith.constant 0xFF800000 : f32
    %88 = vector.broadcast %cst_39 : f32 to vector<16xf32>
    %89 = arith.maximumf %88, %87 : vector<16xf32>
    %90 = vector.shape_cast %89 : vector<16xf32> to vector<16x1xf32>
    %91 = vector.broadcast %90 : vector<16x1xf32> to vector<16x16xf32>
    %92 = arith.subf %86, %91 : vector<16x16xf32>
    %93 = math.exp %92 : vector<16x16xf32>
    %cst_40 = arith.constant dense<0.000000e+00> : vector<16xf32>
    %94 = vector.multi_reduction <add>, %93, %cst_40 [1] : vector<16x16xf32> to vector<16xf32>
    %95 = vector.shape_cast %94 : vector<16xf32> to vector<16x1xf32>
    %96 = vector.broadcast %95 : vector<16x1xf32> to vector<16x16xf32>
    %97 = arith.divf %93, %96 : vector<16x16xf32>
    %cst_41 = arith.constant dense<0.000000e+00> : vector<16x8xf32>
    %98 = tpu.matmul %97, %82, %cst_41 {dimension_numbers = #tpu.dot_dimension_numbers<[1], [0], [0], [1], [0, 0, 1, 1], [], []>} : vector<16x16xf32>, vector<16x8xf32>, vector<16x8xf32> -> vector<16x8xf32>
    %99 = vector.extract_strided_slice %34 {offsets = [16, 0], sizes = [8, 32], strides = [1, 1]} : vector<32x32xf32> to vector<8x32xf32>
    %cst_42 = arith.constant dense<0.000000e+00> : vector<16x32xf32>
    %100 = tpu.matmul %98, %99, %cst_42 {dimension_numbers = #tpu.dot_dimension_numbers<[1], [0], [0], [1], [0, 0, 1, 1], [], []>} : vector<16x8xf32>, vector<8x32xf32>, vector<16x32xf32> -> vector<16x32xf32>
    %101 = arith.addf %79, %100 : vector<16x32xf32>
    %102 = vector.extract_strided_slice %32 {offsets = [0, 24], sizes = [16, 8], strides = [1, 1]} : vector<16x96xf32> to vector<16x8xf32>
    %103 = vector.extract_strided_slice %32 {offsets = [0, 56], sizes = [16, 8], strides = [1, 1]} : vector<16x96xf32> to vector<16x8xf32>
    %104 = vector.extract_strided_slice %32 {offsets = [0, 88], sizes = [16, 8], strides = [1, 1]} : vector<16x96xf32> to vector<16x8xf32>
    %cst_43 = arith.constant dense<0.000000e+00> : vector<16x16xf32>
    %105 = tpu.matmul %102, %103, %cst_43 {dimension_numbers = #tpu.dot_dimension_numbers<[1], [1], [0], [0], [0, 0, 1, 0], [], []>} : vector<16x8xf32>, vector<16x8xf32>, vector<16x16xf32> -> vector<16x16xf32>
    %cst_44 = arith.constant 0.353553385 : f32
    %106 = vector.broadcast %cst_44 : f32 to vector<16x16xf32>
    %107 = arith.mulf %105, %106 : vector<16x16xf32>
    %108 = arith.addf %107, %0 : vector<16x16xf32>
    %cst_45 = arith.constant dense<0xFF800000> : vector<16xf32>
    %109 = vector.multi_reduction <maximumf>, %108, %cst_45 [1] : vector<16x16xf32> to vector<16xf32>
    %cst_46 = arith.constant 0xFF800000 : f32
    %110 = vector.broadcast %cst_46 : f32 to vector<16xf32>
    %111 = arith.maximumf %110, %109 : vector<16xf32>
    %112 = vector.shape_cast %111 : vector<16xf32> to vector<16x1xf32>
    %113 = vector.broadcast %112 : vector<16x1xf32> to vector<16x16xf32>
    %114 = arith.subf %108, %113 : vector<16x16xf32>
    %115 = math.exp %114 : vector<16x16xf32>
    %cst_47 = arith.constant dense<0.000000e+00> : vector<16xf32>
    %116 = vector.multi_reduction <add>, %115, %cst_47 [1] : vector<16x16xf32> to vector<16xf32>
    %117 = vector.shape_cast %116 : vector<16xf32> to vector<16x1xf32>
    %118 = vector.broadcast %117 : vector<16x1xf32> to vector<16x16xf32>
    %119 = arith.divf %115, %118 : vector<16x16xf32>
    %cst_48 = arith.constant dense<0.000000e+00> : vector<16x8xf32>
    %120 = tpu.matmul %119, %104, %cst_48 {dimension_numbers = #tpu.dot_dimension_numbers<[1], [0], [0], [1], [0, 0, 1, 1], [], []>} : vector<16x16xf32>, vector<16x8xf32>, vector<16x8xf32> -> vector<16x8xf32>
    %121 = vector.extract_strided_slice %34 {offsets = [24, 0], sizes = [8, 32], strides = [1, 1]} : vector<32x32xf32> to vector<8x32xf32>
    %cst_49 = arith.constant dense<0.000000e+00> : vector<16x32xf32>
    %122 = tpu.matmul %120, %121, %cst_49 {dimension_numbers = #tpu.dot_dimension_numbers<[1], [0], [0], [1], [0, 0, 1, 1], [], []>} : vector<16x8xf32>, vector<8x32xf32>, vector<16x32xf32> -> vector<16x32xf32>
    %123 = arith.addf %101, %122 : vector<16x32xf32>
    %c0_50 = arith.constant 0 : index
    %c0_51 = arith.constant 0 : index
    %c0_52 = arith.constant 0 : index
    %124 = vector.load %arg7[%c0_50, %c0_51, %c0_52] : memref<2x1x32xf32, #tpu.memory_space<vmem>>, vector<1x1x32xf32>
    %125 = vector.shape_cast %124 : vector<1x1x32xf32> to vector<1x32xf32>
    %126 = vector.broadcast %125 : vector<1x32xf32> to vector<16x32xf32>
    %127 = arith.addf %123, %126 : vector<16x32xf32>
    %128 = arith.addf %127, %25 : vector<16x32xf32>
    %c0_53 = arith.constant 0 : index
    %c0_54 = arith.constant 0 : index
    %c0_55 = arith.constant 0 : index
    %129 = vector.load %arg8[%c0_53, %c0_54, %c0_55] : memref<2x1x32xf32, #tpu.memory_space<vmem>>, vector<1x1x32xf32>
    %130 = vector.shape_cast %129 : vector<1x1x32xf32> to vector<1x32xf32>
    %c0_56 = arith.constant 0 : index
    %c0_57 = arith.constant 0 : index
    %c0_58 = arith.constant 0 : index
    %131 = vector.load %arg9[%c0_56, %c0_57, %c0_58] : memref<2x1x32xf32, #tpu.memory_space<vmem>>, vector<1x1x32xf32>
    %132 = vector.shape_cast %131 : vector<1x1x32xf32> to vector<1x32xf32>
    %cst_59 = arith.constant dense<0.000000e+00> : vector<16xf32>
    %133 = vector.multi_reduction <add>, %128, %cst_59 [1] : vector<16x32xf32> to vector<16xf32>
    %134 = vector.shape_cast %133 : vector<16xf32> to vector<16x1xf32>
    %cst_60 = arith.constant 3.200000e+01 : f32
    %135 = vector.broadcast %cst_60 : f32 to vector<16x1xf32>
    %136 = arith.divf %134, %135 : vector<16x1xf32>
    %137 = vector.broadcast %136 : vector<16x1xf32> to vector<16x32xf32>
    %138 = arith.subf %128, %137 : vector<16x32xf32>
    %139 = arith.mulf %138, %138 : vector<16x32xf32>
    %cst_61 = arith.constant dense<0.000000e+00> : vector<16xf32>
    %140 = vector.multi_reduction <add>, %139, %cst_61 [1] : vector<16x32xf32> to vector<16xf32>
    %141 = vector.shape_cast %140 : vector<16xf32> to vector<16x1xf32>
    %cst_62 = arith.constant 3.200000e+01 : f32
    %142 = vector.broadcast %cst_62 : f32 to vector<16x1xf32>
    %143 = arith.divf %141, %142 : vector<16x1xf32>
    %144 = vector.broadcast %136 : vector<16x1xf32> to vector<16x32xf32>
    %145 = arith.subf %128, %144 : vector<16x32xf32>
    %cst_63 = arith.constant 9.99999996E-13 : f32
    %146 = vector.broadcast %cst_63 : f32 to vector<16x1xf32>
    %147 = arith.addf %143, %146 : vector<16x1xf32>
    %148 = math.rsqrt %147 : vector<16x1xf32>
    %149 = vector.broadcast %148 : vector<16x1xf32> to vector<16x32xf32>
    %150 = arith.mulf %145, %149 : vector<16x32xf32>
    %151 = vector.broadcast %130 : vector<1x32xf32> to vector<16x32xf32>
    %152 = arith.mulf %150, %151 : vector<16x32xf32>
    %153 = vector.broadcast %132 : vector<1x32xf32> to vector<16x32xf32>
    %154 = arith.addf %152, %153 : vector<16x32xf32>
    %c0_64 = arith.constant 0 : index
    %c0_65 = arith.constant 0 : index
    %c0_66 = arith.constant 0 : index
    %155 = vector.load %arg10[%c0_64, %c0_65, %c0_66] : memref<2x32x64xf32, #tpu.memory_space<vmem>>, vector<1x32x64xf32>
    %156 = vector.shape_cast %155 : vector<1x32x64xf32> to vector<32x64xf32>
    %cst_67 = arith.constant dense<0.000000e+00> : vector<16x64xf32>
    %157 = tpu.matmul %154, %156, %cst_67 {dimension_numbers = #tpu.dot_dimension_numbers<[1], [0], [0], [1], [0, 0, 1, 1], [], []>} : vector<16x32xf32>, vector<32x64xf32>, vector<16x64xf32> -> vector<16x64xf32>
    %c0_68 = arith.constant 0 : index
    %c0_69 = arith.constant 0 : index
    %c0_70 = arith.constant 0 : index
    %158 = vector.load %arg11[%c0_68, %c0_69, %c0_70] : memref<2x1x64xf32, #tpu.memory_space<vmem>>, vector<1x1x64xf32>
    %159 = vector.shape_cast %158 : vector<1x1x64xf32> to vector<1x64xf32>
    %160 = vector.broadcast %159 : vector<1x64xf32> to vector<16x64xf32>
    %161 = arith.addf %157, %160 : vector<16x64xf32>
    %162 = arith.mulf %161, %161 : vector<16x64xf32>
    %163 = arith.mulf %161, %162 : vector<16x64xf32>
    %cst_71 = arith.constant 4.471500e-02 : f32
    %164 = vector.broadcast %cst_71 : f32 to vector<16x64xf32>
    %165 = arith.mulf %164, %163 : vector<16x64xf32>
    %166 = arith.addf %161, %165 : vector<16x64xf32>
    %cst_72 = arith.constant 0.797884583 : f32
    %167 = vector.broadcast %cst_72 : f32 to vector<16x64xf32>
    %168 = arith.mulf %167, %166 : vector<16x64xf32>
    %169 = math.tanh %168 : vector<16x64xf32>
    %cst_73 = arith.constant 1.000000e+00 : f32
    %170 = vector.broadcast %cst_73 : f32 to vector<16x64xf32>
    %171 = arith.addf %170, %169 : vector<16x64xf32>
    %cst_74 = arith.constant 5.000000e-01 : f32
    %172 = vector.broadcast %cst_74 : f32 to vector<16x64xf32>
    %173 = arith.mulf %172, %171 : vector<16x64xf32>
    %174 = arith.mulf %161, %173 : vector<16x64xf32>
    %c0_75 = arith.constant 0 : index
    %c0_76 = arith.constant 0 : index
    %c0_77 = arith.constant 0 : index
    %175 = vector.load %arg12[%c0_75, %c0_76, %c0_77] : memref<2x64x32xf32, #tpu.memory_space<vmem>>, vector<1x64x32xf32>
    %176 = vector.shape_cast %175 : vector<1x64x32xf32> to vector<64x32xf32>
    %cst_78 = arith.constant dense<0.000000e+00> : vector<16x32xf32>
    %177 = tpu.matmul %174, %176, %cst_78 {dimension_numbers = #tpu.dot_dimension_numbers<[1], [0], [0], [1], [0, 0, 1, 1], [], []>} : vector<16x64xf32>, vector<64x32xf32>, vector<16x32xf32> -> vector<16x32xf32>
    %c0_79 = arith.constant 0 : index
    %c0_80 = arith.constant 0 : index
    %c0_81 = arith.constant 0 : index
    %178 = vector.load %arg13[%c0_79, %c0_80, %c0_81] : memref<2x1x32xf32, #tpu.memory_space<vmem>>, vector<1x1x32xf32>
    %179 = vector.shape_cast %178 : vector<1x1x32xf32> to vector<1x32xf32>
    %180 = vector.broadcast %179 : vector<1x32xf32> to vector<16x32xf32>
    %181 = arith.addf %177, %180 : vector<16x32xf32>
    %182 = arith.addf %181, %154 : vector<16x32xf32>
    %c0_82 = arith.constant 0 : index
    %c0_83 = arith.constant 0 : index
    %c0_84 = arith.constant 0 : index
    %183 = vector.load %arg14[%c0_82, %c0_83, %c0_84] : memref<2x1x32xf32, #tpu.memory_space<vmem>>, vector<1x1x32xf32>
    %184 = vector.shape_cast %183 : vector<1x1x32xf32> to vector<1x32xf32>
    %c0_85 = arith.constant 0 : index
    %c0_86 = arith.constant 0 : index
    %c0_87 = arith.constant 0 : index
    %185 = vector.load %arg15[%c0_85, %c0_86, %c0_87] : memref<2x1x32xf32, #tpu.memory_space<vmem>>, vector<1x1x32xf32>
    %186 = vector.shape_cast %185 : vector<1x1x32xf32> to vector<1x32xf32>
    %cst_88 = arith.constant dense<0.000000e+00> : vector<16xf32>
    %187 = vector.multi_reduction <add>, %182, %cst_88 [1] : vector<16x32xf32> to vector<16xf32>
    %188 = vector.shape_cast %187 : vector<16xf32> to vector<16x1xf32>
    %cst_89 = arith.constant 3.200000e+01 : f32
    %189 = vector.broadcast %cst_89 : f32 to vector<16x1xf32>
    %190 = arith.divf %188, %189 : vector<16x1xf32>
    %191 = vector.broadcast %190 : vector<16x1xf32> to vector<16x32xf32>
    %192 = arith.subf %182, %191 : vector<16x32xf32>
    %193 = arith.mulf %192, %192 : vector<16x32xf32>
    %cst_90 = arith.constant dense<0.000000e+00> : vector<16xf32>
    %194 = vector.multi_reduction <add>, %193, %cst_90 [1] : vector<16x32xf32> to vector<16xf32>
    %195 = vector.shape_cast %194 : vector<16xf32> to vector<16x1xf32>
    %cst_91 = arith.constant 3.200000e+01 : f32
    %196 = vector.broadcast %cst_91 : f32 to vector<16x1xf32>
    %197 = arith.divf %195, %196 : vector<16x1xf32>
    %198 = vector.broadcast %190 : vector<16x1xf32> to vector<16x32xf32>
    %199 = arith.subf %182, %198 : vector<16x32xf32>
    %cst_92 = arith.constant 9.99999996E-13 : f32
    %200 = vector.broadcast %cst_92 : f32 to vector<16x1xf32>
    %201 = arith.addf %197, %200 : vector<16x1xf32>
    %202 = math.rsqrt %201 : vector<16x1xf32>
    %203 = vector.broadcast %202 : vector<16x1xf32> to vector<16x32xf32>
    %204 = arith.mulf %199, %203 : vector<16x32xf32>
    %205 = vector.broadcast %184 : vector<1x32xf32> to vector<16x32xf32>
    %206 = arith.mulf %204, %205 : vector<16x32xf32>
    %207 = vector.broadcast %186 : vector<1x32xf32> to vector<16x32xf32>
    %208 = arith.addf %206, %207 : vector<16x32xf32>
    %c1 = arith.constant 1 : index
    %c0_93 = arith.constant 0 : index
    %c0_94 = arith.constant 0 : index
    %209 = vector.load %arg4[%c1, %c0_93, %c0_94] : memref<2x32x96xf32, #tpu.memory_space<vmem>>, vector<1x32x96xf32>
    %210 = vector.shape_cast %209 : vector<1x32x96xf32> to vector<32x96xf32>
    %cst_95 = arith.constant dense<0.000000e+00> : vector<16x96xf32>
    %211 = tpu.matmul %208, %210, %cst_95 {dimension_numbers = #tpu.dot_dimension_numbers<[1], [0], [0], [1], [0, 0, 1, 1], [], []>} : vector<16x32xf32>, vector<32x96xf32>, vector<16x96xf32> -> vector<16x96xf32>
    %c1_96 = arith.constant 1 : index
    %c0_97 = arith.constant 0 : index
    %c0_98 = arith.constant 0 : index
    %212 = vector.load %arg5[%c1_96, %c0_97, %c0_98] : memref<2x1x96xf32, #tpu.memory_space<vmem>>, vector<1x1x96xf32>
    %213 = vector.shape_cast %212 : vector<1x1x96xf32> to vector<1x96xf32>
    %214 = vector.broadcast %213 : vector<1x96xf32> to vector<16x96xf32>
    %215 = arith.addf %211, %214 : vector<16x96xf32>
    %c1_99 = arith.constant 1 : index
    %c0_100 = arith.constant 0 : index
    %c0_101 = arith.constant 0 : index
    %216 = vector.load %arg6[%c1_99, %c0_100, %c0_101] : memref<2x32x32xf32, #tpu.memory_space<vmem>>, vector<1x32x32xf32>
    %217 = vector.shape_cast %216 : vector<1x32x32xf32> to vector<32x32xf32>
    %cst_102 = arith.constant 0.000000e+00 : f32
    %218 = vector.broadcast %cst_102 : f32 to vector<16x32xf32>
    %219 = vector.extract_strided_slice %215 {offsets = [0, 0], sizes = [16, 8], strides = [1, 1]} : vector<16x96xf32> to vector<16x8xf32>
    %220 = vector.extract_strided_slice %215 {offsets = [0, 32], sizes = [16, 8], strides = [1, 1]} : vector<16x96xf32> to vector<16x8xf32>
    %221 = vector.extract_strided_slice %215 {offsets = [0, 64], sizes = [16, 8], strides = [1, 1]} : vector<16x96xf32> to vector<16x8xf32>
    %cst_103 = arith.constant dense<0.000000e+00> : vector<16x16xf32>
    %222 = tpu.matmul %219, %220, %cst_103 {dimension_numbers = #tpu.dot_dimension_numbers<[1], [1], [0], [0], [0, 0, 1, 0], [], []>} : vector<16x8xf32>, vector<16x8xf32>, vector<16x16xf32> -> vector<16x16xf32>
    %cst_104 = arith.constant 0.353553385 : f32
    %223 = vector.broadcast %cst_104 : f32 to vector<16x16xf32>
    %224 = arith.mulf %222, %223 : vector<16x16xf32>
    %225 = arith.addf %224, %0 : vector<16x16xf32>
    %cst_105 = arith.constant dense<0xFF800000> : vector<16xf32>
    %226 = vector.multi_reduction <maximumf>, %225, %cst_105 [1] : vector<16x16xf32> to vector<16xf32>
    %cst_106 = arith.constant 0xFF800000 : f32
    %227 = vector.broadcast %cst_106 : f32 to vector<16xf32>
    %228 = arith.maximumf %227, %226 : vector<16xf32>
    %229 = vector.shape_cast %228 : vector<16xf32> to vector<16x1xf32>
    %230 = vector.broadcast %229 : vector<16x1xf32> to vector<16x16xf32>
    %231 = arith.subf %225, %230 : vector<16x16xf32>
    %232 = math.exp %231 : vector<16x16xf32>
    %cst_107 = arith.constant dense<0.000000e+00> : vector<16xf32>
    %233 = vector.multi_reduction <add>, %232, %cst_107 [1] : vector<16x16xf32> to vector<16xf32>
    %234 = vector.shape_cast %233 : vector<16xf32> to vector<16x1xf32>
    %235 = vector.broadcast %234 : vector<16x1xf32> to vector<16x16xf32>
    %236 = arith.divf %232, %235 : vector<16x16xf32>
    %cst_108 = arith.constant dense<0.000000e+00> : vector<16x8xf32>
    %237 = tpu.matmul %236, %221, %cst_108 {dimension_numbers = #tpu.dot_dimension_numbers<[1], [0], [0], [1], [0, 0, 1, 1], [], []>} : vector<16x16xf32>, vector<16x8xf32>, vector<16x8xf32> -> vector<16x8xf32>
    %238 = vector.extract_strided_slice %217 {offsets = [0, 0], sizes = [8, 32], strides = [1, 1]} : vector<32x32xf32> to vector<8x32xf32>
    %cst_109 = arith.constant dense<0.000000e+00> : vector<16x32xf32>
    %239 = tpu.matmul %237, %238, %cst_109 {dimension_numbers = #tpu.dot_dimension_numbers<[1], [0], [0], [1], [0, 0, 1, 1], [], []>} : vector<16x8xf32>, vector<8x32xf32>, vector<16x32xf32> -> vector<16x32xf32>
    %240 = arith.addf %218, %239 : vector<16x32xf32>
    %241 = vector.extract_strided_slice %215 {offsets = [0, 8], sizes = [16, 8], strides = [1, 1]} : vector<16x96xf32> to vector<16x8xf32>
    %242 = vector.extract_strided_slice %215 {offsets = [0, 40], sizes = [16, 8], strides = [1, 1]} : vector<16x96xf32> to vector<16x8xf32>
    %243 = vector.extract_strided_slice %215 {offsets = [0, 72], sizes = [16, 8], strides = [1, 1]} : vector<16x96xf32> to vector<16x8xf32>
    %cst_110 = arith.constant dense<0.000000e+00> : vector<16x16xf32>
    %244 = tpu.matmul %241, %242, %cst_110 {dimension_numbers = #tpu.dot_dimension_numbers<[1], [1], [0], [0], [0, 0, 1, 0], [], []>} : vector<16x8xf32>, vector<16x8xf32>, vector<16x16xf32> -> vector<16x16xf32>
    %cst_111 = arith.constant 0.353553385 : f32
    %245 = vector.broadcast %cst_111 : f32 to vector<16x16xf32>
    %246 = arith.mulf %244, %245 : vector<16x16xf32>
    %247 = arith.addf %246, %0 : vector<16x16xf32>
    %cst_112 = arith.constant dense<0xFF800000> : vector<16xf32>
    %248 = vector.multi_reduction <maximumf>, %247, %cst_112 [1] : vector<16x16xf32> to vector<16xf32>
    %cst_113 = arith.constant 0xFF800000 : f32
    %249 = vector.broadcast %cst_113 : f32 to vector<16xf32>
    %250 = arith.maximumf %249, %248 : vector<16xf32>
    %251 = vector.shape_cast %250 : vector<16xf32> to vector<16x1xf32>
    %252 = vector.broadcast %251 : vector<16x1xf32> to vector<16x16xf32>
    %253 = arith.subf %247, %252 : vector<16x16xf32>
    %254 = math.exp %253 : vector<16x16xf32>
    %cst_114 = arith.constant dense<0.000000e+00> : vector<16xf32>
    %255 = vector.multi_reduction <add>, %254, %cst_114 [1] : vector<16x16xf32> to vector<16xf32>
    %256 = vector.shape_cast %255 : vector<16xf32> to vector<16x1xf32>
    %257 = vector.broadcast %256 : vector<16x1xf32> to vector<16x16xf32>
    %258 = arith.divf %254, %257 : vector<16x16xf32>
    %cst_115 = arith.constant dense<0.000000e+00> : vector<16x8xf32>
    %259 = tpu.matmul %258, %243, %cst_115 {dimension_numbers = #tpu.dot_dimension_numbers<[1], [0], [0], [1], [0, 0, 1, 1], [], []>} : vector<16x16xf32>, vector<16x8xf32>, vector<16x8xf32> -> vector<16x8xf32>
    %260 = vector.extract_strided_slice %217 {offsets = [8, 0], sizes = [8, 32], strides = [1, 1]} : vector<32x32xf32> to vector<8x32xf32>
    %cst_116 = arith.constant dense<0.000000e+00> : vector<16x32xf32>
    %261 = tpu.matmul %259, %260, %cst_116 {dimension_numbers = #tpu.dot_dimension_numbers<[1], [0], [0], [1], [0, 0, 1, 1], [], []>} : vector<16x8xf32>, vector<8x32xf32>, vector<16x32xf32> -> vector<16x32xf32>
    %262 = arith.addf %240, %261 : vector<16x32xf32>
    %263 = vector.extract_strided_slice %215 {offsets = [0, 16], sizes = [16, 8], strides = [1, 1]} : vector<16x96xf32> to vector<16x8xf32>
    %264 = vector.extract_strided_slice %215 {offsets = [0, 48], sizes = [16, 8], strides = [1, 1]} : vector<16x96xf32> to vector<16x8xf32>
    %265 = vector.extract_strided_slice %215 {offsets = [0, 80], sizes = [16, 8], strides = [1, 1]} : vector<16x96xf32> to vector<16x8xf32>
    %cst_117 = arith.constant dense<0.000000e+00> : vector<16x16xf32>
    %266 = tpu.matmul %263, %264, %cst_117 {dimension_numbers = #tpu.dot_dimension_numbers<[1], [1], [0], [0], [0, 0, 1, 0], [], []>} : vector<16x8xf32>, vector<16x8xf32>, vector<16x16xf32> -> vector<16x16xf32>
    %cst_118 = arith.constant 0.353553385 : f32
    %267 = vector.broadcast %cst_118 : f32 to vector<16x16xf32>
    %268 = arith.mulf %266, %267 : vector<16x16xf32>
    %269 = arith.addf %268, %0 : vector<16x16xf32>
    %cst_119 = arith.constant dense<0xFF800000> : vector<16xf32>
    %270 = vector.multi_reduction <maximumf>, %269, %cst_119 [1] : vector<16x16xf32> to vector<16xf32>
    %cst_120 = arith.constant 0xFF800000 : f32
    %271 = vector.broadcast %cst_120 : f32 to vector<16xf32>
    %272 = arith.maximumf %271, %270 : vector<16xf32>
    %273 = vector.shape_cast %272 : vector<16xf32> to vector<16x1xf32>
    %274 = vector.broadcast %273 : vector<16x1xf32> to vector<16x16xf32>
    %275 = arith.subf %269, %274 : vector<16x16xf32>
    %276 = math.exp %275 : vector<16x16xf32>
    %cst_121 = arith.constant dense<0.000000e+00> : vector<16xf32>
    %277 = vector.multi_reduction <add>, %276, %cst_121 [1] : vector<16x16xf32> to vector<16xf32>
    %278 = vector.shape_cast %277 : vector<16xf32> to vector<16x1xf32>
    %279 = vector.broadcast %278 : vector<16x1xf32> to vector<16x16xf32>
    %280 = arith.divf %276, %279 : vector<16x16xf32>
    %cst_122 = arith.constant dense<0.000000e+00> : vector<16x8xf32>
    %281 = tpu.matmul %280, %265, %cst_122 {dimension_numbers = #tpu.dot_dimension_numbers<[1], [0], [0], [1], [0, 0, 1, 1], [], []>} : vector<16x16xf32>, vector<16x8xf32>, vector<16x8xf32> -> vector<16x8xf32>
    %282 = vector.extract_strided_slice %217 {offsets = [16, 0], sizes = [8, 32], strides = [1, 1]} : vector<32x32xf32> to vector<8x32xf32>
    %cst_123 = arith.constant dense<0.000000e+00> : vector<16x32xf32>
    %283 = tpu.matmul %281, %282, %cst_123 {dimension_numbers = #tpu.dot_dimension_numbers<[1], [0], [0], [1], [0, 0, 1, 1], [], []>} : vector<16x8xf32>, vector<8x32xf32>, vector<16x32xf32> -> vector<16x32xf32>
    %284 = arith.addf %262, %283 : vector<16x32xf32>
    %285 = vector.extract_strided_slice %215 {offsets = [0, 24], sizes = [16, 8], strides = [1, 1]} : vector<16x96xf32> to vector<16x8xf32>
    %286 = vector.extract_strided_slice %215 {offsets = [0, 56], sizes = [16, 8], strides = [1, 1]} : vector<16x96xf32> to vector<16x8xf32>
    %287 = vector.extract_strided_slice %215 {offsets = [0, 88], sizes = [16, 8], strides = [1, 1]} : vector<16x96xf32> to vector<16x8xf32>
    %cst_124 = arith.constant dense<0.000000e+00> : vector<16x16xf32>
    %288 = tpu.matmul %285, %286, %cst_124 {dimension_numbers = #tpu.dot_dimension_numbers<[1], [1], [0], [0], [0, 0, 1, 0], [], []>} : vector<16x8xf32>, vector<16x8xf32>, vector<16x16xf32> -> vector<16x16xf32>
    %cst_125 = arith.constant 0.353553385 : f32
    %289 = vector.broadcast %cst_125 : f32 to vector<16x16xf32>
    %290 = arith.mulf %288, %289 : vector<16x16xf32>
    %291 = arith.addf %290, %0 : vector<16x16xf32>
    %cst_126 = arith.constant dense<0xFF800000> : vector<16xf32>
    %292 = vector.multi_reduction <maximumf>, %291, %cst_126 [1] : vector<16x16xf32> to vector<16xf32>
    %cst_127 = arith.constant 0xFF800000 : f32
    %293 = vector.broadcast %cst_127 : f32 to vector<16xf32>
    %294 = arith.maximumf %293, %292 : vector<16xf32>
    %295 = vector.shape_cast %294 : vector<16xf32> to vector<16x1xf32>
    %296 = vector.broadcast %295 : vector<16x1xf32> to vector<16x16xf32>
    %297 = arith.subf %291, %296 : vector<16x16xf32>
    %298 = math.exp %297 : vector<16x16xf32>
    %cst_128 = arith.constant dense<0.000000e+00> : vector<16xf32>
    %299 = vector.multi_reduction <add>, %298, %cst_128 [1] : vector<16x16xf32> to vector<16xf32>
    %300 = vector.shape_cast %299 : vector<16xf32> to vector<16x1xf32>
    %301 = vector.broadcast %300 : vector<16x1xf32> to vector<16x16xf32>
    %302 = arith.divf %298, %301 : vector<16x16xf32>
    %cst_129 = arith.constant dense<0.000000e+00> : vector<16x8xf32>
    %303 = tpu.matmul %302, %287, %cst_129 {dimension_numbers = #tpu.dot_dimension_numbers<[1], [0], [0], [1], [0, 0, 1, 1], [], []>} : vector<16x16xf32>, vector<16x8xf32>, vector<16x8xf32> -> vector<16x8xf32>
    %304 = vector.extract_strided_slice %217 {offsets = [24, 0], sizes = [8, 32], strides = [1, 1]} : vector<32x32xf32> to vector<8x32xf32>
    %cst_130 = arith.constant dense<0.000000e+00> : vector<16x32xf32>
    %305 = tpu.matmul %303, %304, %cst_130 {dimension_numbers = #tpu.dot_dimension_numbers<[1], [0], [0], [1], [0, 0, 1, 1], [], []>} : vector<16x8xf32>, vector<8x32xf32>, vector<16x32xf32> -> vector<16x32xf32>
    %306 = arith.addf %284, %305 : vector<16x32xf32>
    %c1_131 = arith.constant 1 : index
    %c0_132 = arith.constant 0 : index
    %c0_133 = arith.constant 0 : index
    %307 = vector.load %arg7[%c1_131, %c0_132, %c0_133] : memref<2x1x32xf32, #tpu.memory_space<vmem>>, vector<1x1x32xf32>
    %308 = vector.shape_cast %307 : vector<1x1x32xf32> to vector<1x32xf32>
    %309 = vector.broadcast %308 : vector<1x32xf32> to vector<16x32xf32>
    %310 = arith.addf %306, %309 : vector<16x32xf32>
    %311 = arith.addf %310, %208 : vector<16x32xf32>
    %c1_134 = arith.constant 1 : index
    %c0_135 = arith.constant 0 : index
    %c0_136 = arith.constant 0 : index
    %312 = vector.load %arg8[%c1_134, %c0_135, %c0_136] : memref<2x1x32xf32, #tpu.memory_space<vmem>>, vector<1x1x32xf32>
    %313 = vector.shape_cast %312 : vector<1x1x32xf32> to vector<1x32xf32>
    %c1_137 = arith.constant 1 : index
    %c0_138 = arith.constant 0 : index
    %c0_139 = arith.constant 0 : index
    %314 = vector.load %arg9[%c1_137, %c0_138, %c0_139] : memref<2x1x32xf32, #tpu.memory_space<vmem>>, vector<1x1x32xf32>
    %315 = vector.shape_cast %314 : vector<1x1x32xf32> to vector<1x32xf32>
    %cst_140 = arith.constant dense<0.000000e+00> : vector<16xf32>
    %316 = vector.multi_reduction <add>, %311, %cst_140 [1] : vector<16x32xf32> to vector<16xf32>
    %317 = vector.shape_cast %316 : vector<16xf32> to vector<16x1xf32>
    %cst_141 = arith.constant 3.200000e+01 : f32
    %318 = vector.broadcast %cst_141 : f32 to vector<16x1xf32>
    %319 = arith.divf %317, %318 : vector<16x1xf32>
    %320 = vector.broadcast %319 : vector<16x1xf32> to vector<16x32xf32>
    %321 = arith.subf %311, %320 : vector<16x32xf32>
    %322 = arith.mulf %321, %321 : vector<16x32xf32>
    %cst_142 = arith.constant dense<0.000000e+00> : vector<16xf32>
    %323 = vector.multi_reduction <add>, %322, %cst_142 [1] : vector<16x32xf32> to vector<16xf32>
    %324 = vector.shape_cast %323 : vector<16xf32> to vector<16x1xf32>
    %cst_143 = arith.constant 3.200000e+01 : f32
    %325 = vector.broadcast %cst_143 : f32 to vector<16x1xf32>
    %326 = arith.divf %324, %325 : vector<16x1xf32>
    %327 = vector.broadcast %319 : vector<16x1xf32> to vector<16x32xf32>
    %328 = arith.subf %311, %327 : vector<16x32xf32>
    %cst_144 = arith.constant 9.99999996E-13 : f32
    %329 = vector.broadcast %cst_144 : f32 to vector<16x1xf32>
    %330 = arith.addf %326, %329 : vector<16x1xf32>
    %331 = math.rsqrt %330 : vector<16x1xf32>
    %332 = vector.broadcast %331 : vector<16x1xf32> to vector<16x32xf32>
    %333 = arith.mulf %328, %332 : vector<16x32xf32>
    %334 = vector.broadcast %313 : vector<1x32xf32> to vector<16x32xf32>
    %335 = arith.mulf %333, %334 : vector<16x32xf32>
    %336 = vector.broadcast %315 : vector<1x32xf32> to vector<16x32xf32>
    %337 = arith.addf %335, %336 : vector<16x32xf32>
    %c1_145 = arith.constant 1 : index
    %c0_146 = arith.constant 0 : index
    %c0_147 = arith.constant 0 : index
    %338 = vector.load %arg10[%c1_145, %c0_146, %c0_147] : memref<2x32x64xf32, #tpu.memory_space<vmem>>, vector<1x32x64xf32>
    %339 = vector.shape_cast %338 : vector<1x32x64xf32> to vector<32x64xf32>
    %cst_148 = arith.constant dense<0.000000e+00> : vector<16x64xf32>
    %340 = tpu.matmul %337, %339, %cst_148 {dimension_numbers = #tpu.dot_dimension_numbers<[1], [0], [0], [1], [0, 0, 1, 1], [], []>} : vector<16x32xf32>, vector<32x64xf32>, vector<16x64xf32> -> vector<16x64xf32>
    %c1_149 = arith.constant 1 : index
    %c0_150 = arith.constant 0 : index
    %c0_151 = arith.constant 0 : index
    %341 = vector.load %arg11[%c1_149, %c0_150, %c0_151] : memref<2x1x64xf32, #tpu.memory_space<vmem>>, vector<1x1x64xf32>
    %342 = vector.shape_cast %341 : vector<1x1x64xf32> to vector<1x64xf32>
    %343 = vector.broadcast %342 : vector<1x64xf32> to vector<16x64xf32>
    %344 = arith.addf %340, %343 : vector<16x64xf32>
    %345 = arith.mulf %344, %344 : vector<16x64xf32>
    %346 = arith.mulf %344, %345 : vector<16x64xf32>
    %cst_152 = arith.constant 4.471500e-02 : f32
    %347 = vector.broadcast %cst_152 : f32 to vector<16x64xf32>
    %348 = arith.mulf %347, %346 : vector<16x64xf32>
    %349 = arith.addf %344, %348 : vector<16x64xf32>
    %cst_153 = arith.constant 0.797884583 : f32
    %350 = vector.broadcast %cst_153 : f32 to vector<16x64xf32>
    %351 = arith.mulf %350, %349 : vector<16x64xf32>
    %352 = math.tanh %351 : vector<16x64xf32>
    %cst_154 = arith.constant 1.000000e+00 : f32
    %353 = vector.broadcast %cst_154 : f32 to vector<16x64xf32>
    %354 = arith.addf %353, %352 : vector<16x64xf32>
    %cst_155 = arith.constant 5.000000e-01 : f32
    %355 = vector.broadcast %cst_155 : f32 to vector<16x64xf32>
    %356 = arith.mulf %355, %354 : vector<16x64xf32>
    %357 = arith.mulf %344, %356 : vector<16x64xf32>
    %c1_156 = arith.constant 1 : index
    %c0_157 = arith.constant 0 : index
    %c0_158 = arith.constant 0 : index
    %358 = vector.load %arg12[%c1_156, %c0_157, %c0_158] : memref<2x64x32xf32, #tpu.memory_space<vmem>>, vector<1x64x32xf32>
    %359 = vector.shape_cast %358 : vector<1x64x32xf32> to vector<64x32xf32>
    %cst_159 = arith.constant dense<0.000000e+00> : vector<16x32xf32>
    %360 = tpu.matmul %357, %359, %cst_159 {dimension_numbers = #tpu.dot_dimension_numbers<[1], [0], [0], [1], [0, 0, 1, 1], [], []>} : vector<16x64xf32>, vector<64x32xf32>, vector<16x32xf32> -> vector<16x32xf32>
    %c1_160 = arith.constant 1 : index
    %c0_161 = arith.constant 0 : index
    %c0_162 = arith.constant 0 : index
    %361 = vector.load %arg13[%c1_160, %c0_161, %c0_162] : memref<2x1x32xf32, #tpu.memory_space<vmem>>, vector<1x1x32xf32>
    %362 = vector.shape_cast %361 : vector<1x1x32xf32> to vector<1x32xf32>
    %363 = vector.broadcast %362 : vector<1x32xf32> to vector<16x32xf32>
    %364 = arith.addf %360, %363 : vector<16x32xf32>
    %365 = arith.addf %364, %337 : vector<16x32xf32>
    %c1_163 = arith.constant 1 : index
    %c0_164 = arith.constant 0 : index
    %c0_165 = arith.constant 0 : index
    %366 = vector.load %arg14[%c1_163, %c0_164, %c0_165] : memref<2x1x32xf32, #tpu.memory_space<vmem>>, vector<1x1x32xf32>
    %367 = vector.shape_cast %366 : vector<1x1x32xf32> to vector<1x32xf32>
    %c1_166 = arith.constant 1 : index
    %c0_167 = arith.constant 0 : index
    %c0_168 = arith.constant 0 : index
    %368 = vector.load %arg15[%c1_166, %c0_167, %c0_168] : memref<2x1x32xf32, #tpu.memory_space<vmem>>, vector<1x1x32xf32>
    %369 = vector.shape_cast %368 : vector<1x1x32xf32> to vector<1x32xf32>
    %cst_169 = arith.constant dense<0.000000e+00> : vector<16xf32>
    %370 = vector.multi_reduction <add>, %365, %cst_169 [1] : vector<16x32xf32> to vector<16xf32>
    %371 = vector.shape_cast %370 : vector<16xf32> to vector<16x1xf32>
    %cst_170 = arith.constant 3.200000e+01 : f32
    %372 = vector.broadcast %cst_170 : f32 to vector<16x1xf32>
    %373 = arith.divf %371, %372 : vector<16x1xf32>
    %374 = vector.broadcast %373 : vector<16x1xf32> to vector<16x32xf32>
    %375 = arith.subf %365, %374 : vector<16x32xf32>
    %376 = arith.mulf %375, %375 : vector<16x32xf32>
    %cst_171 = arith.constant dense<0.000000e+00> : vector<16xf32>
    %377 = vector.multi_reduction <add>, %376, %cst_171 [1] : vector<16x32xf32> to vector<16xf32>
    %378 = vector.shape_cast %377 : vector<16xf32> to vector<16x1xf32>
    %cst_172 = arith.constant 3.200000e+01 : f32
    %379 = vector.broadcast %cst_172 : f32 to vector<16x1xf32>
    %380 = arith.divf %378, %379 : vector<16x1xf32>
    %381 = vector.broadcast %373 : vector<16x1xf32> to vector<16x32xf32>
    %382 = arith.subf %365, %381 : vector<16x32xf32>
    %cst_173 = arith.constant 9.99999996E-13 : f32
    %383 = vector.broadcast %cst_173 : f32 to vector<16x1xf32>
    %384 = arith.addf %380, %383 : vector<16x1xf32>
    %385 = math.rsqrt %384 : vector<16x1xf32>
    %386 = vector.broadcast %385 : vector<16x1xf32> to vector<16x32xf32>
    %387 = arith.mulf %382, %386 : vector<16x32xf32>
    %388 = vector.broadcast %367 : vector<1x32xf32> to vector<16x32xf32>
    %389 = arith.mulf %387, %388 : vector<16x32xf32>
    %390 = vector.broadcast %369 : vector<1x32xf32> to vector<16x32xf32>
    %391 = arith.addf %389, %390 : vector<16x32xf32>
    %392 = tpu.iota {dimensions = array<i32: 1>} : vector<2x16xi32>
    %393 = tpu.iota {dimensions = array<i32: 0>} : vector<2x16xi32>
    %c8_i32 = arith.constant 8 : i32
    %394 = vector.broadcast %c8_i32 : i32 to vector<2x16xi32>
    %395 = arith.muli %393, %394 : vector<2x16xi32>
    %396 = arith.cmpi eq, %392, %395 : vector<2x16xi32>
    %397 = arith.extui %396 : vector<2x16xi1> to vector<2x16xi32>
    %398 = arith.sitofp %397 : vector<2x16xi32> to vector<2x16xf32>
    %cst_174 = arith.constant dense<0.000000e+00> : vector<2x32xf32>
    %399 = tpu.matmul %398, %391, %cst_174 {dimension_numbers = #tpu.dot_dimension_numbers<[1], [0], [0], [1], [0, 0, 1, 1], [], []>} : vector<2x16xf32>, vector<16x32xf32>, vector<2x32xf32> -> vector<2x32xf32>
    %c0_175 = arith.constant 0 : index
    %c0_176 = arith.constant 0 : index
    %400 = vector.load %arg16[%c0_175, %c0_176] : memref<32x32xf32, #tpu.memory_space<vmem>>, vector<32x32xf32>
    %cst_177 = arith.constant dense<0.000000e+00> : vector<2x32xf32>
    %401 = tpu.matmul %399, %400, %cst_177 {dimension_numbers = #tpu.dot_dimension_numbers<[1], [0], [0], [1], [0, 0, 1, 1], [], []>} : vector<2x32xf32>, vector<32x32xf32>, vector<2x32xf32> -> vector<2x32xf32>
    %c0_178 = arith.constant 0 : index
    %c0_179 = arith.constant 0 : index
    %402 = vector.load %arg17[%c0_178, %c0_179] : memref<1x32xf32, #tpu.memory_space<vmem>>, vector<1x32xf32>
    %403 = vector.broadcast %402 : vector<1x32xf32> to vector<2x32xf32>
    %404 = arith.addf %401, %403 : vector<2x32xf32>
    %405 = math.tanh %404 : vector<2x32xf32>
    %c0_180 = arith.constant 0 : index
    %c0_181 = arith.constant 0 : index
    %406 = vector.load %arg18[%c0_180, %c0_181] : memref<32x128xf32, #tpu.memory_space<vmem>>, vector<32x128xf32>
    %cst_182 = arith.constant dense<0.000000e+00> : vector<2x128xf32>
    %407 = tpu.matmul %405, %406, %cst_182 {dimension_numbers = #tpu.dot_dimension_numbers<[1], [0], [0], [1], [0, 0, 1, 1], [], []>} : vector<2x32xf32>, vector<32x128xf32>, vector<2x128xf32> -> vector<2x128xf32>
    %c0_183 = arith.constant 0 : index
    %c0_184 = arith.constant 0 : index
    %408 = vector.load %arg19[%c0_183, %c0_184] : memref<1x128xf32, #tpu.memory_space<vmem>>, vector<1x128xf32>
    %409 = vector.broadcast %408 : vector<1x128xf32> to vector<2x128xf32>
    %410 = arith.addf %407, %409 : vector<2x128xf32>
    %c0_185 = arith.constant 0 : index
    %c0_186 = arith.constant 0 : index
    %411 = vector.load %arg20[%c0_185, %c0_186] : memref<2x128xf32, #tpu.memory_space<vmem>>, vector<2x128xf32>
    tpu.vector_store %arg20[%c0_185, %c0_186], %410 {strides = array<i32>} : memref<2x128xf32, #tpu.memory_space<vmem>>, vector<2x128xf32>,
    return
  }
}

</mosaic_0001>

<llo_original>
// kernel: bert_for_classification.1
$region0: #{bert_for_classification.1}
  #allocation0 [shape = 'u32[]', space=smem, size = 0x4, offset = 0x4, fixed_abs, tag = 'smem constant byte address 0x4 - core index']
  #allocation1 [shape = 'u32[144,128]{1,0:T(1,128)}', space=vmem, size = 0x12000, scoped, tag = 'internal scratch']
  %s0 = inlined_call_operand.vmem [shape: f32[16,32], index: 0, kind: input, shape index: {}]
  %s1 = inlined_call_operand.vmem [shape: f32[16,16], index: 1, kind: input, shape index: {}]
  %s2 = inlined_call_operand.vmem [shape: f32[1,32], index: 2, kind: input, shape index: {}]
  %s3 = inlined_call_operand.vmem [shape: f32[1,32], index: 3, kind: input, shape index: {}]
  %s4 = inlined_call_operand.vmem [shape: f32[2,32,96], index: 4, kind: input, shape index: {}]
  %s5 = inlined_call_operand.vmem [shape: f32[2,1,96], index: 5, kind: input, shape index: {}]
  %s6 = inlined_call_operand.vmem [shape: f32[2,32,32], index: 6, kind: input, shape index: {}]
  %s7 = inlined_call_operand.vmem [shape: f32[2,1,32], index: 7, kind: input, shape index: {}]
  %s8 = inlined_call_operand.vmem [shape: f32[2,1,32], index: 8, kind: input, shape index: {}]
  %s9 = inlined_call_operand.vmem [shape: f32[2,1,32], index: 9, kind: input, shape index: {}]
  %s10 = inlined_call_operand.vmem [shape: f32[2,32,64], index: 10, kind: input, shape index: {}]
  %s11 = inlined_call_operand.vmem [shape: f32[2,1,64], index: 11, kind: input, shape index: {}]
  %s12 = inlined_call_operand.vmem [shape: f32[2,64,32], index: 12, kind: input, shape index: {}]
  %s13 = inlined_call_operand.vmem [shape: f32[2,1,32], index: 13, kind: input, shape index: {}]
  %s14 = inlined_call_operand.vmem [shape: f32[2,1,32], index: 14, kind: input, shape index: {}]
  %s15 = inlined_call_operand.vmem [shape: f32[2,1,32], index: 15, kind: input, shape index: {}]
  %s16 = inlined_call_operand.vmem [shape: f32[32,32], index: 16, kind: input, shape index: {}]
  %s17 = inlined_call_operand.vmem [shape: f32[1,32], index: 17, kind: input, shape index: {}]
  %s18 = inlined_call_operand.vmem [shape: f32[32,128], index: 18, kind: input, shape index: {}]
  %s19 = inlined_call_operand.vmem [shape: f32[1,128], index: 19, kind: input, shape index: {}]
  %s20 = inlined_call_operand.hbm [shape: f32[2,128], index: 20, kind: output, shape index: {}]
  %s21 = sld [smem:[#allocation0]]
  $region90: #{bert_for_classification.1} parent=0
    _
  %s23 = ssub.s32 1, %s21
  %s24 = scalar_select 0, %s23, %s21
  $region1: #{bert_for_classification.1} parent=0
    #allocation2 [shape = 'u8[1024]{0}', space=vmem, size = 0x400, scoped, tag = 'output window, operand 0, single buffered']
    #allocation3 [shape = 's32[1]{0}', space=sflag, size = 0x4, scoped, tag = 'scoped memory for bert_for_classification.1']
    %25 = vsyncpa [#allocation3], 0
    // Predicated region
    $region2: #{bert_for_classification.1} parent=1 // pred_check
      _
    $region3: #{bert_for_classification.1} parent=1 // pred_check_branch
      %27 = sbr.rel (0) target = $region5
    $region4: #{bert_for_classification.1} parent=1 // pred_region
      _
    $region5: #{bert_for_classification.1} parent=1 // pred_fallthru
      _
    // Predicated region
    $region6: #{bert_for_classification.1} parent=1 // pred_check
      _
    $region7: #{bert_for_classification.1} parent=1 // pred_check_branch
      %29 = sbr.rel (0) target = $region9
    $region8: #{bert_for_classification.1} parent=1 // pred_region
      _
    $region9: #{bert_for_classification.1} parent=1 // pred_fallthru
      _
    // Predicated region
    $region10: #{bert_for_classification.1} parent=1 // pred_check
      _
    $region11: #{bert_for_classification.1} parent=1 // pred_check_branch
      %31 = sbr.rel (0) target = $region13
    $region12: #{bert_for_classification.1} parent=1 // pred_region
      _
    $region13: #{bert_for_classification.1} parent=1 // pred_fallthru
      _
    // Predicated region
    $region14: #{bert_for_classification.1} parent=1 // pred_check
      _
    $region15: #{bert_for_classification.1} parent=1 // pred_check_branch
      %33 = sbr.rel (0) target = $region17
    $region16: #{bert_for_classification.1} parent=1 // pred_region
      _
    $region17: #{bert_for_classification.1} parent=1 // pred_fallthru
      _
    // Predicated region
    $region18: #{bert_for_classification.1} parent=1 // pred_check
      _
    $region19: #{bert_for_classification.1} parent=1 // pred_check_branch
      %35 = sbr.rel (0) target = $region21
    $region20: #{bert_for_classification.1} parent=1 // pred_region
      _
    $region21: #{bert_for_classification.1} parent=1 // pred_fallthru
      _
    // Predicated region
    $region22: #{bert_for_classification.1} parent=1 // pred_check
      _
    $region23: #{bert_for_classification.1} parent=1 // pred_check_branch
      %37 = sbr.rel (0) target = $region25
    $region24: #{bert_for_classification.1} parent=1 // pred_region
      _
    $region25: #{bert_for_classification.1} parent=1 // pred_fallthru
      _
    // Predicated region
    $region26: #{bert_for_classification.1} parent=1 // pred_check
      _
    $region27: #{bert_for_classification.1} parent=1 // pred_check_branch
      %39 = sbr.rel (0) target = $region29
    $region28: #{bert_for_classification.1} parent=1 // pred_region
      _
    $region29: #{bert_for_classification.1} parent=1 // pred_fallthru
      _
    // Predicated region
    $region30: #{bert_for_classification.1} parent=1 // pred_check
      _
    $region31: #{bert_for_classification.1} parent=1 // pred_check_branch
      %41 = sbr.rel (0) target = $region33
    $region32: #{bert_for_classification.1} parent=1 // pred_region
      _
    $region33: #{bert_for_classification.1} parent=1 // pred_fallthru
      _
    // Predicated region
    $region34: #{bert_for_classification.1} parent=1 // pred_check
      _
    $region35: #{bert_for_classification.1} parent=1 // pred_check_branch
      %43 = sbr.rel (0) target = $region37
    $region36: #{bert_for_classification.1} parent=1 // pred_region
      _
    $region37: #{bert_for_classification.1} parent=1 // pred_fallthru
      _
    // Predicated region
    $region38: #{bert_for_classification.1} parent=1 // pred_check
      _
    $region39: #{bert_for_classification.1} parent=1 // pred_check_branch
      %45 = sbr.rel (0) target = $region41
    $region40: #{bert_for_classification.1} parent=1 // pred_region
      _
    $region41: #{bert_for_classification.1} parent=1 // pred_fallthru
      _
    // Predicated region
    $region42: #{bert_for_classification.1} parent=1 // pred_check
      _
    $region43: #{bert_for_classification.1} parent=1 // pred_check_branch
      %47 = sbr.rel (0) target = $region45
    $region44: #{bert_for_classification.1} parent=1 // pred_region
      _
    $region45: #{bert_for_classification.1} parent=1 // pred_fallthru
      _
    // Predicated region
    $region46: #{bert_for_classification.1} parent=1 // pred_check
      _
    $region47: #{bert_for_classification.1} parent=1 // pred_check_branch
      %49 = sbr.rel (0) target = $region49
    $region48: #{bert_for_classification.1} parent=1 // pred_region
      _
    $region49: #{bert_for_classification.1} parent=1 // pred_fallthru
      _
    // Predicated region
    $region50: #{bert_for_classification.1} parent=1 // pred_check
      _
    $region51: #{bert_for_classification.1} parent=1 // pred_check_branch
      %51 = sbr.rel (0) target = $region53
    $region52: #{bert_for_classification.1} parent=1 // pred_region
      _
    $region53: #{bert_for_classification.1} parent=1 // pred_fallthru
      _
    // Predicated region
    $region54: #{bert_for_classification.1} parent=1 // pred_check
      _
    $region55: #{bert_for_classification.1} parent=1 // pred_check_branch
      %53 = sbr.rel (0) target = $region57
    $region56: #{bert_for_classification.1} parent=1 // pred_region
      _
    $region57: #{bert_for_classification.1} parent=1 // pred_fallthru
      _
    // Predicated region
    $region58: #{bert_for_classification.1} parent=1 // pred_check
      _
    $region59: #{bert_for_classification.1} parent=1 // pred_check_branch
      %55 = sbr.rel (0) target = $region61
    $region60: #{bert_for_classification.1} parent=1 // pred_region
      _
    $region61: #{bert_for_classification.1} parent=1 // pred_fallthru
      _
    // Predicated region
    $region62: #{bert_for_classification.1} parent=1 // pred_check
      _
    $region63: #{bert_for_classification.1} parent=1 // pred_check_branch
      %57 = sbr.rel (0) target = $region65
    $region64: #{bert_for_classification.1} parent=1 // pred_region
      _
    $region65: #{bert_for_classification.1} parent=1 // pred_fallthru
      _
    // Predicated region
    $region66: #{bert_for_classification.1} parent=1 // pred_check
      _
    $region67: #{bert_for_classification.1} parent=1 // pred_check_branch
      %59 = sbr.rel (0) target = $region69
    $region68: #{bert_for_classification.1} parent=1 // pred_region
      _
    $region69: #{bert_for_classification.1} parent=1 // pred_fallthru
      _
    // Predicated region
    $region70: #{bert_for_classification.1} parent=1 // pred_check
      _
    $region71: #{bert_for_classification.1} parent=1 // pred_check_branch
      %61 = sbr.rel (0) target = $region73
    $region72: #{bert_for_classification.1} parent=1 // pred_region
      _
    $region73: #{bert_for_classification.1} parent=1 // pred_fallthru
      _
    // Predicated region
    $region74: #{bert_for_classification.1} parent=1 // pred_check
      _
    $region75: #{bert_for_classification.1} parent=1 // pred_check_branch
      %63 = sbr.rel (0) target = $region77
    $region76: #{bert_for_classification.1} parent=1 // pred_region
      _
    $region77: #{bert_for_classification.1} parent=1 // pred_fallthru
      _
    // Predicated region
    $region78: #{bert_for_classification.1} parent=1 // pred_check
      _
    $region79: #{bert_for_classification.1} parent=1 // pred_check_branch
      %65 = sbr.rel (0) target = $region81
    $region80: #{bert_for_classification.1} parent=1 // pred_region
      _
    $region81: #{bert_for_classification.1} parent=1 // pred_fallthru
      _
    %v66 = vld [vmem:[%s1] sm:$0xff]
    %v67 = vld [vmem:[%s1 + $0x8] sm:$0xff]
    %v68 = vld [vmem:[%s0] sm:$0xff]
    %v69 = vld [vmem:[%s0 + $0x8] sm:$0xff]
    %v70 = vld [vmem:[%s2] sm:$0x1]
    %v71 = vld [vmem:[%s3] sm:$0x1]
    %vm72 = vcmask 261120
    %v73 = vsel %vm72, %v68, 0.0
    %74 = vadd.xlane.f32.xlu0 %v73
    %v75 = vpop.xlane.xlu0 %74
    %v76 = vsel %vm72, %v69, 0.0
    %77 = vadd.xlane.f32.xlu0 %v76
    %v78 = vpop.xlane.xlu0 %77
    %v79 = vrcp.pop 32.0
    %v80 = vmul.f32 %v75, %v79
    %v81 = vmul.f32 %v78, %v79
    %v82 = vsub.f32 %v68, %v80
    %v83 = vsub.f32 %v69, %v81
    %v84 = vmul.f32 %v82, %v82
    %v85 = vmul.f32 %v83, %v83
    %v86 = vsel %vm72, %v84, 0.0
    %87 = vadd.xlane.f32.xlu0 %v86
    %v88 = vpop.xlane.xlu0 %87
    %v89 = vsel %vm72, %v85, 0.0
    %90 = vadd.xlane.f32.xlu0 %v89
    %v91 = vpop.xlane.xlu0 %90
    %v92 = vmul.f32 %v88, %v79
    %v93 = vmul.f32 %v91, %v79
    %v94 = vadd.f32 %v92, 1e-12
    %v95 = vadd.f32 %v93, 1e-12
    %v96 = vrsqrt.pop %v94
    %v97 = vrsqrt.pop %v95
    %v98 = vmul.f32 %v82, %v96
    %v99 = vmul.f32 %v83, %v97
    %v101 = vlaneseq
    %v102 = vshrl.u32 %v101, 7
    %v103 = vsub.s32 0, %v102
    %v104 = vrot.slane %v70, %v103
    %v106 = vmul.f32 %v98, %v104
    %v107 = vmul.f32 %v99, %v104
    %v109 = vlaneseq
    %v110 = vshrl.u32 %v109, 7
    %v111 = vsub.s32 0, %v110
    %v112 = vrot.slane %v71, %v111
    %v114 = vadd.f32 %v106, %v112
    %v115 = vadd.f32 %v107, %v112
    %v116 = vld [vmem:[%s4] sm:$0xff]
    %v117 = vld [vmem:[%s4 + $0x8] sm:$0xff]
    %v118 = vld [vmem:[%s4 + $0x10] sm:$0xff]
    %v119 = vld [vmem:[%s4 + $0x18] sm:$0xff]
    %v120 = vld [vmem:[%s5] sm:$0x1]
    %v122 = vlaneseq
    %v123 = vshrl.u32 %v122, 7
    %v124 = vsub.s32 0, %v123
    %v125 = vrot.slane %v120, %v124
    %v128 = vsel %vm72, %v114, 0
    %v131 = vsel %vm72, %v115, 0
    %133 = vmatprep.subr.mxu0 0.0
    %134 = vmatpush1.msra.mxu0 %v116
    %135 = vmatprep.subr.mxu0 0.0
    %136 = vmatpush1.msra.mxu0 %v117
    %137 = vmatprep.subr.mxu0 0.0
    %138 = vmatpush1.msra.mxu0 %v118
    %139 = vmatprep.subr.mxu0 0.0
    %140 = vmatpush1.msra.mxu0 %v119
    %141 = vmatprep.subr.mxu0 0.0
    %142 = vmatpush1.msra.mxu0 0.0
    %143 = vmatprep.subr.mxu0 0.0
    %144 = vmatpush1.msra.mxu0 0.0
    %145 = vmatprep.subr.mxu0 0.0
    %146 = vmatpush1.msra.mxu0 0.0
    %147 = vmatprep.subr.mxu0 0.0
    %148 = vmatpush1.msra.mxu0 0.0
    %149 = vmatprep.subr.mxu0 0.0
    %150 = vmatpush1.msra.mxu0 0.0
    %151 = vmatprep.subr.mxu0 0.0
    %152 = vmatpush1.msra.mxu0 0.0
    %153 = vmatprep.subr.mxu0 0.0
    %154 = vmatpush1.msra.mxu0 0.0
    %155 = vmatprep.subr.mxu0 0.0
    %156 = vmatpush1.msra.mxu0 0.0
    %157 = vmatprep.subr.mxu0 0.0
    %158 = vmatpush1.msra.mxu0 0.0
    %159 = vmatprep.subr.mxu0 0.0
    %160 = vmatpush1.msra.mxu0 0.0
    %161 = vmatprep.subr.mxu0 0.0
    %162 = vmatpush1.msra.mxu0 0.0
    %163 = vmatprep.subr.mxu0 0.0
    %164 = vmatpush1.msra.mxu0 0.0
    %165 = vmatprep.subr.mxu0 0.0
    %166 = vmatpush1.msra.mxu0 0.0
    %167 = vmatprep.subr.mxu0 0.0
    %168 = vmatpush1.msra.mxu0 0.0
    %169 = vmatprep.subr.mxu0 0.0
    %170 = vmatpush1.msra.mxu0 0.0
    %171 = vmatprep.subr.mxu0 0.0
    %172 = vmatpush1.msra.mxu0 0.0
    %173 = vmatprep.subr.mxu0 0.0
    %174 = vmatpush1.msra.mxu0 0.0
    %175 = vmatprep.subr.mxu0 0.0
    %176 = vmatpush1.msra.mxu0 0.0
    %177 = vmatprep.subr.mxu0 0.0
    %178 = vmatpush1.msra.mxu0 0.0
    %179 = vmatprep.subr.mxu0 0.0
    %180 = vmatpush1.msra.mxu0 0.0
    %181 = vmatprep.subr.mxu0 0.0
    %182 = vmatpush1.msra.mxu0 0.0
    %183 = vmatprep.subr.mxu0 0.0
    %184 = vmatpush1.msra.mxu0 0.0
    %185 = vmatprep.subr.mxu0 0.0
    %186 = vmatpush1.msra.mxu0 0.0
    %187 = vmatprep.subr.mxu0 0.0
    %188 = vmatpush1.msra.mxu0 0.0
    %189 = vmatprep.subr.mxu0 0.0
    %190 = vmatpush1.msra.mxu0 0.0
    %191 = vmatprep.subr.mxu0 0.0
    %192 = vmatpush1.msra.mxu0 0.0
    %193 = vmatprep.subr.mxu0 0.0
    %194 = vmatpush1.msra.mxu0 0.0
    %195 = vmatprep.subr.mxu0 0.0
    %196 = vmatpush1.msra.mxu0 0.0
    %197 = vmatprep.mubr.f32.mxu0 0.0
    %198 = vmatmul.mubr.f32.gmra.mrb[0].mxu0 %v128
    %v199 = vpop.f32.mrb[0].mxu0
    %v200 = vadd.f32 %v125, %v199
    %v201 = vpop.f32.mrb[0].mxu0
    %202 = vmatprep.mubr.f32.mxu0 0.0
    %203 = vmatmul.mubr.f32.gmra.mrb[0].mxu0 %v131
    %v204 = vpop.f32.mrb[0].mxu0
    %v205 = vadd.f32 %v125, %v204
    %v206 = vpop.f32.mrb[0].mxu0
    %207 = vdwg.mxu0
    %v208 = vld [vmem:[%s6] sm:$0xff]
    %v209 = vld [vmem:[%s6 + $0x8] sm:$0xff]
    %v210 = vld [vmem:[%s6 + $0x10] sm:$0xff]
    %v211 = vld [vmem:[%s6 + $0x18] sm:$0xff]
    %214 = vrot.lane.b32.xlu0 %v200, 96
    %v215 = vpop.permute.xlu0 %214
    %216 = vrot.lane.b32.xlu0 %v205, 96
    %v217 = vpop.permute.xlu0 %216
    %vm218 = vcmask 64512
    %v219 = vsel %vm218, %v200, 0
    %v221 = vsel %vm218, %v205, 0
    %v223 = vsel %vm218, %v215, 0
    %v225 = vsel %vm218, %v217, 0
    %227 = vmatprep.subr.mxu0 0.0
    %228 = vmatpush1.xpose.msra.mxu0 %v223
    %229 = vmatprep.subr.mxu0 0.0
    %230 = vmatpush1.xpose.msra.mxu0 %v225
    %231 = vmatprep.subr.mxu0 0.0
    %232 = vmatpush1.xpose.msra.mxu0 0.0
    %233 = vmatprep.subr.mxu0 0.0
    %234 = vmatpush1.xpose.msra.mxu0 0.0
    %235 = vmatprep.subr.mxu0 0.0
    %236 = vmatpush1.xpose.msra.mxu0 0.0
    %237 = vmatprep.subr.mxu0 0.0
    %238 = vmatpush1.xpose.msra.mxu0 0.0
    %239 = vmatprep.subr.mxu0 0.0
    %240 = vmatpush1.xpose.msra.mxu0 0.0
    %241 = vmatprep.subr.mxu0 0.0
    %242 = vmatpush1.xpose.msra.mxu0 0.0
    %243 = vmatprep.subr.mxu0 0.0
    %244 = vmatpush1.xpose.msra.mxu0 0.0
    %245 = vmatprep.subr.mxu0 0.0
    %246 = vmatpush1.xpose.msra.mxu0 0.0
    %247 = vmatprep.subr.mxu0 0.0
    %248 = vmatpush1.xpose.msra.mxu0 0.0
    %249 = vmatprep.subr.mxu0 0.0
    %250 = vmatpush1.xpose.msra.mxu0 0.0
    %251 = vmatprep.subr.mxu0 0.0
    %252 = vmatpush1.xpose.msra.mxu0 0.0
    %253 = vmatprep.subr.mxu0 0.0
    %254 = vmatpush1.xpose.msra.mxu0 0.0
    %255 = vmatprep.subr.mxu0 0.0
    %256 = vmatpush1.xpose.msra.mxu0 0.0
    %257 = vmatprep.subr.mxu0 0.0
    %258 = vmatpush1.xpose.msra.mxu0 0.0
    %259 = vmatprep.subr.mxu0 0.0
    %260 = vmatpush1.xpose.msra.mxu0 0.0
    %261 = vmatprep.subr.mxu0 0.0
    %262 = vmatpush1.xpose.msra.mxu0 0.0
    %263 = vmatprep.subr.mxu0 0.0
    %264 = vmatpush1.xpose.msra.mxu0 0.0
    %265 = vmatprep.subr.mxu0 0.0
    %266 = vmatpush1.xpose.msra.mxu0 0.0
    %267 = vmatprep.subr.mxu0 0.0
    %268 = vmatpush1.xpose.msra.mxu0 0.0
    %269 = vmatprep.subr.mxu0 0.0
    %270 = vmatpush1.xpose.msra.mxu0 0.0
    %271 = vmatprep.subr.mxu0 0.0
    %272 = vmatpush1.xpose.msra.mxu0 0.0
    %273 = vmatprep.subr.mxu0 0.0
    %274 = vmatpush1.xpose.msra.mxu0 0.0
    %275 = vmatprep.subr.mxu0 0.0
    %276 = vmatpush1.xpose.msra.mxu0 0.0
    %277 = vmatprep.subr.mxu0 0.0
    %278 = vmatpush1.xpose.msra.mxu0 0.0
    %279 = vmatprep.subr.mxu0 0.0
    %280 = vmatpush1.xpose.msra.mxu0 0.0
    %281 = vmatprep.subr.mxu0 0.0
    %282 = vmatpush1.xpose.msra.mxu0 0.0
    %283 = vmatprep.subr.mxu0 0.0
    %284 = vmatpush1.xpose.msra.mxu0 0.0
    %285 = vmatprep.subr.mxu0 0.0
    %286 = vmatpush1.xpose.msra.mxu0 0.0
    %287 = vmatprep.subr.mxu0 0.0
    %288 = vmatpush1.xpose.msra.mxu0 0.0
    %289 = vmatprep.subr.mxu0 0.0
    %290 = vmatpush1.xpose.msra.mxu0 0.0
    %291 = vmatprep.mubr.f32.mxu0 0.0
    %292 = vmatmul.mubr.f32.gmra.mrb[0].mxu0 %v219
    %v293 = vpop.f32.mrb[0].mxu0
    %v294 = vadd.f32 0.0, %v293
    %v295 = vpop.f32.mrb[0].mxu0
    %296 = vmatprep.mubr.f32.mxu0 0.0
    %297 = vmatmul.mubr.f32.gmra.mrb[0].mxu0 %v221
    %v298 = vpop.f32.mrb[0].mxu0
    %v299 = vadd.f32 0.0, %v298
    %v300 = vpop.f32.mrb[0].mxu0
    %301 = vdwg.mxu0
    %v302 = vmul.f32 %v294, 0.35355338
    %v303 = vmul.f32 %v299, 0.35355338
    %v304 = vadd.f32 %v302, %v66
    %v305 = vadd.f32 %v303, %v67
    %vm306 = vcmask 130048
    %v307 = vsel %vm306, %v304, -inf
    %308 = vmax.xlane.f32.xlu0 %v307
    %v309 = vpop.xlane.xlu0 %308
    %v310 = vsel %vm306, %v305, -inf
    %311 = vmax.xlane.f32.xlu0 %v310
    %v312 = vpop.xlane.xlu0 %311
    %v313 = vsub.f32 %v304, %v309
    %v314 = vsub.f32 %v305, %v312
    %v315 = vmul.f32 %v313, 1.442695
    %v316 = vpow.pop %v315
    %v317 = vmul.f32 %v314, 1.442695
    %v318 = vpow.pop %v317
    %v319 = vsel %vm306, %v316, 0.0
    %320 = vadd.xlane.f32.xlu0 %v319
    %v321 = vpop.xlane.xlu0 %320
    %v322 = vsel %vm306, %v318, 0.0
    %323 = vadd.xlane.f32.xlu0 %v322
    %v324 = vpop.xlane.xlu0 %323
    %v325 = vrcp.pop %v321
    %v326 = vmul.f32 %v316, %v325
    %v327 = vrcp.pop %v324
    %v328 = vmul.f32 %v318, %v327
    %329 = vrot.lane.b32.xlu0 %v200, 64
    %v330 = vpop.permute.xlu0 %329
    %331 = vrot.lane.b32.xlu0 %v205, 64
    %v332 = vpop.permute.xlu0 %331
    %v336 = vsel %vm306, %v326, 0
    %v339 = vsel %vm306, %v328, 0
    %341 = vmatprep.subr.mxu0 0.0
    %342 = vmatpush1.msra.mxu0 %v330
    %343 = vmatprep.subr.mxu0 0.0
    %344 = vmatpush1.msra.mxu0 %v332
    %345 = vmatprep.subr.mxu0 0.0
    %346 = vmatpush1.msra.mxu0 0.0
    %347 = vmatprep.subr.mxu0 0.0
    %348 = vmatpush1.msra.mxu0 0.0
    %349 = vmatprep.subr.mxu0 0.0
    %350 = vmatpush1.msra.mxu0 0.0
    %351 = vmatprep.subr.mxu0 0.0
    %352 = vmatpush1.msra.mxu0 0.0
    %353 = vmatprep.subr.mxu0 0.0
    %354 = vmatpush1.msra.mxu0 0.0
    %355 = vmatprep.subr.mxu0 0.0
    %356 = vmatpush1.msra.mxu0 0.0
    %357 = vmatprep.subr.mxu0 0.0
    %358 = vmatpush1.msra.mxu0 0.0
    %359 = vmatprep.subr.mxu0 0.0
    %360 = vmatpush1.msra.mxu0 0.0
    %361 = vmatprep.subr.mxu0 0.0
    %362 = vmatpush1.msra.mxu0 0.0
    %363 = vmatprep.subr.mxu0 0.0
    %364 = vmatpush1.msra.mxu0 0.0
    %365 = vmatprep.subr.mxu0 0.0
    %366 = vmatpush1.msra.mxu0 0.0
    %367 = vmatprep.subr.mxu0 0.0
    %368 = vmatpush1.msra.mxu0 0.0
    %369 = vmatprep.subr.mxu0 0.0
    %370 = vmatpush1.msra.mxu0 0.0
    %371 = vmatprep.subr.mxu0 0.0
    %372 = vmatpush1.msra.mxu0 0.0
    %373 = vmatprep.subr.mxu0 0.0
    %374 = vmatpush1.msra.mxu0 0.0
    %375 = vmatprep.subr.mxu0 0.0
    %376 = vmatpush1.msra.mxu0 0.0
    %377 = vmatprep.subr.mxu0 0.0
    %378 = vmatpush1.msra.mxu0 0.0
    %379 = vmatprep.subr.mxu0 0.0
    %380 = vmatpush1.msra.mxu0 0.0
    %381 = vmatprep.subr.mxu0 0.0
    %382 = vmatpush1.msra.mxu0 0.0
    %383 = vmatprep.subr.mxu0 0.0
    %384 = vmatpush1.msra.mxu0 0.0
    %385 = vmatprep.subr.mxu0 0.0
    %386 = vmatpush1.msra.mxu0 0.0
    %387 = vmatprep.subr.mxu0 0.0
    %388 = vmatpush1.msra.mxu0 0.0
    %389 = vmatprep.subr.mxu0 0.0
    %390 = vmatpush1.msra.mxu0 0.0
    %391 = vmatprep.subr.mxu0 0.0
    %392 = vmatpush1.msra.mxu0 0.0
    %393 = vmatprep.subr.mxu0 0.0
    %394 = vmatpush1.msra.mxu0 0.0
    %395 = vmatprep.subr.mxu0 0.0
    %396 = vmatpush1.msra.mxu0 0.0
    %397 = vmatprep.subr.mxu0 0.0
    %398 = vmatpush1.msra.mxu0 0.0
    %399 = vmatprep.subr.mxu0 0.0
    %400 = vmatpush1.msra.mxu0 0.0
    %401 = vmatprep.subr.mxu0 0.0
    %402 = vmatpush1.msra.mxu0 0.0
    %403 = vmatprep.subr.mxu0 0.0
    %404 = vmatpush1.msra.mxu0 0.0
    %405 = vmatprep.mubr.f32.mxu0 0.0
    %406 = vmatmul.mubr.f32.gmra.mrb[0].mxu0 %v336
    %v407 = vpop.f32.mrb[0].mxu0
    %v408 = vadd.f32 0.0, %v407
    %v409 = vpop.f32.mrb[0].mxu0
    %410 = vmatprep.mubr.f32.mxu0 0.0
    %411 = vmatmul.mubr.f32.gmra.mrb[0].mxu0 %v339
    %v412 = vpop.f32.mrb[0].mxu0
    %v413 = vadd.f32 0.0, %v412
    %v414 = vpop.f32.mrb[0].mxu0
    %415 = vdwg.mxu0
    %416 = vrot.lane.b32.xlu0 %v200, 120
    %v417 = vpop.permute.xlu0 %416
    %418 = vrot.lane.b32.xlu0 %v205, 120
    %v419 = vpop.permute.xlu0 %418
    %420 = vrot.lane.b32.xlu0 %v200, 88
    %v421 = vpop.permute.xlu0 %420
    %422 = vrot.lane.b32.xlu0 %v205, 88
    %v423 = vpop.permute.xlu0 %422
    %v424 = vsel %vm218, %v417, 0
    %v426 = vsel %vm218, %v419, 0
    %v428 = vsel %vm218, %v421, 0
    %v430 = vsel %vm218, %v423, 0
    %432 = vmatprep.subr.mxu0 0.0
    %433 = vmatpush1.xpose.msra.mxu0 %v428
    %434 = vmatprep.subr.mxu0 0.0
    %435 = vmatpush1.xpose.msra.mxu0 %v430
    %436 = vmatprep.subr.mxu0 0.0
    %437 = vmatpush1.xpose.msra.mxu0 0.0
    %438 = vmatprep.subr.mxu0 0.0
    %439 = vmatpush1.xpose.msra.mxu0 0.0
    %440 = vmatprep.subr.mxu0 0.0
    %441 = vmatpush1.xpose.msra.mxu0 0.0
    %442 = vmatprep.subr.mxu0 0.0
    %443 = vmatpush1.xpose.msra.mxu0 0.0
    %444 = vmatprep.subr.mxu0 0.0
    %445 = vmatpush1.xpose.msra.mxu0 0.0
    %446 = vmatprep.subr.mxu0 0.0
    %447 = vmatpush1.xpose.msra.mxu0 0.0
    %448 = vmatprep.subr.mxu0 0.0
    %449 = vmatpush1.xpose.msra.mxu0 0.0
    %450 = vmatprep.subr.mxu0 0.0
    %451 = vmatpush1.xpose.msra.mxu0 0.0
    %452 = vmatprep.subr.mxu0 0.0
    %453 = vmatpush1.xpose.msra.mxu0 0.0
    %454 = vmatprep.subr.mxu0 0.0
    %455 = vmatpush1.xpose.msra.mxu0 0.0
    %456 = vmatprep.subr.mxu0 0.0
    %457 = vmatpush1.xpose.msra.mxu0 0.0
    %458 = vmatprep.subr.mxu0 0.0
    %459 = vmatpush1.xpose.msra.mxu0 0.0
    %460 = vmatprep.subr.mxu0 0.0
    %461 = vmatpush1.xpose.msra.mxu0 0.0
    %462 = vmatprep.subr.mxu0 0.0
    %463 = vmatpush1.xpose.msra.mxu0 0.0
    %464 = vmatprep.subr.mxu0 0.0
    %465 = vmatpush1.xpose.msra.mxu0 0.0
    %466 = vmatprep.subr.mxu0 0.0
    %467 = vmatpush1.xpose.msra.mxu0 0.0
    %468 = vmatprep.subr.mxu0 0.0
    %469 = vmatpush1.xpose.msra.mxu0 0.0
    %470 = vmatprep.subr.mxu0 0.0
    %471 = vmatpush1.xpose.msra.mxu0 0.0
    %472 = vmatprep.subr.mxu0 0.0
    %473 = vmatpush1.xpose.msra.mxu0 0.0
    %474 = vmatprep.subr.mxu0 0.0
    %475 = vmatpush1.xpose.msra.mxu0 0.0
    %476 = vmatprep.subr.mxu0 0.0
    %477 = vmatpush1.xpose.msra.mxu0 0.0
    %478 = vmatprep.subr.mxu0 0.0
    %479 = vmatpush1.xpose.msra.mxu0 0.0
    %480 = vmatprep.subr.mxu0 0.0
    %481 = vmatpush1.xpose.msra.mxu0 0.0
    %482 = vmatprep.subr.mxu0 0.0
    %483 = vmatpush1.xpose.msra.mxu0 0.0
    %484 = vmatprep.subr.mxu0 0.0
    %485 = vmatpush1.xpose.msra.mxu0 0.0
    %486 = vmatprep.subr.mxu0 0.0
    %487 = vmatpush1.xpose.msra.mxu0 0.0
    %488 = vmatprep.subr.mxu0 0.0
    %489 = vmatpush1.xpose.msra.mxu0 0.0
    %490 = vmatprep.subr.mxu0 0.0
    %491 = vmatpush1.xpose.msra.mxu0 0.0
    %492 = vmatprep.subr.mxu0 0.0
    %493 = vmatpush1.xpose.msra.mxu0 0.0
    %494 = vmatprep.subr.mxu0 0.0
    %495 = vmatpush1.xpose.msra.mxu0 0.0
    %496 = vmatprep.mubr.f32.mxu0 0.0
    %497 = vmatmul.mubr.f32.gmra.mrb[0].mxu0 %v424
    %v498 = vpop.f32.mrb[0].mxu0
    %v499 = vadd.f32 0.0, %v498
    %v500 = vpop.f32.mrb[0].mxu0
    %501 = vmatprep.mubr.f32.mxu0 0.0
    %502 = vmatmul.mubr.f32.gmra.mrb[0].mxu0 %v426
    %v503 = vpop.f32.mrb[0].mxu0
    %v504 = vadd.f32 0.0, %v503
    %v505 = vpop.f32.mrb[0].mxu0
    %506 = vdwg.mxu0
    %v507 = vmul.f32 %v499, 0.35355338
    %v508 = vmul.f32 %v504, 0.35355338
    %v509 = vadd.f32 %v507, %v66
    %v510 = vadd.f32 %v508, %v67
    %v511 = vsel %vm306, %v509, -inf
    %512 = vmax.xlane.f32.xlu0 %v511
    %v513 = vpop.xlane.xlu0 %512
    %v514 = vsel %vm306, %v510, -inf
    %515 = vmax.xlane.f32.xlu0 %v514
    %v516 = vpop.xlane.xlu0 %515
    %v517 = vsub.f32 %v509, %v513
    %v518 = vsub.f32 %v510, %v516
    %v519 = vmul.f32 %v517, 1.442695
    %v520 = vpow.pop %v519
    %v521 = vmul.f32 %v518, 1.442695
    %v522 = vpow.pop %v521
    %v523 = vsel %vm306, %v520, 0.0
    %524 = vadd.xlane.f32.xlu0 %v523
    %v525 = vpop.xlane.xlu0 %524
    %v526 = vsel %vm306, %v522, 0.0
    %527 = vadd.xlane.f32.xlu0 %v526
    %v528 = vpop.xlane.xlu0 %527
    %v529 = vrcp.pop %v525
    %v530 = vmul.f32 %v520, %v529
    %v531 = vrcp.pop %v528
    %v532 = vmul.f32 %v522, %v531
    %533 = vrot.lane.b32.xlu0 %v200, 56
    %v534 = vpop.permute.xlu0 %533
    %535 = vrot.lane.b32.xlu0 %v205, 56
    %v536 = vpop.permute.xlu0 %535
    %v540 = vsel %vm306, %v530, 0
    %v543 = vsel %vm306, %v532, 0
    %545 = vmatprep.subr.mxu0 0.0
    %546 = vmatpush1.msra.mxu0 %v534
    %547 = vmatprep.subr.mxu0 0.0
    %548 = vmatpush1.msra.mxu0 %v536
    %549 = vmatprep.subr.mxu0 0.0
    %550 = vmatpush1.msra.mxu0 0.0
    %551 = vmatprep.subr.mxu0 0.0
    %552 = vmatpush1.msra.mxu0 0.0
    %553 = vmatprep.subr.mxu0 0.0
    %554 = vmatpush1.msra.mxu0 0.0
    %555 = vmatprep.subr.mxu0 0.0
    %556 = vmatpush1.msra.mxu0 0.0
    %557 = vmatprep.subr.mxu0 0.0
    %558 = vmatpush1.msra.mxu0 0.0
    %559 = vmatprep.subr.mxu0 0.0
    %560 = vmatpush1.msra.mxu0 0.0
    %561 = vmatprep.subr.mxu0 0.0
    %562 = vmatpush1.msra.mxu0 0.0
    %563 = vmatprep.subr.mxu0 0.0
    %564 = vmatpush1.msra.mxu0 0.0
    %565 = vmatprep.subr.mxu0 0.0
    %566 = vmatpush1.msra.mxu0 0.0
    %567 = vmatprep.subr.mxu0 0.0
    %568 = vmatpush1.msra.mxu0 0.0
    %569 = vmatprep.subr.mxu0 0.0
    %570 = vmatpush1.msra.mxu0 0.0
    %571 = vmatprep.subr.mxu0 0.0
    %572 = vmatpush1.msra.mxu0 0.0
    %573 = vmatprep.subr.mxu0 0.0
    %574 = vmatpush1.msra.mxu0 0.0
    %575 = vmatprep.subr.mxu0 0.0
    %576 = vmatpush1.msra.mxu0 0.0
    %577 = vmatprep.subr.mxu0 0.0
    %578 = vmatpush1.msra.mxu0 0.0
    %579 = vmatprep.subr.mxu0 0.0
    %580 = vmatpush1.msra.mxu0 0.0
    %581 = vmatprep.subr.mxu0 0.0
    %582 = vmatpush1.msra.mxu0 0.0
    %583 = vmatprep.subr.mxu0 0.0
    %584 = vmatpush1.msra.mxu0 0.0
    %585 = vmatprep.subr.mxu0 0.0
    %586 = vmatpush1.msra.mxu0 0.0
    %587 = vmatprep.subr.mxu0 0.0
    %588 = vmatpush1.msra.mxu0 0.0
    %589 = vmatprep.subr.mxu0 0.0
    %590 = vmatpush1.msra.mxu0 0.0
    %591 = vmatprep.subr.mxu0 0.0
    %592 = vmatpush1.msra.mxu0 0.0
    %593 = vmatprep.subr.mxu0 0.0
    %594 = vmatpush1.msra.mxu0 0.0
    %595 = vmatprep.subr.mxu0 0.0
    %596 = vmatpush1.msra.mxu0 0.0
    %597 = vmatprep.subr.mxu0 0.0
    %598 = vmatpush1.msra.mxu0 0.0
    %599 = vmatprep.subr.mxu0 0.0
    %600 = vmatpush1.msra.mxu0 0.0
    %601 = vmatprep.subr.mxu0 0.0
    %602 = vmatpush1.msra.mxu0 0.0
    %603 = vmatprep.subr.mxu0 0.0
    %604 = vmatpush1.msra.mxu0 0.0
    %605 = vmatprep.subr.mxu0 0.0
    %606 = vmatpush1.msra.mxu0 0.0
    %607 = vmatprep.subr.mxu0 0.0
    %608 = vmatpush1.msra.mxu0 0.0
    %609 = vmatprep.mubr.f32.mxu0 0.0
    %610 = vmatmul.mubr.f32.gmra.mrb[0].mxu0 %v540
    %v611 = vpop.f32.mrb[0].mxu0
    %v612 = vadd.f32 0.0, %v611
    %v613 = vpop.f32.mrb[0].mxu0
    %614 = vmatprep.mubr.f32.mxu0 0.0
    %615 = vmatmul.mubr.f32.gmra.mrb[0].mxu0 %v543
    %v616 = vpop.f32.mrb[0].mxu0
    %v617 = vadd.f32 0.0, %v616
    %v618 = vpop.f32.mrb[0].mxu0
    %619 = vdwg.mxu0
    %v621 = vsel %vm218, %v612, 0
    %v624 = vsel %vm218, %v617, 0
    %626 = vmatprep.subr.mxu0 0.0
    %627 = vmatpush1.msra.mxu0 %v209
    %628 = vmatprep.subr.mxu0 0.0
    %629 = vmatpush1.msra.mxu0 0.0
    %630 = vmatprep.subr.mxu0 0.0
    %631 = vmatpush1.msra.mxu0 0.0
    %632 = vmatprep.subr.mxu0 0.0
    %633 = vmatpush1.msra.mxu0 0.0
    %634 = vmatprep.subr.mxu0 0.0
    %635 = vmatpush1.msra.mxu0 0.0
    %636 = vmatprep.subr.mxu0 0.0
    %637 = vmatpush1.msra.mxu0 0.0
    %638 = vmatprep.subr.mxu0 0.0
    %639 = vmatpush1.msra.mxu0 0.0
    %640 = vmatprep.subr.mxu0 0.0
    %641 = vmatpush1.msra.mxu0 0.0
    %642 = vmatprep.subr.mxu0 0.0
    %643 = vmatpush1.msra.mxu0 0.0
    %644 = vmatprep.subr.mxu0 0.0
    %645 = vmatpush1.msra.mxu0 0.0
    %646 = vmatprep.subr.mxu0 0.0
    %647 = vmatpush1.msra.mxu0 0.0
    %648 = vmatprep.subr.mxu0 0.0
    %649 = vmatpush1.msra.mxu0 0.0
    %650 = vmatprep.subr.mxu0 0.0
    %651 = vmatpush1.msra.mxu0 0.0
    %652 = vmatprep.subr.mxu0 0.0
    %653 = vmatpush1.msra.mxu0 0.0
    %654 = vmatprep.subr.mxu0 0.0
    %655 = vmatpush1.msra.mxu0 0.0
    %656 = vmatprep.subr.mxu0 0.0
    %657 = vmatpush1.msra.mxu0 0.0
    %658 = vmatprep.subr.mxu0 0.0
    %659 = vmatpush1.msra.mxu0 0.0
    %660 = vmatprep.subr.mxu0 0.0
    %661 = vmatpush1.msra.mxu0 0.0
    %662 = vmatprep.subr.mxu0 0.0
    %663 = vmatpush1.msra.mxu0 0.0
    %664 = vmatprep.subr.mxu0 0.0
    %665 = vmatpush1.msra.mxu0 0.0
    %666 = vmatprep.subr.mxu0 0.0
    %667 = vmatpush1.msra.mxu0 0.0
    %668 = vmatprep.subr.mxu0 0.0
    %669 = vmatpush1.msra.mxu0 0.0
    %670 = vmatprep.subr.mxu0 0.0
    %671 = vmatpush1.msra.mxu0 0.0
    %672 = vmatprep.subr.mxu0 0.0
    %673 = vmatpush1.msra.mxu0 0.0
    %674 = vmatprep.subr.mxu0 0.0
    %675 = vmatpush1.msra.mxu0 0.0
    %676 = vmatprep.subr.mxu0 0.0
    %677 = vmatpush1.msra.mxu0 0.0
    %678 = vmatprep.subr.mxu0 0.0
    %679 = vmatpush1.msra.mxu0 0.0
    %680 = vmatprep.subr.mxu0 0.0
    %681 = vmatpush1.msra.mxu0 0.0
    %682 = vmatprep.subr.mxu0 0.0
    %683 = vmatpush1.msra.mxu0 0.0
    %684 = vmatprep.subr.mxu0 0.0
    %685 = vmatpush1.msra.mxu0 0.0
    %686 = vmatprep.subr.mxu0 0.0
    %687 = vmatpush1.msra.mxu0 0.0
    %688 = vmatprep.subr.mxu0 0.0
    %689 = vmatpush1.msra.mxu0 0.0
    %690 = vmatprep.mubr.f32.mxu0 0.0
    %691 = vmatmul.mubr.f32.gmra.mrb[0].mxu0 %v621
    %v692 = vpop.f32.mrb[0].mxu0
    %v693 = vadd.f32 0.0, %v692
    %v694 = vpop.f32.mrb[0].mxu0
    %695 = vmatprep.mubr.f32.mxu0 0.0
    %696 = vmatmul.mubr.f32.gmra.mrb[0].mxu0 %v624
    %v697 = vpop.f32.mrb[0].mxu0
    %v698 = vadd.f32 0.0, %v697
    %v699 = vpop.f32.mrb[0].mxu0
    %700 = vdwg.mxu0
    %v702 = vsel %vm218, %v408, 0
    %v705 = vsel %vm218, %v413, 0
    %707 = vmatprep.subr.mxu0 0.0
    %708 = vmatpush1.msra.mxu0 %v208
    %709 = vmatprep.subr.mxu0 0.0
    %710 = vmatpush1.msra.mxu0 0.0
    %711 = vmatprep.subr.mxu0 0.0
    %712 = vmatpush1.msra.mxu0 0.0
    %713 = vmatprep.subr.mxu0 0.0
    %714 = vmatpush1.msra.mxu0 0.0
    %715 = vmatprep.subr.mxu0 0.0
    %716 = vmatpush1.msra.mxu0 0.0
    %717 = vmatprep.subr.mxu0 0.0
    %718 = vmatpush1.msra.mxu0 0.0
    %719 = vmatprep.subr.mxu0 0.0
    %720 = vmatpush1.msra.mxu0 0.0
    %721 = vmatprep.subr.mxu0 0.0
    %722 = vmatpush1.msra.mxu0 0.0
    %723 = vmatprep.subr.mxu0 0.0
    %724 = vmatpush1.msra.mxu0 0.0
    %725 = vmatprep.subr.mxu0 0.0
    %726 = vmatpush1.msra.mxu0 0.0
    %727 = vmatprep.subr.mxu0 0.0
    %728 = vmatpush1.msra.mxu0 0.0
    %729 = vmatprep.subr.mxu0 0.0
    %730 = vmatpush1.msra.mxu0 0.0
    %731 = vmatprep.subr.mxu0 0.0
    %732 = vmatpush1.msra.mxu0 0.0
    %733 = vmatprep.subr.mxu0 0.0
    %734 = vmatpush1.msra.mxu0 0.0
    %735 = vmatprep.subr.mxu0 0.0
    %736 = vmatpush1.msra.mxu0 0.0
    %737 = vmatprep.subr.mxu0 0.0
    %738 = vmatpush1.msra.mxu0 0.0
    %739 = vmatprep.subr.mxu0 0.0
    %740 = vmatpush1.msra.mxu0 0.0
    %741 = vmatprep.subr.mxu0 0.0
    %742 = vmatpush1.msra.mxu0 0.0
    %743 = vmatprep.subr.mxu0 0.0
    %744 = vmatpush1.msra.mxu0 0.0
    %745 = vmatprep.subr.mxu0 0.0
    %746 = vmatpush1.msra.mxu0 0.0
    %747 = vmatprep.subr.mxu0 0.0
    %748 = vmatpush1.msra.mxu0 0.0
    %749 = vmatprep.subr.mxu0 0.0
    %750 = vmatpush1.msra.mxu0 0.0
    %751 = vmatprep.subr.mxu0 0.0
    %752 = vmatpush1.msra.mxu0 0.0
    %753 = vmatprep.subr.mxu0 0.0
    %754 = vmatpush1.msra.mxu0 0.0
    %755 = vmatprep.subr.mxu0 0.0
    %756 = vmatpush1.msra.mxu0 0.0
    %757 = vmatprep.subr.mxu0 0.0
    %758 = vmatpush1.msra.mxu0 0.0
    %759 = vmatprep.subr.mxu0 0.0
    %760 = vmatpush1.msra.mxu0 0.0
    %761 = vmatprep.subr.mxu0 0.0
    %762 = vmatpush1.msra.mxu0 0.0
    %763 = vmatprep.subr.mxu0 0.0
    %764 = vmatpush1.msra.mxu0 0.0
    %765 = vmatprep.subr.mxu0 0.0
    %766 = vmatpush1.msra.mxu0 0.0
    %767 = vmatprep.subr.mxu0 0.0
    %768 = vmatpush1.msra.mxu0 0.0
    %769 = vmatprep.subr.mxu0 0.0
    %770 = vmatpush1.msra.mxu0 0.0
    %771 = vmatprep.mubr.f32.mxu0 0.0
    %772 = vmatmul.mubr.f32.gmra.mrb[0].mxu0 %v702
    %v773 = vpop.f32.mrb[0].mxu0
    %v774 = vadd.f32 %v693, %v773
    %v775 = vpop.f32.mrb[0].mxu0
    %776 = vmatprep.mubr.f32.mxu0 0.0
    %777 = vmatmul.mubr.f32.gmra.mrb[0].mxu0 %v705
    %v778 = vpop.f32.mrb[0].mxu0
    %v779 = vadd.f32 %v698, %v778
    %v780 = vpop.f32.mrb[0].mxu0
    %781 = vdwg.mxu0
    %782 = vrot.lane.b32.xlu0 %v200, 112
    %v783 = vpop.permute.xlu0 %782
    %784 = vrot.lane.b32.xlu0 %v205, 112
    %v785 = vpop.permute.xlu0 %784
    %786 = vrot.lane.b32.xlu0 %v200, 80
    %v787 = vpop.permute.xlu0 %786
    %788 = vrot.lane.b32.xlu0 %v205, 80
    %v789 = vpop.permute.xlu0 %788
    %v790 = vsel %vm218, %v783, 0
    %v792 = vsel %vm218, %v785, 0
    %v794 = vsel %vm218, %v787, 0
    %v796 = vsel %vm218, %v789, 0
    %798 = vmatprep.subr.mxu0 0.0
    %799 = vmatpush1.xpose.msra.mxu0 %v794
    %800 = vmatprep.subr.mxu0 0.0
    %801 = vmatpush1.xpose.msra.mxu0 %v796
    %802 = vmatprep.subr.mxu0 0.0
    %803 = vmatpush1.xpose.msra.mxu0 0.0
    %804 = vmatprep.subr.mxu0 0.0
    %805 = vmatpush1.xpose.msra.mxu0 0.0
    %806 = vmatprep.subr.mxu0 0.0
    %807 = vmatpush1.xpose.msra.mxu0 0.0
    %808 = vmatprep.subr.mxu0 0.0
    %809 = vmatpush1.xpose.msra.mxu0 0.0
    %810 = vmatprep.subr.mxu0 0.0
    %811 = vmatpush1.xpose.msra.mxu0 0.0
    %812 = vmatprep.subr.mxu0 0.0
    %813 = vmatpush1.xpose.msra.mxu0 0.0
    %814 = vmatprep.subr.mxu0 0.0
    %815 = vmatpush1.xpose.msra.mxu0 0.0
    %816 = vmatprep.subr.mxu0 0.0
    %817 = vmatpush1.xpose.msra.mxu0 0.0
    %818 = vmatprep.subr.mxu0 0.0
    %819 = vmatpush1.xpose.msra.mxu0 0.0
    %820 = vmatprep.subr.mxu0 0.0
    %821 = vmatpush1.xpose.msra.mxu0 0.0
    %822 = vmatprep.subr.mxu0 0.0
    %823 = vmatpush1.xpose.msra.mxu0 0.0
    %824 = vmatprep.subr.mxu0 0.0
    %825 = vmatpush1.xpose.msra.mxu0 0.0
    %826 = vmatprep.subr.mxu0 0.0
    %827 = vmatpush1.xpose.msra.mxu0 0.0
    %828 = vmatprep.subr.mxu0 0.0
    %829 = vmatpush1.xpose.msra.mxu0 0.0
    %830 = vmatprep.subr.mxu0 0.0
    %831 = vmatpush1.xpose.msra.mxu0 0.0
    %832 = vmatprep.subr.mxu0 0.0
    %833 = vmatpush1.xpose.msra.mxu0 0.0
    %834 = vmatprep.subr.mxu0 0.0
    %835 = vmatpush1.xpose.msra.mxu0 0.0
    %836 = vmatprep.subr.mxu0 0.0
    %837 = vmatpush1.xpose.msra.mxu0 0.0
    %838 = vmatprep.subr.mxu0 0.0
    %839 = vmatpush1.xpose.msra.mxu0 0.0
    %840 = vmatprep.subr.mxu0 0.0
    %841 = vmatpush1.xpose.msra.mxu0 0.0
    %842 = vmatprep.subr.mxu0 0.0
    %843 = vmatpush1.xpose.msra.mxu0 0.0
    %844 = vmatprep.subr.mxu0 0.0
    %845 = vmatpush1.xpose.msra.mxu0 0.0
    %846 = vmatprep.subr.mxu0 0.0
    %847 = vmatpush1.xpose.msra.mxu0 0.0
    %848 = vmatprep.subr.mxu0 0.0
    %849 = vmatpush1.xpose.msra.mxu0 0.0
    %850 = vmatprep.subr.mxu0 0.0
    %851 = vmatpush1.xpose.msra.mxu0 0.0
    %852 = vmatprep.subr.mxu0 0.0
    %853 = vmatpush1.xpose.msra.mxu0 0.0
    %854 = vmatprep.subr.mxu0 0.0
    %855 = vmatpush1.xpose.msra.mxu0 0.0
    %856 = vmatprep.subr.mxu0 0.0
    %857 = vmatpush1.xpose.msra.mxu0 0.0
    %858 = vmatprep.subr.mxu0 0.0
    %859 = vmatpush1.xpose.msra.mxu0 0.0
    %860 = vmatprep.subr.mxu0 0.0
    %861 = vmatpush1.xpose.msra.mxu0 0.0
    %862 = vmatprep.mubr.f32.mxu0 0.0
    %863 = vmatmul.mubr.f32.gmra.mrb[0].mxu0 %v790
    %v864 = vpop.f32.mrb[0].mxu0
    %v865 = vadd.f32 0.0, %v864
    %v866 = vpop.f32.mrb[0].mxu0
    %867 = vmatprep.mubr.f32.mxu0 0.0
    %868 = vmatmul.mubr.f32.gmra.mrb[0].mxu0 %v792
    %v869 = vpop.f32.mrb[0].mxu0
    %v870 = vadd.f32 0.0, %v869
    %v871 = vpop.f32.mrb[0].mxu0
    %872 = vdwg.mxu0
    %v873 = vmul.f32 %v865, 0.35355338
    %v874 = vmul.f32 %v870, 0.35355338
    %v875 = vadd.f32 %v873, %v66
    %v876 = vadd.f32 %v874, %v67
    %v877 = vsel %vm306, %v875, -inf
    %878 = vmax.xlane.f32.xlu0 %v877
    %v879 = vpop.xlane.xlu0 %878
    %v880 = vsel %vm306, %v876, -inf
    %881 = vmax.xlane.f32.xlu0 %v880
    %v882 = vpop.xlane.xlu0 %881
    %v883 = vsub.f32 %v875, %v879
    %v884 = vsub.f32 %v876, %v882
    %v885 = vmul.f32 %v883, 1.442695
    %v886 = vpow.pop %v885
    %v887 = vmul.f32 %v884, 1.442695
    %v888 = vpow.pop %v887
    %v889 = vsel %vm306, %v886, 0.0
    %890 = vadd.xlane.f32.xlu0 %v889
    %v891 = vpop.xlane.xlu0 %890
    %v892 = vsel %vm306, %v888, 0.0
    %893 = vadd.xlane.f32.xlu0 %v892
    %v894 = vpop.xlane.xlu0 %893
    %v895 = vrcp.pop %v891
    %v896 = vmul.f32 %v886, %v895
    %v897 = vrcp.pop %v894
    %v898 = vmul.f32 %v888, %v897
    %899 = vrot.lane.b32.xlu0 %v200, 48
    %v900 = vpop.permute.xlu0 %899
    %901 = vrot.lane.b32.xlu0 %v205, 48
    %v902 = vpop.permute.xlu0 %901
    %v906 = vsel %vm306, %v896, 0
    %v909 = vsel %vm306, %v898, 0
    %911 = vmatprep.subr.mxu0 0.0
    %912 = vmatpush1.msra.mxu0 %v900
    %913 = vmatprep.subr.mxu0 0.0
    %914 = vmatpush1.msra.mxu0 %v902
    %915 = vmatprep.subr.mxu0 0.0
    %916 = vmatpush1.msra.mxu0 0.0
    %917 = vmatprep.subr.mxu0 0.0
    %918 = vmatpush1.msra.mxu0 0.0
    %919 = vmatprep.subr.mxu0 0.0
    %920 = vmatpush1.msra.mxu0 0.0
    %921 = vmatprep.subr.mxu0 0.0
    %922 = vmatpush1.msra.mxu0 0.0
    %923 = vmatprep.subr.mxu0 0.0
    %924 = vmatpush1.msra.mxu0 0.0
    %925 = vmatprep.subr.mxu0 0.0
    %926 = vmatpush1.msra.mxu0 0.0
    %927 = vmatprep.subr.mxu0 0.0
    %928 = vmatpush1.msra.mxu0 0.0
    %929 = vmatprep.subr.mxu0 0.0
    %930 = vmatpush1.msra.mxu0 0.0
    %931 = vmatprep.subr.mxu0 0.0
    %932 = vmatpush1.msra.mxu0 0.0
    %933 = vmatprep.subr.mxu0 0.0
    %934 = vmatpush1.msra.mxu0 0.0
    %935 = vmatprep.subr.mxu0 0.0
    %936 = vmatpush1.msra.mxu0 0.0
    %937 = vmatprep.subr.mxu0 0.0
    %938 = vmatpush1.msra.mxu0 0.0
    %939 = vmatprep.subr.mxu0 0.0
    %940 = vmatpush1.msra.mxu0 0.0
    %941 = vmatprep.subr.mxu0 0.0
    %942 = vmatpush1.msra.mxu0 0.0
    %943 = vmatprep.subr.mxu0 0.0
    %944 = vmatpush1.msra.mxu0 0.0
    %945 = vmatprep.subr.mxu0 0.0
    %946 = vmatpush1.msra.mxu0 0.0
    %947 = vmatprep.subr.mxu0 0.0
    %948 = vmatpush1.msra.mxu0 0.0
    %949 = vmatprep.subr.mxu0 0.0
    %950 = vmatpush1.msra.mxu0 0.0
    %951 = vmatprep.subr.mxu0 0.0
    %952 = vmatpush1.msra.mxu0 0.0
    %953 = vmatprep.subr.mxu0 0.0
    %954 = vmatpush1.msra.mxu0 0.0
    %955 = vmatprep.subr.mxu0 0.0
    %956 = vmatpush1.msra.mxu0 0.0
    %957 = vmatprep.subr.mxu0 0.0
    %958 = vmatpush1.msra.mxu0 0.0
    %959 = vmatprep.subr.mxu0 0.0
    %960 = vmatpush1.msra.mxu0 0.0
    %961 = vmatprep.subr.mxu0 0.0
    %962 = vmatpush1.msra.mxu0 0.0
    %963 = vmatprep.subr.mxu0 0.0
    %964 = vmatpush1.msra.mxu0 0.0
    %965 = vmatprep.subr.mxu0 0.0
    %966 = vmatpush1.msra.mxu0 0.0
    %967 = vmatprep.subr.mxu0 0.0
    %968 = vmatpush1.msra.mxu0 0.0
    %969 = vmatprep.subr.mxu0 0.0
    %970 = vmatpush1.msra.mxu0 0.0
    %971 = vmatprep.subr.mxu0 0.0
    %972 = vmatpush1.msra.mxu0 0.0
    %973 = vmatprep.subr.mxu0 0.0
    %974 = vmatpush1.msra.mxu0 0.0
    %975 = vmatprep.mubr.f32.mxu0 0.0
    %976 = vmatmul.mubr.f32.gmra.mrb[0].mxu0 %v906
    %v977 = vpop.f32.mrb[0].mxu0
    %v978 = vadd.f32 0.0, %v977
    %v979 = vpop.f32.mrb[0].mxu0
    %980 = vmatprep.mubr.f32.mxu0 0.0
    %981 = vmatmul.mubr.f32.gmra.mrb[0].mxu0 %v909
    %v982 = vpop.f32.mrb[0].mxu0
    %v983 = vadd.f32 0.0, %v982
    %v984 = vpop.f32.mrb[0].mxu0
    %985 = vdwg.mxu0
    %v987 = vsel %vm218, %v978, 0
    %v990 = vsel %vm218, %v983, 0
    %992 = vmatprep.subr.mxu0 0.0
    %993 = vmatpush1.msra.mxu0 %v210
    %994 = vmatprep.subr.mxu0 0.0
    %995 = vmatpush1.msra.mxu0 0.0
    %996 = vmatprep.subr.mxu0 0.0
    %997 = vmatpush1.msra.mxu0 0.0
    %998 = vmatprep.subr.mxu0 0.0
    %999 = vmatpush1.msra.mxu0 0.0
    %1000 = vmatprep.subr.mxu0 0.0
    %1001 = vmatpush1.msra.mxu0 0.0
    %1002 = vmatprep.subr.mxu0 0.0
    %1003 = vmatpush1.msra.mxu0 0.0
    %1004 = vmatprep.subr.mxu0 0.0
    %1005 = vmatpush1.msra.mxu0 0.0
    %1006 = vmatprep.subr.mxu0 0.0
    %1007 = vmatpush1.msra.mxu0 0.0
    %1008 = vmatprep.subr.mxu0 0.0
    %1009 = vmatpush1.msra.mxu0 0.0
    %1010 = vmatprep.subr.mxu0 0.0
    %1011 = vmatpush1.msra.mxu0 0.0
    %1012 = vmatprep.subr.mxu0 0.0
    %1013 = vmatpush1.msra.mxu0 0.0
    %1014 = vmatprep.subr.mxu0 0.0
    %1015 = vmatpush1.msra.mxu0 0.0
    %1016 = vmatprep.subr.mxu0 0.0
    %1017 = vmatpush1.msra.mxu0 0.0
    %1018 = vmatprep.subr.mxu0 0.0
    %1019 = vmatpush1.msra.mxu0 0.0
    %1020 = vmatprep.subr.mxu0 0.0
    %1021 = vmatpush1.msra.mxu0 0.0
    %1022 = vmatprep.subr.mxu0 0.0
    %1023 = vmatpush1.msra.mxu0 0.0
    %1024 = vmatprep.subr.mxu0 0.0
    %1025 = vmatpush1.msra.mxu0 0.0
    %1026 = vmatprep.subr.mxu0 0.0
    %1027 = vmatpush1.msra.mxu0 0.0
    %1028 = vmatprep.subr.mxu0 0.0
    %1029 = vmatpush1.msra.mxu0 0.0
    %1030 = vmatprep.subr.mxu0 0.0
    %1031 = vmatpush1.msra.mxu0 0.0
    %1032 = vmatprep.subr.mxu0 0.0
    %1033 = vmatpush1.msra.mxu0 0.0
    %1034 = vmatprep.subr.mxu0 0.0
    %1035 = vmatpush1.msra.mxu0 0.0
    %1036 = vmatprep.subr.mxu0 0.0
    %1037 = vmatpush1.msra.mxu0 0.0
    %1038 = vmatprep.subr.mxu0 0.0
    %1039 = vmatpush1.msra.mxu0 0.0
    %1040 = vmatprep.subr.mxu0 0.0
    %1041 = vmatpush1.msra.mxu0 0.0
    %1042 = vmatprep.subr.mxu0 0.0
    %1043 = vmatpush1.msra.mxu0 0.0
    %1044 = vmatprep.subr.mxu0 0.0
    %1045 = vmatpush1.msra.mxu0 0.0
    %1046 = vmatprep.subr.mxu0 0.0
    %1047 = vmatpush1.msra.mxu0 0.0
    %1048 = vmatprep.subr.mxu0 0.0
    %1049 = vmatpush1.msra.mxu0 0.0
    %1050 = vmatprep.subr.mxu0 0.0
    %1051 = vmatpush1.msra.mxu0 0.0
    %1052 = vmatprep.subr.mxu0 0.0
    %1053 = vmatpush1.msra.mxu0 0.0
    %1054 = vmatprep.subr.mxu0 0.0
    %1055 = vmatpush1.msra.mxu0 0.0
    %1056 = vmatprep.mubr.f32.mxu0 0.0
    %1057 = vmatmul.mubr.f32.gmra.mrb[0].mxu0 %v987
    %v1058 = vpop.f32.mrb[0].mxu0
    %v1059 = vadd.f32 0.0, %v1058
    %v1060 = vpop.f32.mrb[0].mxu0
    %1061 = vmatprep.mubr.f32.mxu0 0.0
    %1062 = vmatmul.mubr.f32.gmra.mrb[0].mxu0 %v990
    %v1063 = vpop.f32.mrb[0].mxu0
    %v1064 = vadd.f32 0.0, %v1063
    %v1065 = vpop.f32.mrb[0].mxu0
    %1066 = vdwg.mxu0
    %v1067 = vadd.f32 %v774, %v1059
    %v1068 = vadd.f32 %v779, %v1064
    %1069 = vrot.lane.b32.xlu0 %v200, 104
    %v1070 = vpop.permute.xlu0 %1069
    %1071 = vrot.lane.b32.xlu0 %v205, 104
    %v1072 = vpop.permute.xlu0 %1071
    %1073 = vrot.lane.b32.xlu0 %v200, 72
    %v1074 = vpop.permute.xlu0 %1073
    %1075 = vrot.lane.b32.xlu0 %v205, 72
    %v1076 = vpop.permute.xlu0 %1075
    %v1077 = vsel %vm218, %v1070, 0
    %v1079 = vsel %vm218, %v1072, 0
    %v1081 = vsel %vm218, %v1074, 0
    %v1083 = vsel %vm218, %v1076, 0
    %1085 = vmatprep.subr.mxu0 0.0
    %1086 = vmatpush1.xpose.msra.mxu0 %v1081
    %1087 = vmatprep.subr.mxu0 0.0
    %1088 = vmatpush1.xpose.msra.mxu0 %v1083
    %1089 = vmatprep.subr.mxu0 0.0
    %1090 = vmatpush1.xpose.msra.mxu0 0.0
    %1091 = vmatprep.subr.mxu0 0.0
    %1092 = vmatpush1.xpose.msra.mxu0 0.0
    %1093 = vmatprep.subr.mxu0 0.0
    %1094 = vmatpush1.xpose.msra.mxu0 0.0
    %1095 = vmatprep.subr.mxu0 0.0
    %1096 = vmatpush1.xpose.msra.mxu0 0.0
    %1097 = vmatprep.subr.mxu0 0.0
    %1098 = vmatpush1.xpose.msra.mxu0 0.0
    %1099 = vmatprep.subr.mxu0 0.0
    %1100 = vmatpush1.xpose.msra.mxu0 0.0
    %1101 = vmatprep.subr.mxu0 0.0
    %1102 = vmatpush1.xpose.msra.mxu0 0.0
    %1103 = vmatprep.subr.mxu0 0.0
    %1104 = vmatpush1.xpose.msra.mxu0 0.0
    %1105 = vmatprep.subr.mxu0 0.0
    %1106 = vmatpush1.xpose.msra.mxu0 0.0
    %1107 = vmatprep.subr.mxu0 0.0
    %1108 = vmatpush1.xpose.msra.mxu0 0.0
    %1109 = vmatprep.subr.mxu0 0.0
    %1110 = vmatpush1.xpose.msra.mxu0 0.0
    %1111 = vmatprep.subr.mxu0 0.0
    %1112 = vmatpush1.xpose.msra.mxu0 0.0
    %1113 = vmatprep.subr.mxu0 0.0
    %1114 = vmatpush1.xpose.msra.mxu0 0.0
    %1115 = vmatprep.subr.mxu0 0.0
    %1116 = vmatpush1.xpose.msra.mxu0 0.0
    %1117 = vmatprep.subr.mxu0 0.0
    %1118 = vmatpush1.xpose.msra.mxu0 0.0
    %1119 = vmatprep.subr.mxu0 0.0
    %1120 = vmatpush1.xpose.msra.mxu0 0.0
    %1121 = vmatprep.subr.mxu0 0.0
    %1122 = vmatpush1.xpose.msra.mxu0 0.0
    %1123 = vmatprep.subr.mxu0 0.0
    %1124 = vmatpush1.xpose.msra.mxu0 0.0
    %1125 = vmatprep.subr.mxu0 0.0
    %1126 = vmatpush1.xpose.msra.mxu0 0.0
    %1127 = vmatprep.subr.mxu0 0.0
    %1128 = vmatpush1.xpose.msra.mxu0 0.0
    %1129 = vmatprep.subr.mxu0 0.0
    %1130 = vmatpush1.xpose.msra.mxu0 0.0
    %1131 = vmatprep.subr.mxu0 0.0
    %1132 = vmatpush1.xpose.msra.mxu0 0.0
    %1133 = vmatprep.subr.mxu0 0.0
    %1134 = vmatpush1.xpose.msra.mxu0 0.0
    %1135 = vmatprep.subr.mxu0 0.0
    %1136 = vmatpush1.xpose.msra.mxu0 0.0
    %1137 = vmatprep.subr.mxu0 0.0
    %1138 = vmatpush1.xpose.msra.mxu0 0.0
    %1139 = vmatprep.subr.mxu0 0.0
    %1140 = vmatpush1.xpose.msra.mxu0 0.0
    %1141 = vmatprep.subr.mxu0 0.0
    %1142 = vmatpush1.xpose.msra.mxu0 0.0
    %1143 = vmatprep.subr.mxu0 0.0
    %1144 = vmatpush1.xpose.msra.mxu0 0.0
    %1145 = vmatprep.subr.mxu0 0.0
    %1146 = vmatpush1.xpose.msra.mxu0 0.0
    %1147 = vmatprep.subr.mxu0 0.0
    %1148 = vmatpush1.xpose.msra.mxu0 0.0
    %1149 = vmatprep.mubr.f32.mxu0 0.0
    %1150 = vmatmul.mubr.f32.gmra.mrb[0].mxu0 %v1077
    %v1151 = vpop.f32.mrb[0].mxu0
    %v1152 = vadd.f32 0.0, %v1151
    %v1153 = vpop.f32.mrb[0].mxu0
    %1154 = vmatprep.mubr.f32.mxu0 0.0
    %1155 = vmatmul.mubr.f32.gmra.mrb[0].mxu0 %v1079
    %v1156 = vpop.f32.mrb[0].mxu0
    %v1157 = vadd.f32 0.0, %v1156
    %v1158 = vpop.f32.mrb[0].mxu0
    %1159 = vdwg.mxu0
    %v1160 = vmul.f32 %v1152, 0.35355338
    %v1161 = vmul.f32 %v1157, 0.35355338
    %v1162 = vadd.f32 %v1160, %v66
    %v1163 = vadd.f32 %v1161, %v67
    %v1164 = vsel %vm306, %v1162, -inf
    %1165 = vmax.xlane.f32.xlu0 %v1164
    %v1166 = vpop.xlane.xlu0 %1165
    %v1167 = vsel %vm306, %v1163, -inf
    %1168 = vmax.xlane.f32.xlu0 %v1167
    %v1169 = vpop.xlane.xlu0 %1168
    %v1170 = vsub.f32 %v1162, %v1166
    %v1171 = vsub.f32 %v1163, %v1169
    %v1172 = vmul.f32 %v1170, 1.442695
    %v1173 = vpow.pop %v1172
    %v1174 = vmul.f32 %v1171, 1.442695
    %v1175 = vpow.pop %v1174
    %v1176 = vsel %vm306, %v1173, 0.0
    %1177 = vadd.xlane.f32.xlu0 %v1176
    %v1178 = vpop.xlane.xlu0 %1177
    %v1179 = vsel %vm306, %v1175, 0.0
    %1180 = vadd.xlane.f32.xlu0 %v1179
    %v1181 = vpop.xlane.xlu0 %1180
    %v1182 = vrcp.pop %v1178
    %v1183 = vmul.f32 %v1173, %v1182
    %v1184 = vrcp.pop %v1181
    %v1185 = vmul.f32 %v1175, %v1184
    %1186 = vrot.lane.b32.xlu0 %v200, 40
    %v1187 = vpop.permute.xlu0 %1186
    %1188 = vrot.lane.b32.xlu0 %v205, 40
    %v1189 = vpop.permute.xlu0 %1188
    %v1193 = vsel %vm306, %v1183, 0
    %v1196 = vsel %vm306, %v1185, 0
    %1198 = vmatprep.subr.mxu0 0.0
    %1199 = vmatpush1.msra.mxu0 %v1187
    %1200 = vmatprep.subr.mxu0 0.0
    %1201 = vmatpush1.msra.mxu0 %v1189
    %1202 = vmatprep.subr.mxu0 0.0
    %1203 = vmatpush1.msra.mxu0 0.0
    %1204 = vmatprep.subr.mxu0 0.0
    %1205 = vmatpush1.msra.mxu0 0.0
    %1206 = vmatprep.subr.mxu0 0.0
    %1207 = vmatpush1.msra.mxu0 0.0
    %1208 = vmatprep.subr.mxu0 0.0
    %1209 = vmatpush1.msra.mxu0 0.0
    %1210 = vmatprep.subr.mxu0 0.0
    %1211 = vmatpush1.msra.mxu0 0.0
    %1212 = vmatprep.subr.mxu0 0.0
    %1213 = vmatpush1.msra.mxu0 0.0
    %1214 = vmatprep.subr.mxu0 0.0
    %1215 = vmatpush1.msra.mxu0 0.0
    %1216 = vmatprep.subr.mxu0 0.0
    %1217 = vmatpush1.msra.mxu0 0.0
    %1218 = vmatprep.subr.mxu0 0.0
    %1219 = vmatpush1.msra.mxu0 0.0
    %1220 = vmatprep.subr.mxu0 0.0
    %1221 = vmatpush1.msra.mxu0 0.0
    %1222 = vmatprep.subr.mxu0 0.0
    %1223 = vmatpush1.msra.mxu0 0.0
    %1224 = vmatprep.subr.mxu0 0.0
    %1225 = vmatpush1.msra.mxu0 0.0
    %1226 = vmatprep.subr.mxu0 0.0
    %1227 = vmatpush1.msra.mxu0 0.0
    %1228 = vmatprep.subr.mxu0 0.0
    %1229 = vmatpush1.msra.mxu0 0.0
    %1230 = vmatprep.subr.mxu0 0.0
    %1231 = vmatpush1.msra.mxu0 0.0
    %1232 = vmatprep.subr.mxu0 0.0
    %1233 = vmatpush1.msra.mxu0 0.0
    %1234 = vmatprep.subr.mxu0 0.0
    %1235 = vmatpush1.msra.mxu0 0.0
    %1236 = vmatprep.subr.mxu0 0.0
    %1237 = vmatpush1.msra.mxu0 0.0
    %1238 = vmatprep.subr.mxu0 0.0
    %1239 = vmatpush1.msra.mxu0 0.0
    %1240 = vmatprep.subr.mxu0 0.0
    %1241 = vmatpush1.msra.mxu0 0.0
    %1242 = vmatprep.subr.mxu0 0.0
    %1243 = vmatpush1.msra.mxu0 0.0
    %1244 = vmatprep.subr.mxu0 0.0
    %1245 = vmatpush1.msra.mxu0 0.0
    %1246 = vmatprep.subr.mxu0 0.0
    %1247 = vmatpush1.msra.mxu0 0.0
    %1248 = vmatprep.subr.mxu0 0.0
    %1249 = vmatpush1.msra.mxu0 0.0
    %1250 = vmatprep.subr.mxu0 0.0
    %1251 = vmatpush1.msra.mxu0 0.0
    %1252 = vmatprep.subr.mxu0 0.0
    %1253 = vmatpush1.msra.mxu0 0.0
    %1254 = vmatprep.subr.mxu0 0.0
    %1255 = vmatpush1.msra.mxu0 0.0
    %1256 = vmatprep.subr.mxu0 0.0
    %1257 = vmatpush1.msra.mxu0 0.0
    %1258 = vmatprep.subr.mxu0 0.0
    %1259 = vmatpush1.msra.mxu0 0.0
    %1260 = vmatprep.subr.mxu0 0.0
    %1261 = vmatpush1.msra.mxu0 0.0
    %1262 = vmatprep.mubr.f32.mxu0 0.0
    %1263 = vmatmul.mubr.f32.gmra.mrb[0].mxu0 %v1193
    %v1264 = vpop.f32.mrb[0].mxu0
    %v1265 = vadd.f32 0.0, %v1264
    %v1266 = vpop.f32.mrb[0].mxu0
    %1267 = vmatprep.mubr.f32.mxu0 0.0
    %1268 = vmatmul.mubr.f32.gmra.mrb[0].mxu0 %v1196
    %v1269 = vpop.f32.mrb[0].mxu0
    %v1270 = vadd.f32 0.0, %v1269
    %v1271 = vpop.f32.mrb[0].mxu0
    %1272 = vdwg.mxu0
    %v1274 = vsel %vm218, %v1265, 0
    %v1277 = vsel %vm218, %v1270, 0
    %1279 = vmatprep.subr.mxu0 0.0
    %1280 = vmatpush1.msra.mxu0 %v211
    %1281 = vmatprep.subr.mxu0 0.0
    %1282 = vmatpush1.msra.mxu0 0.0
    %1283 = vmatprep.subr.mxu0 0.0
    %1284 = vmatpush1.msra.mxu0 0.0
    %1285 = vmatprep.subr.mxu0 0.0
    %1286 = vmatpush1.msra.mxu0 0.0
    %1287 = vmatprep.subr.mxu0 0.0
    %1288 = vmatpush1.msra.mxu0 0.0
    %1289 = vmatprep.subr.mxu0 0.0
    %1290 = vmatpush1.msra.mxu0 0.0
    %1291 = vmatprep.subr.mxu0 0.0
    %1292 = vmatpush1.msra.mxu0 0.0
    %1293 = vmatprep.subr.mxu0 0.0
    %1294 = vmatpush1.msra.mxu0 0.0
    %1295 = vmatprep.subr.mxu0 0.0
    %1296 = vmatpush1.msra.mxu0 0.0
    %1297 = vmatprep.subr.mxu0 0.0
    %1298 = vmatpush1.msra.mxu0 0.0
    %1299 = vmatprep.subr.mxu0 0.0
    %1300 = vmatpush1.msra.mxu0 0.0
    %1301 = vmatprep.subr.mxu0 0.0
    %1302 = vmatpush1.msra.mxu0 0.0
    %1303 = vmatprep.subr.mxu0 0.0
    %1304 = vmatpush1.msra.mxu0 0.0
    %1305 = vmatprep.subr.mxu0 0.0
    %1306 = vmatpush1.msra.mxu0 0.0
    %1307 = vmatprep.subr.mxu0 0.0
    %1308 = vmatpush1.msra.mxu0 0.0
    %1309 = vmatprep.subr.mxu0 0.0
    %1310 = vmatpush1.msra.mxu0 0.0
    %1311 = vmatprep.subr.mxu0 0.0
    %1312 = vmatpush1.msra.mxu0 0.0
    %1313 = vmatprep.subr.mxu0 0.0
    %1314 = vmatpush1.msra.mxu0 0.0
    %1315 = vmatprep.subr.mxu0 0.0
    %1316 = vmatpush1.msra.mxu0 0.0
    %1317 = vmatprep.subr.mxu0 0.0
    %1318 = vmatpush1.msra.mxu0 0.0
    %1319 = vmatprep.subr.mxu0 0.0
    %1320 = vmatpush1.msra.mxu0 0.0
    %1321 = vmatprep.subr.mxu0 0.0
    %1322 = vmatpush1.msra.mxu0 0.0
    %1323 = vmatprep.subr.mxu0 0.0
    %1324 = vmatpush1.msra.mxu0 0.0
    %1325 = vmatprep.subr.mxu0 0.0
    %1326 = vmatpush1.msra.mxu0 0.0
    %1327 = vmatprep.subr.mxu0 0.0
    %1328 = vmatpush1.msra.mxu0 0.0
    %1329 = vmatprep.subr.mxu0 0.0
    %1330 = vmatpush1.msra.mxu0 0.0
    %1331 = vmatprep.subr.mxu0 0.0
    %1332 = vmatpush1.msra.mxu0 0.0
    %1333 = vmatprep.subr.mxu0 0.0
    %1334 = vmatpush1.msra.mxu0 0.0
    %1335 = vmatprep.subr.mxu0 0.0
    %1336 = vmatpush1.msra.mxu0 0.0
    %1337 = vmatprep.subr.mxu0 0.0
    %1338 = vmatpush1.msra.mxu0 0.0
    %1339 = vmatprep.subr.mxu0 0.0
    %1340 = vmatpush1.msra.mxu0 0.0
    %1341 = vmatprep.subr.mxu0 0.0
    %1342 = vmatpush1.msra.mxu0 0.0
    %1343 = vmatprep.mubr.f32.mxu0 0.0
    %1344 = vmatmul.mubr.f32.gmra.mrb[0].mxu0 %v1274
    %v1345 = vpop.f32.mrb[0].mxu0
    %v1346 = vadd.f32 0.0, %v1345
    %v1347 = vpop.f32.mrb[0].mxu0
    %1348 = vmatprep.mubr.f32.mxu0 0.0
    %1349 = vmatmul.mubr.f32.gmra.mrb[0].mxu0 %v1277
    %v1350 = vpop.f32.mrb[0].mxu0
    %v1351 = vadd.f32 0.0, %v1350
    %v1352 = vpop.f32.mrb[0].mxu0
    %1353 = vdwg.mxu0
    %v1354 = vadd.f32 %v1067, %v1346
    %v1355 = vadd.f32 %v1068, %v1351
    %v1356 = vld [vmem:[%s7] sm:$0x1]
    %v1358 = vlaneseq
    %v1359 = vshrl.u32 %v1358, 7
    %v1360 = vsub.s32 0, %v1359
    %v1361 = vrot.slane %v1356, %v1360
    %v1363 = vadd.f32 %v1354, %v1361
    %v1364 = vadd.f32 %v1355, %v1361
    %v1365 = vadd.f32 %v1363, %v114
    %v1366 = vadd.f32 %v1364, %v115
    %v1367 = vld [vmem:[%s8] sm:$0x1]
    %v1368 = vld [vmem:[%s9] sm:$0x1]
    %v1369 = vsel %vm72, %v1365, 0.0
    %1370 = vadd.xlane.f32.xlu0 %v1369
    %v1371 = vpop.xlane.xlu0 %1370
    %v1372 = vsel %vm72, %v1366, 0.0
    %1373 = vadd.xlane.f32.xlu0 %v1372
    %v1374 = vpop.xlane.xlu0 %1373
    %v1375 = vmul.f32 %v1371, %v79
    %v1376 = vmul.f32 %v1374, %v79
    %v1377 = vsub.f32 %v1365, %v1375
    %v1378 = vsub.f32 %v1366, %v1376
    %v1379 = vmul.f32 %v1377, %v1377
    %v1380 = vmul.f32 %v1378, %v1378
    %v1381 = vsel %vm72, %v1379, 0.0
    %1382 = vadd.xlane.f32.xlu0 %v1381
    %v1383 = vpop.xlane.xlu0 %1382
    %v1384 = vsel %vm72, %v1380, 0.0
    %1385 = vadd.xlane.f32.xlu0 %v1384
    %v1386 = vpop.xlane.xlu0 %1385
    %v1387 = vmul.f32 %v1383, %v79
    %v1388 = vmul.f32 %v1386, %v79
    %v1389 = vadd.f32 %v1387, 1e-12
    %v1390 = vadd.f32 %v1388, 1e-12
    %v1391 = vrsqrt.pop %v1389
    %v1392 = vrsqrt.pop %v1390
    %v1393 = vmul.f32 %v1377, %v1391
    %v1394 = vmul.f32 %v1378, %v1392
    %v1396 = vlaneseq
    %v1397 = vshrl.u32 %v1396, 7
    %v1398 = vsub.s32 0, %v1397
    %v1399 = vrot.slane %v1367, %v1398
    %v1401 = vmul.f32 %v1393, %v1399
    %v1402 = vmul.f32 %v1394, %v1399
    %v1404 = vlaneseq
    %v1405 = vshrl.u32 %v1404, 7
    %v1406 = vsub.s32 0, %v1405
    %v1407 = vrot.slane %v1368, %v1406
    %v1409 = vadd.f32 %v1401, %v1407
    %v1410 = vadd.f32 %v1402, %v1407
    %v1411 = vld [vmem:[%s10] sm:$0xff]
    %v1412 = vld [vmem:[%s10 + $0x8] sm:$0xff]
    %v1413 = vld [vmem:[%s10 + $0x10] sm:$0xff]
    %v1414 = vld [vmem:[%s10 + $0x18] sm:$0xff]
    %v1415 = vld [vmem:[%s11] sm:$0x1]
    %v1417 = vlaneseq
    %v1418 = vshrl.u32 %v1417, 7
    %v1419 = vsub.s32 0, %v1418
    %v1420 = vrot.slane %v1415, %v1419
    %v1423 = vsel %vm72, %v1409, 0
    %v1426 = vsel %vm72, %v1410, 0
    %1428 = vmatprep.subr.mxu0 0.0
    %1429 = vmatpush1.msra.mxu0 %v1411
    %1430 = vmatprep.subr.mxu0 0.0
    %1431 = vmatpush1.msra.mxu0 %v1412
    %1432 = vmatprep.subr.mxu0 0.0
    %1433 = vmatpush1.msra.mxu0 %v1413
    %1434 = vmatprep.subr.mxu0 0.0
    %1435 = vmatpush1.msra.mxu0 %v1414
    %1436 = vmatprep.subr.mxu0 0.0
    %1437 = vmatpush1.msra.mxu0 0.0
    %1438 = vmatprep.subr.mxu0 0.0
    %1439 = vmatpush1.msra.mxu0 0.0
    %1440 = vmatprep.subr.mxu0 0.0
    %1441 = vmatpush1.msra.mxu0 0.0
    %1442 = vmatprep.subr.mxu0 0.0
    %1443 = vmatpush1.msra.mxu0 0.0
    %1444 = vmatprep.subr.mxu0 0.0
    %1445 = vmatpush1.msra.mxu0 0.0
    %1446 = vmatprep.subr.mxu0 0.0
    %1447 = vmatpush1.msra.mxu0 0.0
    %1448 = vmatprep.subr.mxu0 0.0
    %1449 = vmatpush1.msra.mxu0 0.0
    %1450 = vmatprep.subr.mxu0 0.0
    %1451 = vmatpush1.msra.mxu0 0.0
    %1452 = vmatprep.subr.mxu0 0.0
    %1453 = vmatpush1.msra.mxu0 0.0
    %1454 = vmatprep.subr.mxu0 0.0
    %1455 = vmatpush1.msra.mxu0 0.0
    %1456 = vmatprep.subr.mxu0 0.0
    %1457 = vmatpush1.msra.mxu0 0.0
    %1458 = vmatprep.subr.mxu0 0.0
    %1459 = vmatpush1.msra.mxu0 0.0
    %1460 = vmatprep.subr.mxu0 0.0
    %1461 = vmatpush1.msra.mxu0 0.0
    %1462 = vmatprep.subr.mxu0 0.0
    %1463 = vmatpush1.msra.mxu0 0.0
    %1464 = vmatprep.subr.mxu0 0.0
    %1465 = vmatpush1.msra.mxu0 0.0
    %1466 = vmatprep.subr.mxu0 0.0
    %1467 = vmatpush1.msra.mxu0 0.0
    %1468 = vmatprep.subr.mxu0 0.0
    %1469 = vmatpush1.msra.mxu0 0.0
    %1470 = vmatprep.subr.mxu0 0.0
    %1471 = vmatpush1.msra.mxu0 0.0
    %1472 = vmatprep.subr.mxu0 0.0
    %1473 = vmatpush1.msra.mxu0 0.0
    %1474 = vmatprep.subr.mxu0 0.0
    %1475 = vmatpush1.msra.mxu0 0.0
    %1476 = vmatprep.subr.mxu0 0.0
    %1477 = vmatpush1.msra.mxu0 0.0
    %1478 = vmatprep.subr.mxu0 0.0
    %1479 = vmatpush1.msra.mxu0 0.0
    %1480 = vmatprep.subr.mxu0 0.0
    %1481 = vmatpush1.msra.mxu0 0.0
    %1482 = vmatprep.subr.mxu0 0.0
    %1483 = vmatpush1.msra.mxu0 0.0
    %1484 = vmatprep.subr.mxu0 0.0
    %1485 = vmatpush1.msra.mxu0 0.0
    %1486 = vmatprep.subr.mxu0 0.0
    %1487 = vmatpush1.msra.mxu0 0.0
    %1488 = vmatprep.subr.mxu0 0.0
    %1489 = vmatpush1.msra.mxu0 0.0
    %1490 = vmatprep.subr.mxu0 0.0
    %1491 = vmatpush1.msra.mxu0 0.0
    %1492 = vmatprep.mubr.f32.mxu0 0.0
    %1493 = vmatmul.mubr.f32.gmra.mrb[0].mxu0 %v1423
    %v1494 = vpop.f32.mrb[0].mxu0
    %v1495 = vadd.f32 %v1420, %v1494
    %v1496 = vpop.f32.mrb[0].mxu0
    %1497 = vmatprep.mubr.f32.mxu0 0.0
    %1498 = vmatmul.mubr.f32.gmra.mrb[0].mxu0 %v1426
    %v1499 = vpop.f32.mrb[0].mxu0
    %v1500 = vadd.f32 %v1420, %v1499
    %v1501 = vpop.f32.mrb[0].mxu0
    %1502 = vdwg.mxu0
    %v1503 = vmul.f32 %v1495, %v1495
    %v1504 = vmul.f32 %v1500, %v1500
    %v1505 = vmul.f32 %v1495, %v1503
    %v1506 = vmul.f32 %v1500, %v1504
    %v1507 = vmul.f32 %v1505, 0.044715
    %v1508 = vmul.f32 %v1506, 0.044715
    %v1509 = vadd.f32 %v1495, %v1507
    %v1510 = vadd.f32 %v1500, %v1508
    %v1511 = vmul.f32 %v1509, 0.7978846
    %v1512 = vmul.f32 %v1510, 0.7978846
    %v1513 = vtanh.pop %v1511
    %v1514 = vtanh.pop %v1512
    %v1515 = vadd.f32 %v1513, 1.0
    %v1516 = vadd.f32 %v1514, 1.0
    %v1517 = vmul.f32 %v1515, 0.5
    %v1518 = vmul.f32 %v1516, 0.5
    %v1519 = vmul.f32 %v1495, %v1517
    %v1520 = vmul.f32 %v1500, %v1518
    %v1521 = vld [vmem:[%s12] sm:$0xff]
    %v1522 = vld [vmem:[%s12 + $0x8] sm:$0xff]
    %v1523 = vld [vmem:[%s12 + $0x10] sm:$0xff]
    %v1524 = vld [vmem:[%s12 + $0x18] sm:$0xff]
    %v1525 = vld [vmem:[%s12 + $0x20] sm:$0xff]
    %v1526 = vld [vmem:[%s12 + $0x28] sm:$0xff]
    %v1527 = vld [vmem:[%s12 + $0x30] sm:$0xff]
    %v1528 = vld [vmem:[%s12 + $0x38] sm:$0xff]
    %v1529 = vld [vmem:[%s13] sm:$0x1]
    %v1531 = vlaneseq
    %v1532 = vshrl.u32 %v1531, 7
    %v1533 = vsub.s32 0, %v1532
    %v1534 = vrot.slane %v1529, %v1533
    %vm1536 = vcmask 523264
    %v1538 = vsel %vm1536, %v1519, 0
    %v1541 = vsel %vm1536, %v1520, 0
    %1543 = vmatprep.subr.mxu0 0.0
    %1544 = vmatpush1.msra.mxu0 %v1521
    %1545 = vmatprep.subr.mxu0 0.0
    %1546 = vmatpush1.msra.mxu0 %v1522
    %1547 = vmatprep.subr.mxu0 0.0
    %1548 = vmatpush1.msra.mxu0 %v1523
    %1549 = vmatprep.subr.mxu0 0.0
    %1550 = vmatpush1.msra.mxu0 %v1524
    %1551 = vmatprep.subr.mxu0 0.0
    %1552 = vmatpush1.msra.mxu0 %v1525
    %1553 = vmatprep.subr.mxu0 0.0
    %1554 = vmatpush1.msra.mxu0 %v1526
    %1555 = vmatprep.subr.mxu0 0.0
    %1556 = vmatpush1.msra.mxu0 %v1527
    %1557 = vmatprep.subr.mxu0 0.0
    %1558 = vmatpush1.msra.mxu0 %v1528
    %1559 = vmatprep.subr.mxu0 0.0
    %1560 = vmatpush1.msra.mxu0 0.0
    %1561 = vmatprep.subr.mxu0 0.0
    %1562 = vmatpush1.msra.mxu0 0.0
    %1563 = vmatprep.subr.mxu0 0.0
    %1564 = vmatpush1.msra.mxu0 0.0
    %1565 = vmatprep.subr.mxu0 0.0
    %1566 = vmatpush1.msra.mxu0 0.0
    %1567 = vmatprep.subr.mxu0 0.0
    %1568 = vmatpush1.msra.mxu0 0.0
    %1569 = vmatprep.subr.mxu0 0.0
    %1570 = vmatpush1.msra.mxu0 0.0
    %1571 = vmatprep.subr.mxu0 0.0
    %1572 = vmatpush1.msra.mxu0 0.0
    %1573 = vmatprep.subr.mxu0 0.0
    %1574 = vmatpush1.msra.mxu0 0.0
    %1575 = vmatprep.subr.mxu0 0.0
    %1576 = vmatpush1.msra.mxu0 0.0
    %1577 = vmatprep.subr.mxu0 0.0
    %1578 = vmatpush1.msra.mxu0 0.0
    %1579 = vmatprep.subr.mxu0 0.0
    %1580 = vmatpush1.msra.mxu0 0.0
    %1581 = vmatprep.subr.mxu0 0.0
    %1582 = vmatpush1.msra.mxu0 0.0
    %1583 = vmatprep.subr.mxu0 0.0
    %1584 = vmatpush1.msra.mxu0 0.0
    %1585 = vmatprep.subr.mxu0 0.0
    %1586 = vmatpush1.msra.mxu0 0.0
    %1587 = vmatprep.subr.mxu0 0.0
    %1588 = vmatpush1.msra.mxu0 0.0
    %1589 = vmatprep.subr.mxu0 0.0
    %1590 = vmatpush1.msra.mxu0 0.0
    %1591 = vmatprep.subr.mxu0 0.0
    %1592 = vmatpush1.msra.mxu0 0.0
    %1593 = vmatprep.subr.mxu0 0.0
    %1594 = vmatpush1.msra.mxu0 0.0
    %1595 = vmatprep.subr.mxu0 0.0
    %1596 = vmatpush1.msra.mxu0 0.0
    %1597 = vmatprep.subr.mxu0 0.0
    %1598 = vmatpush1.msra.mxu0 0.0
    %1599 = vmatprep.subr.mxu0 0.0
    %1600 = vmatpush1.msra.mxu0 0.0
    %1601 = vmatprep.subr.mxu0 0.0
    %1602 = vmatpush1.msra.mxu0 0.0
    %1603 = vmatprep.subr.mxu0 0.0
    %1604 = vmatpush1.msra.mxu0 0.0
    %1605 = vmatprep.subr.mxu0 0.0
    %1606 = vmatpush1.msra.mxu0 0.0
    %1607 = vmatprep.mubr.f32.mxu0 0.0
    %1608 = vmatmul.mubr.f32.gmra.mrb[0].mxu0 %v1538
    %v1609 = vpop.f32.mrb[0].mxu0
    %v1610 = vadd.f32 %v1534, %v1609
    %v1611 = vpop.f32.mrb[0].mxu0
    %1612 = vmatprep.mubr.f32.mxu0 0.0
    %1613 = vmatmul.mubr.f32.gmra.mrb[0].mxu0 %v1541
    %v1614 = vpop.f32.mrb[0].mxu0
    %v1615 = vadd.f32 %v1534, %v1614
    %v1616 = vpop.f32.mrb[0].mxu0
    %1617 = vdwg.mxu0
    %v1618 = vadd.f32 %v1610, %v1409
    %v1619 = vadd.f32 %v1615, %v1410
    %v1620 = vld [vmem:[%s14] sm:$0x1]
    %v1621 = vld [vmem:[%s15] sm:$0x1]
    %v1622 = vsel %vm72, %v1618, 0.0
    %1623 = vadd.xlane.f32.xlu0 %v1622
    %v1624 = vpop.xlane.xlu0 %1623
    %v1625 = vsel %vm72, %v1619, 0.0
    %1626 = vadd.xlane.f32.xlu0 %v1625
    %v1627 = vpop.xlane.xlu0 %1626
    %v1628 = vmul.f32 %v1624, %v79
    %v1629 = vmul.f32 %v1627, %v79
    %v1630 = vsub.f32 %v1618, %v1628
    %v1631 = vsub.f32 %v1619, %v1629
    %v1632 = vmul.f32 %v1630, %v1630
    %v1633 = vmul.f32 %v1631, %v1631
    %v1634 = vsel %vm72, %v1632, 0.0
    %1635 = vadd.xlane.f32.xlu0 %v1634
    %v1636 = vpop.xlane.xlu0 %1635
    %v1637 = vsel %vm72, %v1633, 0.0
    %1638 = vadd.xlane.f32.xlu0 %v1637
    %v1639 = vpop.xlane.xlu0 %1638
    %v1640 = vmul.f32 %v1636, %v79
    %v1641 = vmul.f32 %v1639, %v79
    %v1642 = vadd.f32 %v1640, 1e-12
    %v1643 = vadd.f32 %v1641, 1e-12
    %v1644 = vrsqrt.pop %v1642
    %v1645 = vrsqrt.pop %v1643
    %v1646 = vmul.f32 %v1630, %v1644
    %v1647 = vmul.f32 %v1631, %v1645
    %v1649 = vlaneseq
    %v1650 = vshrl.u32 %v1649, 7
    %v1651 = vsub.s32 0, %v1650
    %v1652 = vrot.slane %v1620, %v1651
    %v1654 = vmul.f32 %v1646, %v1652
    %v1655 = vmul.f32 %v1647, %v1652
    %v1657 = vlaneseq
    %v1658 = vshrl.u32 %v1657, 7
    %v1659 = vsub.s32 0, %v1658
    %v1660 = vrot.slane %v1621, %v1659
    %v1662 = vadd.f32 %v1654, %v1660
    %v1663 = vadd.f32 %v1655, %v1660
    %s1664 = scalar_lea.vmem %s4, 32
    %v1665 = vld [vmem:[%s1664] sm:$0xff]
    %v1666 = vld [vmem:[%s1664 + $0x8] sm:$0xff]
    %v1667 = vld [vmem:[%s1664 + $0x10] sm:$0xff]
    %v1668 = vld [vmem:[%s1664 + $0x18] sm:$0xff]
    %s1669 = scalar_lea.vmem %s5, 1
    %v1670 = vld [vmem:[%s1669] sm:$0x1]
    %v1672 = vlaneseq
    %v1673 = vshrl.u32 %v1672, 7
    %v1674 = vsub.s32 0, %v1673
    %v1675 = vrot.slane %v1670, %v1674
    %v1678 = vsel %vm72, %v1662, 0
    %v1681 = vsel %vm72, %v1663, 0
    %1683 = vmatprep.subr.mxu0 0.0
    %1684 = vmatpush1.msra.mxu0 %v1665
    %1685 = vmatprep.subr.mxu0 0.0
    %1686 = vmatpush1.msra.mxu0 %v1666
    %1687 = vmatprep.subr.mxu0 0.0
    %1688 = vmatpush1.msra.mxu0 %v1667
    %1689 = vmatprep.subr.mxu0 0.0
    %1690 = vmatpush1.msra.mxu0 %v1668
    %1691 = vmatprep.subr.mxu0 0.0
    %1692 = vmatpush1.msra.mxu0 0.0
    %1693 = vmatprep.subr.mxu0 0.0
    %1694 = vmatpush1.msra.mxu0 0.0
    %1695 = vmatprep.subr.mxu0 0.0
    %1696 = vmatpush1.msra.mxu0 0.0
    %1697 = vmatprep.subr.mxu0 0.0
    %1698 = vmatpush1.msra.mxu0 0.0
    %1699 = vmatprep.subr.mxu0 0.0
    %1700 = vmatpush1.msra.mxu0 0.0
    %1701 = vmatprep.subr.mxu0 0.0
    %1702 = vmatpush1.msra.mxu0 0.0
    %1703 = vmatprep.subr.mxu0 0.0
    %1704 = vmatpush1.msra.mxu0 0.0
    %1705 = vmatprep.subr.mxu0 0.0
    %1706 = vmatpush1.msra.mxu0 0.0
    %1707 = vmatprep.subr.mxu0 0.0
    %1708 = vmatpush1.msra.mxu0 0.0
    %1709 = vmatprep.subr.mxu0 0.0
    %1710 = vmatpush1.msra.mxu0 0.0
    %1711 = vmatprep.subr.mxu0 0.0
    %1712 = vmatpush1.msra.mxu0 0.0
    %1713 = vmatprep.subr.mxu0 0.0
    %1714 = vmatpush1.msra.mxu0 0.0
    %1715 = vmatprep.subr.mxu0 0.0
    %1716 = vmatpush1.msra.mxu0 0.0
    %1717 = vmatprep.subr.mxu0 0.0
    %1718 = vmatpush1.msra.mxu0 0.0
    %1719 = vmatprep.subr.mxu0 0.0
    %1720 = vmatpush1.msra.mxu0 0.0
    %1721 = vmatprep.subr.mxu0 0.0
    %1722 = vmatpush1.msra.mxu0 0.0
    %1723 = vmatprep.subr.mxu0 0.0
    %1724 = vmatpush1.msra.mxu0 0.0
    %1725 = vmatprep.subr.mxu0 0.0
    %1726 = vmatpush1.msra.mxu0 0.0
    %1727 = vmatprep.subr.mxu0 0.0
    %1728 = vmatpush1.msra.mxu0 0.0
    %1729 = vmatprep.subr.mxu0 0.0
    %1730 = vmatpush1.msra.mxu0 0.0
    %1731 = vmatprep.subr.mxu0 0.0
    %1732 = vmatpush1.msra.mxu0 0.0
    %1733 = vmatprep.subr.mxu0 0.0
    %1734 = vmatpush1.msra.mxu0 0.0
    %1735 = vmatprep.subr.mxu0 0.0
    %1736 = vmatpush1.msra.mxu0 0.0
    %1737 = vmatprep.subr.mxu0 0.0
    %1738 = vmatpush1.msra.mxu0 0.0
    %1739 = vmatprep.subr.mxu0 0.0
    %1740 = vmatpush1.msra.mxu0 0.0
    %1741 = vmatprep.subr.mxu0 0.0
    %1742 = vmatpush1.msra.mxu0 0.0
    %1743 = vmatprep.subr.mxu0 0.0
    %1744 = vmatpush1.msra.mxu0 0.0
    %1745 = vmatprep.subr.mxu0 0.0
    %1746 = vmatpush1.msra.mxu0 0.0
    %1747 = vmatprep.mubr.f32.mxu0 0.0
    %1748 = vmatmul.mubr.f32.gmra.mrb[0].mxu0 %v1678
    %v1749 = vpop.f32.mrb[0].mxu0
    %v1750 = vadd.f32 %v1675, %v1749
    %v1751 = vpop.f32.mrb[0].mxu0
    %1752 = vmatprep.mubr.f32.mxu0 0.0
    %1753 = vmatmul.mubr.f32.gmra.mrb[0].mxu0 %v1681
    %v1754 = vpop.f32.mrb[0].mxu0
    %v1755 = vadd.f32 %v1675, %v1754
    %v1756 = vpop.f32.mrb[0].mxu0
    %1757 = vdwg.mxu0
    %s1758 = scalar_lea.vmem %s6, 32
    %v1759 = vld [vmem:[%s1758] sm:$0xff]
    %v1760 = vld [vmem:[%s1758 + $0x8] sm:$0xff]
    %v1761 = vld [vmem:[%s1758 + $0x10] sm:$0xff]
    %v1762 = vld [vmem:[%s1758 + $0x18] sm:$0xff]
    %1765 = vrot.lane.b32.xlu0 %v1750, 96
    %v1766 = vpop.permute.xlu0 %1765
    %1767 = vrot.lane.b32.xlu0 %v1755, 96
    %v1768 = vpop.permute.xlu0 %1767
    %v1769 = vsel %vm218, %v1750, 0
    %v1771 = vsel %vm218, %v1755, 0
    %v1773 = vsel %vm218, %v1766, 0
    %v1775 = vsel %vm218, %v1768, 0
    %1777 = vmatprep.subr.mxu0 0.0
    %1778 = vmatpush1.xpose.msra.mxu0 %v1773
    %1779 = vmatprep.subr.mxu0 0.0
    %1780 = vmatpush1.xpose.msra.mxu0 %v1775
    %1781 = vmatprep.subr.mxu0 0.0
    %1782 = vmatpush1.xpose.msra.mxu0 0.0
    %1783 = vmatprep.subr.mxu0 0.0
    %1784 = vmatpush1.xpose.msra.mxu0 0.0
    %1785 = vmatprep.subr.mxu0 0.0
    %1786 = vmatpush1.xpose.msra.mxu0 0.0
    %1787 = vmatprep.subr.mxu0 0.0
    %1788 = vmatpush1.xpose.msra.mxu0 0.0
    %1789 = vmatprep.subr.mxu0 0.0
    %1790 = vmatpush1.xpose.msra.mxu0 0.0
    %1791 = vmatprep.subr.mxu0 0.0
    %1792 = vmatpush1.xpose.msra.mxu0 0.0
    %1793 = vmatprep.subr.mxu0 0.0
    %1794 = vmatpush1.xpose.msra.mxu0 0.0
    %1795 = vmatprep.subr.mxu0 0.0
    %1796 = vmatpush1.xpose.msra.mxu0 0.0
    %1797 = vmatprep.subr.mxu0 0.0
    %1798 = vmatpush1.xpose.msra.mxu0 0.0
    %1799 = vmatprep.subr.mxu0 0.0
    %1800 = vmatpush1.xpose.msra.mxu0 0.0
    %1801 = vmatprep.subr.mxu0 0.0
    %1802 = vmatpush1.xpose.msra.mxu0 0.0
    %1803 = vmatprep.subr.mxu0 0.0
    %1804 = vmatpush1.xpose.msra.mxu0 0.0
    %1805 = vmatprep.subr.mxu0 0.0
    %1806 = vmatpush1.xpose.msra.mxu0 0.0
    %1807 = vmatprep.subr.mxu0 0.0
    %1808 = vmatpush1.xpose.msra.mxu0 0.0
    %1809 = vmatprep.subr.mxu0 0.0
    %1810 = vmatpush1.xpose.msra.mxu0 0.0
    %1811 = vmatprep.subr.mxu0 0.0
    %1812 = vmatpush1.xpose.msra.mxu0 0.0
    %1813 = vmatprep.subr.mxu0 0.0
    %1814 = vmatpush1.xpose.msra.mxu0 0.0
    %1815 = vmatprep.subr.mxu0 0.0
    %1816 = vmatpush1.xpose.msra.mxu0 0.0
    %1817 = vmatprep.subr.mxu0 0.0
    %1818 = vmatpush1.xpose.msra.mxu0 0.0
    %1819 = vmatprep.subr.mxu0 0.0
    %1820 = vmatpush1.xpose.msra.mxu0 0.0
    %1821 = vmatprep.subr.mxu0 0.0
    %1822 = vmatpush1.xpose.msra.mxu0 0.0
    %1823 = vmatprep.subr.mxu0 0.0
    %1824 = vmatpush1.xpose.msra.mxu0 0.0
    %1825 = vmatprep.subr.mxu0 0.0
    %1826 = vmatpush1.xpose.msra.mxu0 0.0
    %1827 = vmatprep.subr.mxu0 0.0
    %1828 = vmatpush1.xpose.msra.mxu0 0.0
    %1829 = vmatprep.subr.mxu0 0.0
    %1830 = vmatpush1.xpose.msra.mxu0 0.0
    %1831 = vmatprep.subr.mxu0 0.0
    %1832 = vmatpush1.xpose.msra.mxu0 0.0
    %1833 = vmatprep.subr.mxu0 0.0
    %1834 = vmatpush1.xpose.msra.mxu0 0.0
    %1835 = vmatprep.subr.mxu0 0.0
    %1836 = vmatpush1.xpose.msra.mxu0 0.0
    %1837 = vmatprep.subr.mxu0 0.0
    %1838 = vmatpush1.xpose.msra.mxu0 0.0
    %1839 = vmatprep.subr.mxu0 0.0
    %1840 = vmatpush1.xpose.msra.mxu0 0.0
    %1841 = vmatprep.mubr.f32.mxu0 0.0
    %1842 = vmatmul.mubr.f32.gmra.mrb[0].mxu0 %v1769
    %v1843 = vpop.f32.mrb[0].mxu0
    %v1844 = vadd.f32 0.0, %v1843
    %v1845 = vpop.f32.mrb[0].mxu0
    %1846 = vmatprep.mubr.f32.mxu0 0.0
    %1847 = vmatmul.mubr.f32.gmra.mrb[0].mxu0 %v1771
    %v1848 = vpop.f32.mrb[0].mxu0
    %v1849 = vadd.f32 0.0, %v1848
    %v1850 = vpop.f32.mrb[0].mxu0
    %1851 = vdwg.mxu0
    %v1852 = vmul.f32 %v1844, 0.35355338
    %v1853 = vmul.f32 %v1849, 0.35355338
    %v1854 = vadd.f32 %v1852, %v66
    %v1855 = vadd.f32 %v1853, %v67
    %v1856 = vsel %vm306, %v1854, -inf
    %1857 = vmax.xlane.f32.xlu0 %v1856
    %v1858 = vpop.xlane.xlu0 %1857
    %v1859 = vsel %vm306, %v1855, -inf
    %1860 = vmax.xlane.f32.xlu0 %v1859
    %v1861 = vpop.xlane.xlu0 %1860
    %v1862 = vsub.f32 %v1854, %v1858
    %v1863 = vsub.f32 %v1855, %v1861
    %v1864 = vmul.f32 %v1862, 1.442695
    %v1865 = vpow.pop %v1864
    %v1866 = vmul.f32 %v1863, 1.442695
    %v1867 = vpow.pop %v1866
    %v1868 = vsel %vm306, %v1865, 0.0
    %1869 = vadd.xlane.f32.xlu0 %v1868
    %v1870 = vpop.xlane.xlu0 %1869
    %v1871 = vsel %vm306, %v1867, 0.0
    %1872 = vadd.xlane.f32.xlu0 %v1871
    %v1873 = vpop.xlane.xlu0 %1872
    %v1874 = vrcp.pop %v1870
    %v1875 = vmul.f32 %v1865, %v1874
    %v1876 = vrcp.pop %v1873
    %v1877 = vmul.f32 %v1867, %v1876
    %1878 = vrot.lane.b32.xlu0 %v1750, 64
    %v1879 = vpop.permute.xlu0 %1878
    %1880 = vrot.lane.b32.xlu0 %v1755, 64
    %v1881 = vpop.permute.xlu0 %1880
    %v1885 = vsel %vm306, %v1875, 0
    %v1888 = vsel %vm306, %v1877, 0
    %1890 = vmatprep.subr.mxu0 0.0
    %1891 = vmatpush1.msra.mxu0 %v1879
    %1892 = vmatprep.subr.mxu0 0.0
    %1893 = vmatpush1.msra.mxu0 %v1881
    %1894 = vmatprep.subr.mxu0 0.0
    %1895 = vmatpush1.msra.mxu0 0.0
    %1896 = vmatprep.subr.mxu0 0.0
    %1897 = vmatpush1.msra.mxu0 0.0
    %1898 = vmatprep.subr.mxu0 0.0
    %1899 = vmatpush1.msra.mxu0 0.0
    %1900 = vmatprep.subr.mxu0 0.0
    %1901 = vmatpush1.msra.mxu0 0.0
    %1902 = vmatprep.subr.mxu0 0.0
    %1903 = vmatpush1.msra.mxu0 0.0
    %1904 = vmatprep.subr.mxu0 0.0
    %1905 = vmatpush1.msra.mxu0 0.0
    %1906 = vmatprep.subr.mxu0 0.0
    %1907 = vmatpush1.msra.mxu0 0.0
    %1908 = vmatprep.subr.mxu0 0.0
    %1909 = vmatpush1.msra.mxu0 0.0
    %1910 = vmatprep.subr.mxu0 0.0
    %1911 = vmatpush1.msra.mxu0 0.0
    %1912 = vmatprep.subr.mxu0 0.0
    %1913 = vmatpush1.msra.mxu0 0.0
    %1914 = vmatprep.subr.mxu0 0.0
    %1915 = vmatpush1.msra.mxu0 0.0
    %1916 = vmatprep.subr.mxu0 0.0
    %1917 = vmatpush1.msra.mxu0 0.0
    %1918 = vmatprep.subr.mxu0 0.0
    %1919 = vmatpush1.msra.mxu0 0.0
    %1920 = vmatprep.subr.mxu0 0.0
    %1921 = vmatpush1.msra.mxu0 0.0
    %1922 = vmatprep.subr.mxu0 0.0
    %1923 = vmatpush1.msra.mxu0 0.0
    %1924 = vmatprep.subr.mxu0 0.0
    %1925 = vmatpush1.msra.mxu0 0.0
    %1926 = vmatprep.subr.mxu0 0.0
    %1927 = vmatpush1.msra.mxu0 0.0
    %1928 = vmatprep.subr.mxu0 0.0
    %1929 = vmatpush1.msra.mxu0 0.0
    %1930 = vmatprep.subr.mxu0 0.0
    %1931 = vmatpush1.msra.mxu0 0.0
    %1932 = vmatprep.subr.mxu0 0.0
    %1933 = vmatpush1.msra.mxu0 0.0
    %1934 = vmatprep.subr.mxu0 0.0
    %1935 = vmatpush1.msra.mxu0 0.0
    %1936 = vmatprep.subr.mxu0 0.0
    %1937 = vmatpush1.msra.mxu0 0.0
    %1938 = vmatprep.subr.mxu0 0.0
    %1939 = vmatpush1.msra.mxu0 0.0
    %1940 = vmatprep.subr.mxu0 0.0
    %1941 = vmatpush1.msra.mxu0 0.0
    %1942 = vmatprep.subr.mxu0 0.0
    %1943 = vmatpush1.msra.mxu0 0.0
    %1944 = vmatprep.subr.mxu0 0.0
    %1945 = vmatpush1.msra.mxu0 0.0
    %1946 = vmatprep.subr.mxu0 0.0
    %1947 = vmatpush1.msra.mxu0 0.0
    %1948 = vmatprep.subr.mxu0 0.0
    %1949 = vmatpush1.msra.mxu0 0.0
    %1950 = vmatprep.subr.mxu0 0.0
    %1951 = vmatpush1.msra.mxu0 0.0
    %1952 = vmatprep.subr.mxu0 0.0
    %1953 = vmatpush1.msra.mxu0 0.0
    %1954 = vmatprep.mubr.f32.mxu0 0.0
    %1955 = vmatmul.mubr.f32.gmra.mrb[0].mxu0 %v1885
    %v1956 = vpop.f32.mrb[0].mxu0
    %v1957 = vadd.f32 0.0, %v1956
    %v1958 = vpop.f32.mrb[0].mxu0
    %1959 = vmatprep.mubr.f32.mxu0 0.0
    %1960 = vmatmul.mubr.f32.gmra.mrb[0].mxu0 %v1888
    %v1961 = vpop.f32.mrb[0].mxu0
    %v1962 = vadd.f32 0.0, %v1961
    %v1963 = vpop.f32.mrb[0].mxu0
    %1964 = vdwg.mxu0
    %1965 = vrot.lane.b32.xlu0 %v1750, 120
    %v1966 = vpop.permute.xlu0 %1965
    %1967 = vrot.lane.b32.xlu0 %v1755, 120
    %v1968 = vpop.permute.xlu0 %1967
    %1969 = vrot.lane.b32.xlu0 %v1750, 88
    %v1970 = vpop.permute.xlu0 %1969
    %1971 = vrot.lane.b32.xlu0 %v1755, 88
    %v1972 = vpop.permute.xlu0 %1971
    %v1973 = vsel %vm218, %v1966, 0
    %v1975 = vsel %vm218, %v1968, 0
    %v1977 = vsel %vm218, %v1970, 0
    %v1979 = vsel %vm218, %v1972, 0
    %1981 = vmatprep.subr.mxu0 0.0
    %1982 = vmatpush1.xpose.msra.mxu0 %v1977
    %1983 = vmatprep.subr.mxu0 0.0
    %1984 = vmatpush1.xpose.msra.mxu0 %v1979
    %1985 = vmatprep.subr.mxu0 0.0
    %1986 = vmatpush1.xpose.msra.mxu0 0.0
    %1987 = vmatprep.subr.mxu0 0.0
    %1988 = vmatpush1.xpose.msra.mxu0 0.0
    %1989 = vmatprep.subr.mxu0 0.0
    %1990 = vmatpush1.xpose.msra.mxu0 0.0
    %1991 = vmatprep.subr.mxu0 0.0
    %1992 = vmatpush1.xpose.msra.mxu0 0.0
    %1993 = vmatprep.subr.mxu0 0.0
    %1994 = vmatpush1.xpose.msra.mxu0 0.0
    %1995 = vmatprep.subr.mxu0 0.0
    %1996 = vmatpush1.xpose.msra.mxu0 0.0
    %1997 = vmatprep.subr.mxu0 0.0
    %1998 = vmatpush1.xpose.msra.mxu0 0.0
    %1999 = vmatprep.subr.mxu0 0.0
    %2000 = vmatpush1.xpose.msra.mxu0 0.0
    %2001 = vmatprep.subr.mxu0 0.0
    %2002 = vmatpush1.xpose.msra.mxu0 0.0
    %2003 = vmatprep.subr.mxu0 0.0
    %2004 = vmatpush1.xpose.msra.mxu0 0.0
    %2005 = vmatprep.subr.mxu0 0.0
    %2006 = vmatpush1.xpose.msra.mxu0 0.0
    %2007 = vmatprep.subr.mxu0 0.0
    %2008 = vmatpush1.xpose.msra.mxu0 0.0
    %2009 = vmatprep.subr.mxu0 0.0
    %2010 = vmatpush1.xpose.msra.mxu0 0.0
    %2011 = vmatprep.subr.mxu0 0.0
    %2012 = vmatpush1.xpose.msra.mxu0 0.0
    %2013 = vmatprep.subr.mxu0 0.0
    %2014 = vmatpush1.xpose.msra.mxu0 0.0
    %2015 = vmatprep.subr.mxu0 0.0
    %2016 = vmatpush1.xpose.msra.mxu0 0.0
    %2017 = vmatprep.subr.mxu0 0.0
    %2018 = vmatpush1.xpose.msra.mxu0 0.0
    %2019 = vmatprep.subr.mxu0 0.0
    %2020 = vmatpush1.xpose.msra.mxu0 0.0
    %2021 = vmatprep.subr.mxu0 0.0
    %2022 = vmatpush1.xpose.msra.mxu0 0.0
    %2023 = vmatprep.subr.mxu0 0.0
    %2024 = vmatpush1.xpose.msra.mxu0 0.0
    %2025 = vmatprep.subr.mxu0 0.0
    %2026 = vmatpush1.xpose.msra.mxu0 0.0
    %2027 = vmatprep.subr.mxu0 0.0
    %2028 = vmatpush1.xpose.msra.mxu0 0.0
    %2029 = vmatprep.subr.mxu0 0.0
    %2030 = vmatpush1.xpose.msra.mxu0 0.0
    %2031 = vmatprep.subr.mxu0 0.0
    %2032 = vmatpush1.xpose.msra.mxu0 0.0
    %2033 = vmatprep.subr.mxu0 0.0
    %2034 = vmatpush1.xpose.msra.mxu0 0.0
    %2035 = vmatprep.subr.mxu0 0.0
    %2036 = vmatpush1.xpose.msra.mxu0 0.0
    %2037 = vmatprep.subr.mxu0 0.0
    %2038 = vmatpush1.xpose.msra.mxu0 0.0
    %2039 = vmatprep.subr.mxu0 0.0
    %2040 = vmatpush1.xpose.msra.mxu0 0.0
    %2041 = vmatprep.subr.mxu0 0.0
    %2042 = vmatpush1.xpose.msra.mxu0 0.0
    %2043 = vmatprep.subr.mxu0 0.0
    %2044 = vmatpush1.xpose.msra.mxu0 0.0
    %2045 = vmatprep.mubr.f32.mxu0 0.0
    %2046 = vmatmul.mubr.f32.gmra.mrb[0].mxu0 %v1973
    %v2047 = vpop.f32.mrb[0].mxu0
    %v2048 = vadd.f32 0.0, %v2047
    %v2049 = vpop.f32.mrb[0].mxu0
    %2050 = vmatprep.mubr.f32.mxu0 0.0
    %2051 = vmatmul.mubr.f32.gmra.mrb[0].mxu0 %v1975
    %v2052 = vpop.f32.mrb[0].mxu0
    %v2053 = vadd.f32 0.0, %v2052
    %v2054 = vpop.f32.mrb[0].mxu0
    %2055 = vdwg.mxu0
    %v2056 = vmul.f32 %v2048, 0.35355338
    %v2057 = vmul.f32 %v2053, 0.35355338
    %v2058 = vadd.f32 %v2056, %v66
    %v2059 = vadd.f32 %v2057, %v67
    %v2060 = vsel %vm306, %v2058, -inf
    %2061 = vmax.xlane.f32.xlu0 %v2060
    %v2062 = vpop.xlane.xlu0 %2061
    %v2063 = vsel %vm306, %v2059, -inf
    %2064 = vmax.xlane.f32.xlu0 %v2063
    %v2065 = vpop.xlane.xlu0 %2064
    %v2066 = vsub.f32 %v2058, %v2062
    %v2067 = vsub.f32 %v2059, %v2065
    %v2068 = vmul.f32 %v2066, 1.442695
    %v2069 = vpow.pop %v2068
    %v2070 = vmul.f32 %v2067, 1.442695
    %v2071 = vpow.pop %v2070
    %v2072 = vsel %vm306, %v2069, 0.0
    %2073 = vadd.xlane.f32.xlu0 %v2072
    %v2074 = vpop.xlane.xlu0 %2073
    %v2075 = vsel %vm306, %v2071, 0.0
    %2076 = vadd.xlane.f32.xlu0 %v2075
    %v2077 = vpop.xlane.xlu0 %2076
    %v2078 = vrcp.pop %v2074
    %v2079 = vmul.f32 %v2069, %v2078
    %v2080 = vrcp.pop %v2077
    %v2081 = vmul.f32 %v2071, %v2080
    %2082 = vrot.lane.b32.xlu0 %v1750, 56
    %v2083 = vpop.permute.xlu0 %2082
    %2084 = vrot.lane.b32.xlu0 %v1755, 56
    %v2085 = vpop.permute.xlu0 %2084
    %v2089 = vsel %vm306, %v2079, 0
    %v2092 = vsel %vm306, %v2081, 0
    %2094 = vmatprep.subr.mxu0 0.0
    %2095 = vmatpush1.msra.mxu0 %v2083
    %2096 = vmatprep.subr.mxu0 0.0
    %2097 = vmatpush1.msra.mxu0 %v2085
    %2098 = vmatprep.subr.mxu0 0.0
    %2099 = vmatpush1.msra.mxu0 0.0
    %2100 = vmatprep.subr.mxu0 0.0
    %2101 = vmatpush1.msra.mxu0 0.0
    %2102 = vmatprep.subr.mxu0 0.0
    %2103 = vmatpush1.msra.mxu0 0.0
    %2104 = vmatprep.subr.mxu0 0.0
    %2105 = vmatpush1.msra.mxu0 0.0
    %2106 = vmatprep.subr.mxu0 0.0
    %2107 = vmatpush1.msra.mxu0 0.0
    %2108 = vmatprep.subr.mxu0 0.0
    %2109 = vmatpush1.msra.mxu0 0.0
    %2110 = vmatprep.subr.mxu0 0.0
    %2111 = vmatpush1.msra.mxu0 0.0
    %2112 = vmatprep.subr.mxu0 0.0
    %2113 = vmatpush1.msra.mxu0 0.0
    %2114 = vmatprep.subr.mxu0 0.0
    %2115 = vmatpush1.msra.mxu0 0.0
    %2116 = vmatprep.subr.mxu0 0.0
    %2117 = vmatpush1.msra.mxu0 0.0
    %2118 = vmatprep.subr.mxu0 0.0
    %2119 = vmatpush1.msra.mxu0 0.0
    %2120 = vmatprep.subr.mxu0 0.0
    %2121 = vmatpush1.msra.mxu0 0.0
    %2122 = vmatprep.subr.mxu0 0.0
    %2123 = vmatpush1.msra.mxu0 0.0
    %2124 = vmatprep.subr.mxu0 0.0
    %2125 = vmatpush1.msra.mxu0 0.0
    %2126 = vmatprep.subr.mxu0 0.0
    %2127 = vmatpush1.msra.mxu0 0.0
    %2128 = vmatprep.subr.mxu0 0.0
    %2129 = vmatpush1.msra.mxu0 0.0
    %2130 = vmatprep.subr.mxu0 0.0
    %2131 = vmatpush1.msra.mxu0 0.0
    %2132 = vmatprep.subr.mxu0 0.0
    %2133 = vmatpush1.msra.mxu0 0.0
    %2134 = vmatprep.subr.mxu0 0.0
    %2135 = vmatpush1.msra.mxu0 0.0
    %2136 = vmatprep.subr.mxu0 0.0
    %2137 = vmatpush1.msra.mxu0 0.0
    %2138 = vmatprep.subr.mxu0 0.0
    %2139 = vmatpush1.msra.mxu0 0.0
    %2140 = vmatprep.subr.mxu0 0.0
    %2141 = vmatpush1.msra.mxu0 0.0
    %2142 = vmatprep.subr.mxu0 0.0
    %2143 = vmatpush1.msra.mxu0 0.0
    %2144 = vmatprep.subr.mxu0 0.0
    %2145 = vmatpush1.msra.mxu0 0.0
    %2146 = vmatprep.subr.mxu0 0.0
    %2147 = vmatpush1.msra.mxu0 0.0
    %2148 = vmatprep.subr.mxu0 0.0
    %2149 = vmatpush1.msra.mxu0 0.0
    %2150 = vmatprep.subr.mxu0 0.0
    %2151 = vmatpush1.msra.mxu0 0.0
    %2152 = vmatprep.subr.mxu0 0.0
    %2153 = vmatpush1.msra.mxu0 0.0
    %2154 = vmatprep.subr.mxu0 0.0
    %2155 = vmatpush1.msra.mxu0 0.0
    %2156 = vmatprep.subr.mxu0 0.0
    %2157 = vmatpush1.msra.mxu0 0.0
    %2158 = vmatprep.mubr.f32.mxu0 0.0
    %2159 = vmatmul.mubr.f32.gmra.mrb[0].mxu0 %v2089
    %v2160 = vpop.f32.mrb[0].mxu0
    %v2161 = vadd.f32 0.0, %v2160
    %v2162 = vpop.f32.mrb[0].mxu0
    %2163 = vmatprep.mubr.f32.mxu0 0.0
    %2164 = vmatmul.mubr.f32.gmra.mrb[0].mxu0 %v2092
    %v2165 = vpop.f32.mrb[0].mxu0
    %v2166 = vadd.f32 0.0, %v2165
    %v2167 = vpop.f32.mrb[0].mxu0
    %2168 = vdwg.mxu0
    %v2170 = vsel %vm218, %v2161, 0
    %v2173 = vsel %vm218, %v2166, 0
    %2175 = vmatprep.subr.mxu0 0.0
    %2176 = vmatpush1.msra.mxu0 %v1760
    %2177 = vmatprep.subr.mxu0 0.0
    %2178 = vmatpush1.msra.mxu0 0.0
    %2179 = vmatprep.subr.mxu0 0.0
    %2180 = vmatpush1.msra.mxu0 0.0
    %2181 = vmatprep.subr.mxu0 0.0
    %2182 = vmatpush1.msra.mxu0 0.0
    %2183 = vmatprep.subr.mxu0 0.0
    %2184 = vmatpush1.msra.mxu0 0.0
    %2185 = vmatprep.subr.mxu0 0.0
    %2186 = vmatpush1.msra.mxu0 0.0
    %2187 = vmatprep.subr.mxu0 0.0
    %2188 = vmatpush1.msra.mxu0 0.0
    %2189 = vmatprep.subr.mxu0 0.0
    %2190 = vmatpush1.msra.mxu0 0.0
    %2191 = vmatprep.subr.mxu0 0.0
    %2192 = vmatpush1.msra.mxu0 0.0
    %2193 = vmatprep.subr.mxu0 0.0
    %2194 = vmatpush1.msra.mxu0 0.0
    %2195 = vmatprep.subr.mxu0 0.0
    %2196 = vmatpush1.msra.mxu0 0.0
    %2197 = vmatprep.subr.mxu0 0.0
    %2198 = vmatpush1.msra.mxu0 0.0
    %2199 = vmatprep.subr.mxu0 0.0
    %2200 = vmatpush1.msra.mxu0 0.0
    %2201 = vmatprep.subr.mxu0 0.0
    %2202 = vmatpush1.msra.mxu0 0.0
    %2203 = vmatprep.subr.mxu0 0.0
    %2204 = vmatpush1.msra.mxu0 0.0
    %2205 = vmatprep.subr.mxu0 0.0
    %2206 = vmatpush1.msra.mxu0 0.0
    %2207 = vmatprep.subr.mxu0 0.0
    %2208 = vmatpush1.msra.mxu0 0.0
    %2209 = vmatprep.subr.mxu0 0.0
    %2210 = vmatpush1.msra.mxu0 0.0
    %2211 = vmatprep.subr.mxu0 0.0
    %2212 = vmatpush1.msra.mxu0 0.0
    %2213 = vmatprep.subr.mxu0 0.0
    %2214 = vmatpush1.msra.mxu0 0.0
    %2215 = vmatprep.subr.mxu0 0.0
    %2216 = vmatpush1.msra.mxu0 0.0
    %2217 = vmatprep.subr.mxu0 0.0
    %2218 = vmatpush1.msra.mxu0 0.0
    %2219 = vmatprep.subr.mxu0 0.0
    %2220 = vmatpush1.msra.mxu0 0.0
    %2221 = vmatprep.subr.mxu0 0.0
    %2222 = vmatpush1.msra.mxu0 0.0
    %2223 = vmatprep.subr.mxu0 0.0
    %2224 = vmatpush1.msra.mxu0 0.0
    %2225 = vmatprep.subr.mxu0 0.0
    %2226 = vmatpush1.msra.mxu0 0.0
    %2227 = vmatprep.subr.mxu0 0.0
    %2228 = vmatpush1.msra.mxu0 0.0
    %2229 = vmatprep.subr.mxu0 0.0
    %2230 = vmatpush1.msra.mxu0 0.0
    %2231 = vmatprep.subr.mxu0 0.0
    %2232 = vmatpush1.msra.mxu0 0.0
    %2233 = vmatprep.subr.mxu0 0.0
    %2234 = vmatpush1.msra.mxu0 0.0
    %2235 = vmatprep.subr.mxu0 0.0
    %2236 = vmatpush1.msra.mxu0 0.0
    %2237 = vmatprep.subr.mxu0 0.0
    %2238 = vmatpush1.msra.mxu0 0.0
    %2239 = vmatprep.mubr.f32.mxu0 0.0
    %2240 = vmatmul.mubr.f32.gmra.mrb[0].mxu0 %v2170
    %v2241 = vpop.f32.mrb[0].mxu0
    %v2242 = vadd.f32 0.0, %v2241
    %v2243 = vpop.f32.mrb[0].mxu0
    %2244 = vmatprep.mubr.f32.mxu0 0.0
    %2245 = vmatmul.mubr.f32.gmra.mrb[0].mxu0 %v2173
    %v2246 = vpop.f32.mrb[0].mxu0
    %v2247 = vadd.f32 0.0, %v2246
    %v2248 = vpop.f32.mrb[0].mxu0
    %2249 = vdwg.mxu0
    %v2251 = vsel %vm218, %v1957, 0
    %v2254 = vsel %vm218, %v1962, 0
    %2256 = vmatprep.subr.mxu0 0.0
    %2257 = vmatpush1.msra.mxu0 %v1759
    %2258 = vmatprep.subr.mxu0 0.0
    %2259 = vmatpush1.msra.mxu0 0.0
    %2260 = vmatprep.subr.mxu0 0.0
    %2261 = vmatpush1.msra.mxu0 0.0
    %2262 = vmatprep.subr.mxu0 0.0
    %2263 = vmatpush1.msra.mxu0 0.0
    %2264 = vmatprep.subr.mxu0 0.0
    %2265 = vmatpush1.msra.mxu0 0.0
    %2266 = vmatprep.subr.mxu0 0.0
    %2267 = vmatpush1.msra.mxu0 0.0
    %2268 = vmatprep.subr.mxu0 0.0
    %2269 = vmatpush1.msra.mxu0 0.0
    %2270 = vmatprep.subr.mxu0 0.0
    %2271 = vmatpush1.msra.mxu0 0.0
    %2272 = vmatprep.subr.mxu0 0.0
    %2273 = vmatpush1.msra.mxu0 0.0
    %2274 = vmatprep.subr.mxu0 0.0
    %2275 = vmatpush1.msra.mxu0 0.0
    %2276 = vmatprep.subr.mxu0 0.0
    %2277 = vmatpush1.msra.mxu0 0.0
    %2278 = vmatprep.subr.mxu0 0.0
    %2279 = vmatpush1.msra.mxu0 0.0
    %2280 = vmatprep.subr.mxu0 0.0
    %2281 = vmatpush1.msra.mxu0 0.0
    %2282 = vmatprep.subr.mxu0 0.0
    %2283 = vmatpush1.msra.mxu0 0.0
    %2284 = vmatprep.subr.mxu0 0.0
    %2285 = vmatpush1.msra.mxu0 0.0
    %2286 = vmatprep.subr.mxu0 0.0
    %2287 = vmatpush1.msra.mxu0 0.0
    %2288 = vmatprep.subr.mxu0 0.0
    %2289 = vmatpush1.msra.mxu0 0.0
    %2290 = vmatprep.subr.mxu0 0.0
    %2291 = vmatpush1.msra.mxu0 0.0
    %2292 = vmatprep.subr.mxu0 0.0
    %2293 = vmatpush1.msra.mxu0 0.0
    %2294 = vmatprep.subr.mxu0 0.0
    %2295 = vmatpush1.msra.mxu0 0.0
    %2296 = vmatprep.subr.mxu0 0.0
    %2297 = vmatpush1.msra.mxu0 0.0
    %2298 = vmatprep.subr.mxu0 0.0
    %2299 = vmatpush1.msra.mxu0 0.0
    %2300 = vmatprep.subr.mxu0 0.0
    %2301 = vmatpush1.msra.mxu0 0.0
    %2302 = vmatprep.subr.mxu0 0.0
    %2303 = vmatpush1.msra.mxu0 0.0
    %2304 = vmatprep.subr.mxu0 0.0
    %2305 = vmatpush1.msra.mxu0 0.0
    %2306 = vmatprep.subr.mxu0 0.0
    %2307 = vmatpush1.msra.mxu0 0.0
    %2308 = vmatprep.subr.mxu0 0.0
    %2309 = vmatpush1.msra.mxu0 0.0
    %2310 = vmatprep.subr.mxu0 0.0
    %2311 = vmatpush1.msra.mxu0 0.0
    %2312 = vmatprep.subr.mxu0 0.0
    %2313 = vmatpush1.msra.mxu0 0.0
    %2314 = vmatprep.subr.mxu0 0.0
    %2315 = vmatpush1.msra.mxu0 0.0
    %2316 = vmatprep.subr.mxu0 0.0
    %2317 = vmatpush1.msra.mxu0 0.0
    %2318 = vmatprep.subr.mxu0 0.0
    %2319 = vmatpush1.msra.mxu0 0.0
    %2320 = vmatprep.mubr.f32.mxu0 0.0
    %2321 = vmatmul.mubr.f32.gmra.mrb[0].mxu0 %v2251
    %v2322 = vpop.f32.mrb[0].mxu0
    %v2323 = vadd.f32 %v2242, %v2322
    %v2324 = vpop.f32.mrb[0].mxu0
    %2325 = vmatprep.mubr.f32.mxu0 0.0
    %2326 = vmatmul.mubr.f32.gmra.mrb[0].mxu0 %v2254
    %v2327 = vpop.f32.mrb[0].mxu0
    %v2328 = vadd.f32 %v2247, %v2327
    %v2329 = vpop.f32.mrb[0].mxu0
    %2330 = vdwg.mxu0
    %2331 = vrot.lane.b32.xlu0 %v1750, 112
    %v2332 = vpop.permute.xlu0 %2331
    %2333 = vrot.lane.b32.xlu0 %v1755, 112
    %v2334 = vpop.permute.xlu0 %2333
    %2335 = vrot.lane.b32.xlu0 %v1750, 80
    %v2336 = vpop.permute.xlu0 %2335
    %2337 = vrot.lane.b32.xlu0 %v1755, 80
    %v2338 = vpop.permute.xlu0 %2337
    %v2339 = vsel %vm218, %v2332, 0
    %v2341 = vsel %vm218, %v2334, 0
    %v2343 = vsel %vm218, %v2336, 0
    %v2345 = vsel %vm218, %v2338, 0
    %2347 = vmatprep.subr.mxu0 0.0
    %2348 = vmatpush1.xpose.msra.mxu0 %v2343
    %2349 = vmatprep.subr.mxu0 0.0
    %2350 = vmatpush1.xpose.msra.mxu0 %v2345
    %2351 = vmatprep.subr.mxu0 0.0
    %2352 = vmatpush1.xpose.msra.mxu0 0.0
    %2353 = vmatprep.subr.mxu0 0.0
    %2354 = vmatpush1.xpose.msra.mxu0 0.0
    %2355 = vmatprep.subr.mxu0 0.0
    %2356 = vmatpush1.xpose.msra.mxu0 0.0
    %2357 = vmatprep.subr.mxu0 0.0
    %2358 = vmatpush1.xpose.msra.mxu0 0.0
    %2359 = vmatprep.subr.mxu0 0.0
    %2360 = vmatpush1.xpose.msra.mxu0 0.0
    %2361 = vmatprep.subr.mxu0 0.0
    %2362 = vmatpush1.xpose.msra.mxu0 0.0
    %2363 = vmatprep.subr.mxu0 0.0
    %2364 = vmatpush1.xpose.msra.mxu0 0.0
    %2365 = vmatprep.subr.mxu0 0.0
    %2366 = vmatpush1.xpose.msra.mxu0 0.0
    %2367 = vmatprep.subr.mxu0 0.0
    %2368 = vmatpush1.xpose.msra.mxu0 0.0
    %2369 = vmatprep.subr.mxu0 0.0
    %2370 = vmatpush1.xpose.msra.mxu0 0.0
    %2371 = vmatprep.subr.mxu0 0.0
    %2372 = vmatpush1.xpose.msra.mxu0 0.0
    %2373 = vmatprep.subr.mxu0 0.0
    %2374 = vmatpush1.xpose.msra.mxu0 0.0
    %2375 = vmatprep.subr.mxu0 0.0
    %2376 = vmatpush1.xpose.msra.mxu0 0.0
    %2377 = vmatprep.subr.mxu0 0.0
    %2378 = vmatpush1.xpose.msra.mxu0 0.0
    %2379 = vmatprep.subr.mxu0 0.0
    %2380 = vmatpush1.xpose.msra.mxu0 0.0
    %2381 = vmatprep.subr.mxu0 0.0
    %2382 = vmatpush1.xpose.msra.mxu0 0.0
    %2383 = vmatprep.subr.mxu0 0.0
    %2384 = vmatpush1.xpose.msra.mxu0 0.0
    %2385 = vmatprep.subr.mxu0 0.0
    %2386 = vmatpush1.xpose.msra.mxu0 0.0
    %2387 = vmatprep.subr.mxu0 0.0
    %2388 = vmatpush1.xpose.msra.mxu0 0.0
    %2389 = vmatprep.subr.mxu0 0.0
    %2390 = vmatpush1.xpose.msra.mxu0 0.0
    %2391 = vmatprep.subr.mxu0 0.0
    %2392 = vmatpush1.xpose.msra.mxu0 0.0
    %2393 = vmatprep.subr.mxu0 0.0
    %2394 = vmatpush1.xpose.msra.mxu0 0.0
    %2395 = vmatprep.subr.mxu0 0.0
    %2396 = vmatpush1.xpose.msra.mxu0 0.0
    %2397 = vmatprep.subr.mxu0 0.0
    %2398 = vmatpush1.xpose.msra.mxu0 0.0
    %2399 = vmatprep.subr.mxu0 0.0
    %2400 = vmatpush1.xpose.msra.mxu0 0.0
    %2401 = vmatprep.subr.mxu0 0.0
    %2402 = vmatpush1.xpose.msra.mxu0 0.0
    %2403 = vmatprep.subr.mxu0 0.0
    %2404 = vmatpush1.xpose.msra.mxu0 0.0
    %2405 = vmatprep.subr.mxu0 0.0
    %2406 = vmatpush1.xpose.msra.mxu0 0.0
    %2407 = vmatprep.subr.mxu0 0.0
    %2408 = vmatpush1.xpose.msra.mxu0 0.0
    %2409 = vmatprep.subr.mxu0 0.0
    %2410 = vmatpush1.xpose.msra.mxu0 0.0
    %2411 = vmatprep.mubr.f32.mxu0 0.0
    %2412 = vmatmul.mubr.f32.gmra.mrb[0].mxu0 %v2339
    %v2413 = vpop.f32.mrb[0].mxu0
    %v2414 = vadd.f32 0.0, %v2413
    %v2415 = vpop.f32.mrb[0].mxu0
    %2416 = vmatprep.mubr.f32.mxu0 0.0
    %2417 = vmatmul.mubr.f32.gmra.mrb[0].mxu0 %v2341
    %v2418 = vpop.f32.mrb[0].mxu0
    %v2419 = vadd.f32 0.0, %v2418
    %v2420 = vpop.f32.mrb[0].mxu0
    %2421 = vdwg.mxu0
    %v2422 = vmul.f32 %v2414, 0.35355338
    %v2423 = vmul.f32 %v2419, 0.35355338
    %v2424 = vadd.f32 %v2422, %v66
    %v2425 = vadd.f32 %v2423, %v67
    %v2426 = vsel %vm306, %v2424, -inf
    %2427 = vmax.xlane.f32.xlu0 %v2426
    %v2428 = vpop.xlane.xlu0 %2427
    %v2429 = vsel %vm306, %v2425, -inf
    %2430 = vmax.xlane.f32.xlu0 %v2429
    %v2431 = vpop.xlane.xlu0 %2430
    %v2432 = vsub.f32 %v2424, %v2428
    %v2433 = vsub.f32 %v2425, %v2431
    %v2434 = vmul.f32 %v2432, 1.442695
    %v2435 = vpow.pop %v2434
    %v2436 = vmul.f32 %v2433, 1.442695
    %v2437 = vpow.pop %v2436
    %v2438 = vsel %vm306, %v2435, 0.0
    %2439 = vadd.xlane.f32.xlu0 %v2438
    %v2440 = vpop.xlane.xlu0 %2439
    %v2441 = vsel %vm306, %v2437, 0.0
    %2442 = vadd.xlane.f32.xlu0 %v2441
    %v2443 = vpop.xlane.xlu0 %2442
    %v2444 = vrcp.pop %v2440
    %v2445 = vmul.f32 %v2435, %v2444
    %v2446 = vrcp.pop %v2443
    %v2447 = vmul.f32 %v2437, %v2446
    %2448 = vrot.lane.b32.xlu0 %v1750, 48
    %v2449 = vpop.permute.xlu0 %2448
    %2450 = vrot.lane.b32.xlu0 %v1755, 48
    %v2451 = vpop.permute.xlu0 %2450
    %v2455 = vsel %vm306, %v2445, 0
    %v2458 = vsel %vm306, %v2447, 0
    %2460 = vmatprep.subr.mxu0 0.0
    %2461 = vmatpush1.msra.mxu0 %v2449
    %2462 = vmatprep.subr.mxu0 0.0
    %2463 = vmatpush1.msra.mxu0 %v2451
    %2464 = vmatprep.subr.mxu0 0.0
    %2465 = vmatpush1.msra.mxu0 0.0
    %2466 = vmatprep.subr.mxu0 0.0
    %2467 = vmatpush1.msra.mxu0 0.0
    %2468 = vmatprep.subr.mxu0 0.0
    %2469 = vmatpush1.msra.mxu0 0.0
    %2470 = vmatprep.subr.mxu0 0.0
    %2471 = vmatpush1.msra.mxu0 0.0
    %2472 = vmatprep.subr.mxu0 0.0
    %2473 = vmatpush1.msra.mxu0 0.0
    %2474 = vmatprep.subr.mxu0 0.0
    %2475 = vmatpush1.msra.mxu0 0.0
    %2476 = vmatprep.subr.mxu0 0.0
    %2477 = vmatpush1.msra.mxu0 0.0
    %2478 = vmatprep.subr.mxu0 0.0
    %2479 = vmatpush1.msra.mxu0 0.0
    %2480 = vmatprep.subr.mxu0 0.0
    %2481 = vmatpush1.msra.mxu0 0.0
    %2482 = vmatprep.subr.mxu0 0.0
    %2483 = vmatpush1.msra.mxu0 0.0
    %2484 = vmatprep.subr.mxu0 0.0
    %2485 = vmatpush1.msra.mxu0 0.0
    %2486 = vmatprep.subr.mxu0 0.0
    %2487 = vmatpush1.msra.mxu0 0.0
    %2488 = vmatprep.subr.mxu0 0.0
    %2489 = vmatpush1.msra.mxu0 0.0
    %2490 = vmatprep.subr.mxu0 0.0
    %2491 = vmatpush1.msra.mxu0 0.0
    %2492 = vmatprep.subr.mxu0 0.0
    %2493 = vmatpush1.msra.mxu0 0.0
    %2494 = vmatprep.subr.mxu0 0.0
    %2495 = vmatpush1.msra.mxu0 0.0
    %2496 = vmatprep.subr.mxu0 0.0
    %2497 = vmatpush1.msra.mxu0 0.0
    %2498 = vmatprep.subr.mxu0 0.0
    %2499 = vmatpush1.msra.mxu0 0.0
    %2500 = vmatprep.subr.mxu0 0.0
    %2501 = vmatpush1.msra.mxu0 0.0
    %2502 = vmatprep.subr.mxu0 0.0
    %2503 = vmatpush1.msra.mxu0 0.0
    %2504 = vmatprep.subr.mxu0 0.0
    %2505 = vmatpush1.msra.mxu0 0.0
    %2506 = vmatprep.subr.mxu0 0.0
    %2507 = vmatpush1.msra.mxu0 0.0
    %2508 = vmatprep.subr.mxu0 0.0
    %2509 = vmatpush1.msra.mxu0 0.0
    %2510 = vmatprep.subr.mxu0 0.0
    %2511 = vmatpush1.msra.mxu0 0.0
    %2512 = vmatprep.subr.mxu0 0.0
    %2513 = vmatpush1.msra.mxu0 0.0
    %2514 = vmatprep.subr.mxu0 0.0
    %2515 = vmatpush1.msra.mxu0 0.0
    %2516 = vmatprep.subr.mxu0 0.0
    %2517 = vmatpush1.msra.mxu0 0.0
    %2518 = vmatprep.subr.mxu0 0.0
    %2519 = vmatpush1.msra.mxu0 0.0
    %2520 = vmatprep.subr.mxu0 0.0
    %2521 = vmatpush1.msra.mxu0 0.0
    %2522 = vmatprep.subr.mxu0 0.0
    %2523 = vmatpush1.msra.mxu0 0.0
    %2524 = vmatprep.mubr.f32.mxu0 0.0
    %2525 = vmatmul.mubr.f32.gmra.mrb[0].mxu0 %v2455
    %v2526 = vpop.f32.mrb[0].mxu0
    %v2527 = vadd.f32 0.0, %v2526
    %v2528 = vpop.f32.mrb[0].mxu0
    %2529 = vmatprep.mubr.f32.mxu0 0.0
    %2530 = vmatmul.mubr.f32.gmra.mrb[0].mxu0 %v2458
    %v2531 = vpop.f32.mrb[0].mxu0
    %v2532 = vadd.f32 0.0, %v2531
    %v2533 = vpop.f32.mrb[0].mxu0
    %2534 = vdwg.mxu0
    %v2536 = vsel %vm218, %v2527, 0
    %v2539 = vsel %vm218, %v2532, 0
    %2541 = vmatprep.subr.mxu0 0.0
    %2542 = vmatpush1.msra.mxu0 %v1761
    %2543 = vmatprep.subr.mxu0 0.0
    %2544 = vmatpush1.msra.mxu0 0.0
    %2545 = vmatprep.subr.mxu0 0.0
    %2546 = vmatpush1.msra.mxu0 0.0
    %2547 = vmatprep.subr.mxu0 0.0
    %2548 = vmatpush1.msra.mxu0 0.0
    %2549 = vmatprep.subr.mxu0 0.0
    %2550 = vmatpush1.msra.mxu0 0.0
    %2551 = vmatprep.subr.mxu0 0.0
    %2552 = vmatpush1.msra.mxu0 0.0
    %2553 = vmatprep.subr.mxu0 0.0
    %2554 = vmatpush1.msra.mxu0 0.0
    %2555 = vmatprep.subr.mxu0 0.0
    %2556 = vmatpush1.msra.mxu0 0.0
    %2557 = vmatprep.subr.mxu0 0.0
    %2558 = vmatpush1.msra.mxu0 0.0
    %2559 = vmatprep.subr.mxu0 0.0
    %2560 = vmatpush1.msra.mxu0 0.0
    %2561 = vmatprep.subr.mxu0 0.0
    %2562 = vmatpush1.msra.mxu0 0.0
    %2563 = vmatprep.subr.mxu0 0.0
    %2564 = vmatpush1.msra.mxu0 0.0
    %2565 = vmatprep.subr.mxu0 0.0
    %2566 = vmatpush1.msra.mxu0 0.0
    %2567 = vmatprep.subr.mxu0 0.0
    %2568 = vmatpush1.msra.mxu0 0.0
    %2569 = vmatprep.subr.mxu0 0.0
    %2570 = vmatpush1.msra.mxu0 0.0
    %2571 = vmatprep.subr.mxu0 0.0
    %2572 = vmatpush1.msra.mxu0 0.0
    %2573 = vmatprep.subr.mxu0 0.0
    %2574 = vmatpush1.msra.mxu0 0.0
    %2575 = vmatprep.subr.mxu0 0.0
    %2576 = vmatpush1.msra.mxu0 0.0
    %2577 = vmatprep.subr.mxu0 0.0
    %2578 = vmatpush1.msra.mxu0 0.0
    %2579 = vmatprep.subr.mxu0 0.0
    %2580 = vmatpush1.msra.mxu0 0.0
    %2581 = vmatprep.subr.mxu0 0.0
    %2582 = vmatpush1.msra.mxu0 0.0
    %2583 = vmatprep.subr.mxu0 0.0
    %2584 = vmatpush1.msra.mxu0 0.0
    %2585 = vmatprep.subr.mxu0 0.0
    %2586 = vmatpush1.msra.mxu0 0.0
    %2587 = vmatprep.subr.mxu0 0.0
    %2588 = vmatpush1.msra.mxu0 0.0
    %2589 = vmatprep.subr.mxu0 0.0
    %2590 = vmatpush1.msra.mxu0 0.0
    %2591 = vmatprep.subr.mxu0 0.0
    %2592 = vmatpush1.msra.mxu0 0.0
    %2593 = vmatprep.subr.mxu0 0.0
    %2594 = vmatpush1.msra.mxu0 0.0
    %2595 = vmatprep.subr.mxu0 0.0
    %2596 = vmatpush1.msra.mxu0 0.0
    %2597 = vmatprep.subr.mxu0 0.0
    %2598 = vmatpush1.msra.mxu0 0.0
    %2599 = vmatprep.subr.mxu0 0.0
    %2600 = vmatpush1.msra.mxu0 0.0
    %2601 = vmatprep.subr.mxu0 0.0
    %2602 = vmatpush1.msra.mxu0 0.0
    %2603 = vmatprep.subr.mxu0 0.0
    %2604 = vmatpush1.msra.mxu0 0.0
    %2605 = vmatprep.mubr.f32.mxu0 0.0
    %2606 = vmatmul.mubr.f32.gmra.mrb[0].mxu0 %v2536
    %v2607 = vpop.f32.mrb[0].mxu0
    %v2608 = vadd.f32 0.0, %v2607
    %v2609 = vpop.f32.mrb[0].mxu0
    %2610 = vmatprep.mubr.f32.mxu0 0.0
    %2611 = vmatmul.mubr.f32.gmra.mrb[0].mxu0 %v2539
    %v2612 = vpop.f32.mrb[0].mxu0
    %v2613 = vadd.f32 0.0, %v2612
    %v2614 = vpop.f32.mrb[0].mxu0
    %2615 = vdwg.mxu0
    %v2616 = vadd.f32 %v2323, %v2608
    %v2617 = vadd.f32 %v2328, %v2613
    %2618 = vrot.lane.b32.xlu0 %v1750, 104
    %v2619 = vpop.permute.xlu0 %2618
    %2620 = vrot.lane.b32.xlu0 %v1755, 104
    %v2621 = vpop.permute.xlu0 %2620
    %2622 = vrot.lane.b32.xlu0 %v1750, 72
    %v2623 = vpop.permute.xlu0 %2622
    %2624 = vrot.lane.b32.xlu0 %v1755, 72
    %v2625 = vpop.permute.xlu0 %2624
    %v2626 = vsel %vm218, %v2619, 0
    %v2628 = vsel %vm218, %v2621, 0
    %v2630 = vsel %vm218, %v2623, 0
    %v2632 = vsel %vm218, %v2625, 0
    %2634 = vmatprep.subr.mxu0 0.0
    %2635 = vmatpush1.xpose.msra.mxu0 %v2630
    %2636 = vmatprep.subr.mxu0 0.0
    %2637 = vmatpush1.xpose.msra.mxu0 %v2632
    %2638 = vmatprep.subr.mxu0 0.0
    %2639 = vmatpush1.xpose.msra.mxu0 0.0
    %2640 = vmatprep.subr.mxu0 0.0
    %2641 = vmatpush1.xpose.msra.mxu0 0.0
    %2642 = vmatprep.subr.mxu0 0.0
    %2643 = vmatpush1.xpose.msra.mxu0 0.0
    %2644 = vmatprep.subr.mxu0 0.0
    %2645 = vmatpush1.xpose.msra.mxu0 0.0
    %2646 = vmatprep.subr.mxu0 0.0
    %2647 = vmatpush1.xpose.msra.mxu0 0.0
    %2648 = vmatprep.subr.mxu0 0.0
    %2649 = vmatpush1.xpose.msra.mxu0 0.0
    %2650 = vmatprep.subr.mxu0 0.0
    %2651 = vmatpush1.xpose.msra.mxu0 0.0
    %2652 = vmatprep.subr.mxu0 0.0
    %2653 = vmatpush1.xpose.msra.mxu0 0.0
    %2654 = vmatprep.subr.mxu0 0.0
    %2655 = vmatpush1.xpose.msra.mxu0 0.0
    %2656 = vmatprep.subr.mxu0 0.0
    %2657 = vmatpush1.xpose.msra.mxu0 0.0
    %2658 = vmatprep.subr.mxu0 0.0
    %2659 = vmatpush1.xpose.msra.mxu0 0.0
    %2660 = vmatprep.subr.mxu0 0.0
    %2661 = vmatpush1.xpose.msra.mxu0 0.0
    %2662 = vmatprep.subr.mxu0 0.0
    %2663 = vmatpush1.xpose.msra.mxu0 0.0
    %2664 = vmatprep.subr.mxu0 0.0
    %2665 = vmatpush1.xpose.msra.mxu0 0.0
    %2666 = vmatprep.subr.mxu0 0.0
    %2667 = vmatpush1.xpose.msra.mxu0 0.0
    %2668 = vmatprep.subr.mxu0 0.0
    %2669 = vmatpush1.xpose.msra.mxu0 0.0
    %2670 = vmatprep.subr.mxu0 0.0
    %2671 = vmatpush1.xpose.msra.mxu0 0.0
    %2672 = vmatprep.subr.mxu0 0.0
    %2673 = vmatpush1.xpose.msra.mxu0 0.0
    %2674 = vmatprep.subr.mxu0 0.0
    %2675 = vmatpush1.xpose.msra.mxu0 0.0
    %2676 = vmatprep.subr.mxu0 0.0
    %2677 = vmatpush1.xpose.msra.mxu0 0.0
    %2678 = vmatprep.subr.mxu0 0.0
    %2679 = vmatpush1.xpose.msra.mxu0 0.0
    %2680 = vmatprep.subr.mxu0 0.0
    %2681 = vmatpush1.xpose.msra.mxu0 0.0
    %2682 = vmatprep.subr.mxu0 0.0
    %2683 = vmatpush1.xpose.msra.mxu0 0.0
    %2684 = vmatprep.subr.mxu0 0.0
    %2685 = vmatpush1.xpose.msra.mxu0 0.0
    %2686 = vmatprep.subr.mxu0 0.0
    %2687 = vmatpush1.xpose.msra.mxu0 0.0
    %2688 = vmatprep.subr.mxu0 0.0
    %2689 = vmatpush1.xpose.msra.mxu0 0.0
    %2690 = vmatprep.subr.mxu0 0.0
    %2691 = vmatpush1.xpose.msra.mxu0 0.0
    %2692 = vmatprep.subr.mxu0 0.0
    %2693 = vmatpush1.xpose.msra.mxu0 0.0
    %2694 = vmatprep.subr.mxu0 0.0
    %2695 = vmatpush1.xpose.msra.mxu0 0.0
    %2696 = vmatprep.subr.mxu0 0.0
    %2697 = vmatpush1.xpose.msra.mxu0 0.0
    %2698 = vmatprep.mubr.f32.mxu0 0.0
    %2699 = vmatmul.mubr.f32.gmra.mrb[0].mxu0 %v2626
    %v2700 = vpop.f32.mrb[0].mxu0
    %v2701 = vadd.f32 0.0, %v2700
    %v2702 = vpop.f32.mrb[0].mxu0
    %2703 = vmatprep.mubr.f32.mxu0 0.0
    %2704 = vmatmul.mubr.f32.gmra.mrb[0].mxu0 %v2628
    %v2705 = vpop.f32.mrb[0].mxu0
    %v2706 = vadd.f32 0.0, %v2705
    %v2707 = vpop.f32.mrb[0].mxu0
    %2708 = vdwg.mxu0
    %v2709 = vmul.f32 %v2701, 0.35355338
    %v2710 = vmul.f32 %v2706, 0.35355338
    %v2711 = vadd.f32 %v2709, %v66
    %v2712 = vadd.f32 %v2710, %v67
    %v2713 = vsel %vm306, %v2711, -inf
    %2714 = vmax.xlane.f32.xlu0 %v2713
    %v2715 = vpop.xlane.xlu0 %2714
    %v2716 = vsel %vm306, %v2712, -inf
    %2717 = vmax.xlane.f32.xlu0 %v2716
    %v2718 = vpop.xlane.xlu0 %2717
    %v2719 = vsub.f32 %v2711, %v2715
    %v2720 = vsub.f32 %v2712, %v2718
    %v2721 = vmul.f32 %v2719, 1.442695
    %v2722 = vpow.pop %v2721
    %v2723 = vmul.f32 %v2720, 1.442695
    %v2724 = vpow.pop %v2723
    %v2725 = vsel %vm306, %v2722, 0.0
    %2726 = vadd.xlane.f32.xlu0 %v2725
    %v2727 = vpop.xlane.xlu0 %2726
    %v2728 = vsel %vm306, %v2724, 0.0
    %2729 = vadd.xlane.f32.xlu0 %v2728
    %v2730 = vpop.xlane.xlu0 %2729
    %v2731 = vrcp.pop %v2727
    %v2732 = vmul.f32 %v2722, %v2731
    %v2733 = vrcp.pop %v2730
    %v2734 = vmul.f32 %v2724, %v2733
    %2735 = vrot.lane.b32.xlu0 %v1750, 40
    %v2736 = vpop.permute.xlu0 %2735
    %2737 = vrot.lane.b32.xlu0 %v1755, 40
    %v2738 = vpop.permute.xlu0 %2737
    %v2742 = vsel %vm306, %v2732, 0
    %v2745 = vsel %vm306, %v2734, 0
    %2747 = vmatprep.subr.mxu0 0.0
    %2748 = vmatpush1.msra.mxu0 %v2736
    %2749 = vmatprep.subr.mxu0 0.0
    %2750 = vmatpush1.msra.mxu0 %v2738
    %2751 = vmatprep.subr.mxu0 0.0
    %2752 = vmatpush1.msra.mxu0 0.0
    %2753 = vmatprep.subr.mxu0 0.0
    %2754 = vmatpush1.msra.mxu0 0.0
    %2755 = vmatprep.subr.mxu0 0.0
    %2756 = vmatpush1.msra.mxu0 0.0
    %2757 = vmatprep.subr.mxu0 0.0
    %2758 = vmatpush1.msra.mxu0 0.0
    %2759 = vmatprep.subr.mxu0 0.0
    %2760 = vmatpush1.msra.mxu0 0.0
    %2761 = vmatprep.subr.mxu0 0.0
    %2762 = vmatpush1.msra.mxu0 0.0
    %2763 = vmatprep.subr.mxu0 0.0
    %2764 = vmatpush1.msra.mxu0 0.0
    %2765 = vmatprep.subr.mxu0 0.0
    %2766 = vmatpush1.msra.mxu0 0.0
    %2767 = vmatprep.subr.mxu0 0.0
    %2768 = vmatpush1.msra.mxu0 0.0
    %2769 = vmatprep.subr.mxu0 0.0
    %2770 = vmatpush1.msra.mxu0 0.0
    %2771 = vmatprep.subr.mxu0 0.0
    %2772 = vmatpush1.msra.mxu0 0.0
    %2773 = vmatprep.subr.mxu0 0.0
    %2774 = vmatpush1.msra.mxu0 0.0
    %2775 = vmatprep.subr.mxu0 0.0
    %2776 = vmatpush1.msra.mxu0 0.0
    %2777 = vmatprep.subr.mxu0 0.0
    %2778 = vmatpush1.msra.mxu0 0.0
    %2779 = vmatprep.subr.mxu0 0.0
    %2780 = vmatpush1.msra.mxu0 0.0
    %2781 = vmatprep.subr.mxu0 0.0
    %2782 = vmatpush1.msra.mxu0 0.0
    %2783 = vmatprep.subr.mxu0 0.0
    %2784 = vmatpush1.msra.mxu0 0.0
    %2785 = vmatprep.subr.mxu0 0.0
    %2786 = vmatpush1.msra.mxu0 0.0
    %2787 = vmatprep.subr.mxu0 0.0
    %2788 = vmatpush1.msra.mxu0 0.0
    %2789 = vmatprep.subr.mxu0 0.0
    %2790 = vmatpush1.msra.mxu0 0.0
    %2791 = vmatprep.subr.mxu0 0.0
    %2792 = vmatpush1.msra.mxu0 0.0
    %2793 = vmatprep.subr.mxu0 0.0
    %2794 = vmatpush1.msra.mxu0 0.0
    %2795 = vmatprep.subr.mxu0 0.0
    %2796 = vmatpush1.msra.mxu0 0.0
    %2797 = vmatprep.subr.mxu0 0.0
    %2798 = vmatpush1.msra.mxu0 0.0
    %2799 = vmatprep.subr.mxu0 0.0
    %2800 = vmatpush1.msra.mxu0 0.0
    %2801 = vmatprep.subr.mxu0 0.0
    %2802 = vmatpush1.msra.mxu0 0.0
    %2803 = vmatprep.subr.mxu0 0.0
    %2804 = vmatpush1.msra.mxu0 0.0
    %2805 = vmatprep.subr.mxu0 0.0
    %2806 = vmatpush1.msra.mxu0 0.0
    %2807 = vmatprep.subr.mxu0 0.0
    %2808 = vmatpush1.msra.mxu0 0.0
    %2809 = vmatprep.subr.mxu0 0.0
    %2810 = vmatpush1.msra.mxu0 0.0
    %2811 = vmatprep.mubr.f32.mxu0 0.0
    %2812 = vmatmul.mubr.f32.gmra.mrb[0].mxu0 %v2742
    %v2813 = vpop.f32.mrb[0].mxu0
    %v2814 = vadd.f32 0.0, %v2813
    %v2815 = vpop.f32.mrb[0].mxu0
    %2816 = vmatprep.mubr.f32.mxu0 0.0
    %2817 = vmatmul.mubr.f32.gmra.mrb[0].mxu0 %v2745
    %v2818 = vpop.f32.mrb[0].mxu0
    %v2819 = vadd.f32 0.0, %v2818
    %v2820 = vpop.f32.mrb[0].mxu0
    %2821 = vdwg.mxu0
    %v2823 = vsel %vm218, %v2814, 0
    %v2826 = vsel %vm218, %v2819, 0
    %2828 = vmatprep.subr.mxu0 0.0
    %2829 = vmatpush1.msra.mxu0 %v1762
    %2830 = vmatprep.subr.mxu0 0.0
    %2831 = vmatpush1.msra.mxu0 0.0
    %2832 = vmatprep.subr.mxu0 0.0
    %2833 = vmatpush1.msra.mxu0 0.0
    %2834 = vmatprep.subr.mxu0 0.0
    %2835 = vmatpush1.msra.mxu0 0.0
    %2836 = vmatprep.subr.mxu0 0.0
    %2837 = vmatpush1.msra.mxu0 0.0
    %2838 = vmatprep.subr.mxu0 0.0
    %2839 = vmatpush1.msra.mxu0 0.0
    %2840 = vmatprep.subr.mxu0 0.0
    %2841 = vmatpush1.msra.mxu0 0.0
    %2842 = vmatprep.subr.mxu0 0.0
    %2843 = vmatpush1.msra.mxu0 0.0
    %2844 = vmatprep.subr.mxu0 0.0
    %2845 = vmatpush1.msra.mxu0 0.0
    %2846 = vmatprep.subr.mxu0 0.0
    %2847 = vmatpush1.msra.mxu0 0.0
    %2848 = vmatprep.subr.mxu0 0.0
    %2849 = vmatpush1.msra.mxu0 0.0
    %2850 = vmatprep.subr.mxu0 0.0
    %2851 = vmatpush1.msra.mxu0 0.0
    %2852 = vmatprep.subr.mxu0 0.0
    %2853 = vmatpush1.msra.mxu0 0.0
    %2854 = vmatprep.subr.mxu0 0.0
    %2855 = vmatpush1.msra.mxu0 0.0
    %2856 = vmatprep.subr.mxu0 0.0
    %2857 = vmatpush1.msra.mxu0 0.0
    %2858 = vmatprep.subr.mxu0 0.0
    %2859 = vmatpush1.msra.mxu0 0.0
    %2860 = vmatprep.subr.mxu0 0.0
    %2861 = vmatpush1.msra.mxu0 0.0
    %2862 = vmatprep.subr.mxu0 0.0
    %2863 = vmatpush1.msra.mxu0 0.0
    %2864 = vmatprep.subr.mxu0 0.0
    %2865 = vmatpush1.msra.mxu0 0.0
    %2866 = vmatprep.subr.mxu0 0.0
    %2867 = vmatpush1.msra.mxu0 0.0
    %2868 = vmatprep.subr.mxu0 0.0
    %2869 = vmatpush1.msra.mxu0 0.0
    %2870 = vmatprep.subr.mxu0 0.0
    %2871 = vmatpush1.msra.mxu0 0.0
    %2872 = vmatprep.subr.mxu0 0.0
    %2873 = vmatpush1.msra.mxu0 0.0
    %2874 = vmatprep.subr.mxu0 0.0
    %2875 = vmatpush1.msra.mxu0 0.0
    %2876 = vmatprep.subr.mxu0 0.0
    %2877 = vmatpush1.msra.mxu0 0.0
    %2878 = vmatprep.subr.mxu0 0.0
    %2879 = vmatpush1.msra.mxu0 0.0
    %2880 = vmatprep.subr.mxu0 0.0
    %2881 = vmatpush1.msra.mxu0 0.0
    %2882 = vmatprep.subr.mxu0 0.0
    %2883 = vmatpush1.msra.mxu0 0.0
    %2884 = vmatprep.subr.mxu0 0.0
    %2885 = vmatpush1.msra.mxu0 0.0
    %2886 = vmatprep.subr.mxu0 0.0
    %2887 = vmatpush1.msra.mxu0 0.0
    %2888 = vmatprep.subr.mxu0 0.0
    %2889 = vmatpush1.msra.mxu0 0.0
    %2890 = vmatprep.subr.mxu0 0.0
    %2891 = vmatpush1.msra.mxu0 0.0
    %2892 = vmatprep.mubr.f32.mxu0 0.0
    %2893 = vmatmul.mubr.f32.gmra.mrb[0].mxu0 %v2823
    %v2894 = vpop.f32.mrb[0].mxu0
    %v2895 = vadd.f32 0.0, %v2894
    %v2896 = vpop.f32.mrb[0].mxu0
    %2897 = vmatprep.mubr.f32.mxu0 0.0
    %2898 = vmatmul.mubr.f32.gmra.mrb[0].mxu0 %v2826
    %v2899 = vpop.f32.mrb[0].mxu0
    %v2900 = vadd.f32 0.0, %v2899
    %v2901 = vpop.f32.mrb[0].mxu0
    %2902 = vdwg.mxu0
    %v2903 = vadd.f32 %v2616, %v2895
    %v2904 = vadd.f32 %v2617, %v2900
    %s2905 = scalar_lea.vmem %s7, 1
    %v2906 = vld [vmem:[%s2905] sm:$0x1]
    %v2908 = vlaneseq
    %v2909 = vshrl.u32 %v2908, 7
    %v2910 = vsub.s32 0, %v2909
    %v2911 = vrot.slane %v2906, %v2910
    %v2913 = vadd.f32 %v2903, %v2911
    %v2914 = vadd.f32 %v2904, %v2911
    %v2915 = vadd.f32 %v2913, %v1662
    %v2916 = vadd.f32 %v2914, %v1663
    %s2917 = scalar_lea.vmem %s8, 1
    %v2918 = vld [vmem:[%s2917] sm:$0x1]
    %s2919 = scalar_lea.vmem %s9, 1
    %v2920 = vld [vmem:[%s2919] sm:$0x1]
    %v2921 = vsel %vm72, %v2915, 0.0
    %2922 = vadd.xlane.f32.xlu0 %v2921
    %v2923 = vpop.xlane.xlu0 %2922
    %v2924 = vsel %vm72, %v2916, 0.0
    %2925 = vadd.xlane.f32.xlu0 %v2924
    %v2926 = vpop.xlane.xlu0 %2925
    %v2927 = vmul.f32 %v2923, %v79
    %v2928 = vmul.f32 %v2926, %v79
    %v2929 = vsub.f32 %v2915, %v2927
    %v2930 = vsub.f32 %v2916, %v2928
    %v2931 = vmul.f32 %v2929, %v2929
    %v2932 = vmul.f32 %v2930, %v2930
    %v2933 = vsel %vm72, %v2931, 0.0
    %2934 = vadd.xlane.f32.xlu0 %v2933
    %v2935 = vpop.xlane.xlu0 %2934
    %v2936 = vsel %vm72, %v2932, 0.0
    %2937 = vadd.xlane.f32.xlu0 %v2936
    %v2938 = vpop.xlane.xlu0 %2937
    %v2939 = vmul.f32 %v2935, %v79
    %v2940 = vmul.f32 %v2938, %v79
    %v2941 = vadd.f32 %v2939, 1e-12
    %v2942 = vadd.f32 %v2940, 1e-12
    %v2943 = vrsqrt.pop %v2941
    %v2944 = vrsqrt.pop %v2942
    %v2945 = vmul.f32 %v2929, %v2943
    %v2946 = vmul.f32 %v2930, %v2944
    %v2948 = vlaneseq
    %v2949 = vshrl.u32 %v2948, 7
    %v2950 = vsub.s32 0, %v2949
    %v2951 = vrot.slane %v2918, %v2950
    %v2953 = vmul.f32 %v2945, %v2951
    %v2954 = vmul.f32 %v2946, %v2951
    %v2956 = vlaneseq
    %v2957 = vshrl.u32 %v2956, 7
    %v2958 = vsub.s32 0, %v2957
    %v2959 = vrot.slane %v2920, %v2958
    %v2961 = vadd.f32 %v2953, %v2959
    %v2962 = vadd.f32 %v2954, %v2959
    %s2963 = scalar_lea.vmem %s10, 32
    %v2964 = vld [vmem:[%s2963] sm:$0xff]
    %v2965 = vld [vmem:[%s2963 + $0x8] sm:$0xff]
    %v2966 = vld [vmem:[%s2963 + $0x10] sm:$0xff]
    %v2967 = vld [vmem:[%s2963 + $0x18] sm:$0xff]
    %s2968 = scalar_lea.vmem %s11, 1
    %v2969 = vld [vmem:[%s2968] sm:$0x1]
    %v2971 = vlaneseq
    %v2972 = vshrl.u32 %v2971, 7
    %v2973 = vsub.s32 0, %v2972
    %v2974 = vrot.slane %v2969, %v2973
    %v2977 = vsel %vm72, %v2961, 0
    %v2980 = vsel %vm72, %v2962, 0
    %2982 = vmatprep.subr.mxu0 0.0
    %2983 = vmatpush1.msra.mxu0 %v2964
    %2984 = vmatprep.subr.mxu0 0.0
    %2985 = vmatpush1.msra.mxu0 %v2965
    %2986 = vmatprep.subr.mxu0 0.0
    %2987 = vmatpush1.msra.mxu0 %v2966
    %2988 = vmatprep.subr.mxu0 0.0
    %2989 = vmatpush1.msra.mxu0 %v2967
    %2990 = vmatprep.subr.mxu0 0.0
    %2991 = vmatpush1.msra.mxu0 0.0
    %2992 = vmatprep.subr.mxu0 0.0
    %2993 = vmatpush1.msra.mxu0 0.0
    %2994 = vmatprep.subr.mxu0 0.0
    %2995 = vmatpush1.msra.mxu0 0.0
    %2996 = vmatprep.subr.mxu0 0.0
    %2997 = vmatpush1.msra.mxu0 0.0
    %2998 = vmatprep.subr.mxu0 0.0
    %2999 = vmatpush1.msra.mxu0 0.0
    %3000 = vmatprep.subr.mxu0 0.0
    %3001 = vmatpush1.msra.mxu0 0.0
    %3002 = vmatprep.subr.mxu0 0.0
    %3003 = vmatpush1.msra.mxu0 0.0
    %3004 = vmatprep.subr.mxu0 0.0
    %3005 = vmatpush1.msra.mxu0 0.0
    %3006 = vmatprep.subr.mxu0 0.0
    %3007 = vmatpush1.msra.mxu0 0.0
    %3008 = vmatprep.subr.mxu0 0.0
    %3009 = vmatpush1.msra.mxu0 0.0
    %3010 = vmatprep.subr.mxu0 0.0
    %3011 = vmatpush1.msra.mxu0 0.0
    %3012 = vmatprep.subr.mxu0 0.0
    %3013 = vmatpush1.msra.mxu0 0.0
    %3014 = vmatprep.subr.mxu0 0.0
    %3015 = vmatpush1.msra.mxu0 0.0
    %3016 = vmatprep.subr.mxu0 0.0
    %3017 = vmatpush1.msra.mxu0 0.0
    %3018 = vmatprep.subr.mxu0 0.0
    %3019 = vmatpush1.msra.mxu0 0.0
    %3020 = vmatprep.subr.mxu0 0.0
    %3021 = vmatpush1.msra.mxu0 0.0
    %3022 = vmatprep.subr.mxu0 0.0
    %3023 = vmatpush1.msra.mxu0 0.0
    %3024 = vmatprep.subr.mxu0 0.0
    %3025 = vmatpush1.msra.mxu0 0.0
    %3026 = vmatprep.subr.mxu0 0.0
    %3027 = vmatpush1.msra.mxu0 0.0
    %3028 = vmatprep.subr.mxu0 0.0
    %3029 = vmatpush1.msra.mxu0 0.0
    %3030 = vmatprep.subr.mxu0 0.0
    %3031 = vmatpush1.msra.mxu0 0.0
    %3032 = vmatprep.subr.mxu0 0.0
    %3033 = vmatpush1.msra.mxu0 0.0
    %3034 = vmatprep.subr.mxu0 0.0
    %3035 = vmatpush1.msra.mxu0 0.0
    %3036 = vmatprep.subr.mxu0 0.0
    %3037 = vmatpush1.msra.mxu0 0.0
    %3038 = vmatprep.subr.mxu0 0.0
    %3039 = vmatpush1.msra.mxu0 0.0
    %3040 = vmatprep.subr.mxu0 0.0
    %3041 = vmatpush1.msra.mxu0 0.0
    %3042 = vmatprep.subr.mxu0 0.0
    %3043 = vmatpush1.msra.mxu0 0.0
    %3044 = vmatprep.subr.mxu0 0.0
    %3045 = vmatpush1.msra.mxu0 0.0
    %3046 = vmatprep.mubr.f32.mxu0 0.0
    %3047 = vmatmul.mubr.f32.gmra.mrb[0].mxu0 %v2977
    %v3048 = vpop.f32.mrb[0].mxu0
    %v3049 = vadd.f32 %v2974, %v3048
    %v3050 = vpop.f32.mrb[0].mxu0
    %3051 = vmatprep.mubr.f32.mxu0 0.0
    %3052 = vmatmul.mubr.f32.gmra.mrb[0].mxu0 %v2980
    %v3053 = vpop.f32.mrb[0].mxu0
    %v3054 = vadd.f32 %v2974, %v3053
    %v3055 = vpop.f32.mrb[0].mxu0
    %3056 = vdwg.mxu0
    %v3057 = vmul.f32 %v3049, %v3049
    %v3058 = vmul.f32 %v3054, %v3054
    %v3059 = vmul.f32 %v3049, %v3057
    %v3060 = vmul.f32 %v3054, %v3058
    %v3061 = vmul.f32 %v3059, 0.044715
    %v3062 = vmul.f32 %v3060, 0.044715
    %v3063 = vadd.f32 %v3049, %v3061
    %v3064 = vadd.f32 %v3054, %v3062
    %v3065 = vmul.f32 %v3063, 0.7978846
    %v3066 = vmul.f32 %v3064, 0.7978846
    %v3067 = vtanh.pop %v3065
    %v3068 = vtanh.pop %v3066
    %v3069 = vadd.f32 %v3067, 1.0
    %v3070 = vadd.f32 %v3068, 1.0
    %v3071 = vmul.f32 %v3069, 0.5
    %v3072 = vmul.f32 %v3070, 0.5
    %v3073 = vmul.f32 %v3049, %v3071
    %v3074 = vmul.f32 %v3054, %v3072
    %s3075 = scalar_lea.vmem %s12, 64
    %v3076 = vld [vmem:[%s3075] sm:$0xff]
    %v3077 = vld [vmem:[%s3075 + $0x8] sm:$0xff]
    %v3078 = vld [vmem:[%s3075 + $0x10] sm:$0xff]
    %v3079 = vld [vmem:[%s3075 + $0x18] sm:$0xff]
    %v3080 = vld [vmem:[%s3075 + $0x20] sm:$0xff]
    %v3081 = vld [vmem:[%s3075 + $0x28] sm:$0xff]
    %v3082 = vld [vmem:[%s3075 + $0x30] sm:$0xff]
    %v3083 = vld [vmem:[%s3075 + $0x38] sm:$0xff]
    %s3084 = scalar_lea.vmem %s13, 1
    %v3085 = vld [vmem:[%s3084] sm:$0x1]
    %v3087 = vlaneseq
    %v3088 = vshrl.u32 %v3087, 7
    %v3089 = vsub.s32 0, %v3088
    %v3090 = vrot.slane %v3085, %v3089
    %v3093 = vsel %vm1536, %v3073, 0
    %v3096 = vsel %vm1536, %v3074, 0
    %3098 = vmatprep.subr.mxu0 0.0
    %3099 = vmatpush1.msra.mxu0 %v3076
    %3100 = vmatprep.subr.mxu0 0.0
    %3101 = vmatpush1.msra.mxu0 %v3077
    %3102 = vmatprep.subr.mxu0 0.0
    %3103 = vmatpush1.msra.mxu0 %v3078
    %3104 = vmatprep.subr.mxu0 0.0
    %3105 = vmatpush1.msra.mxu0 %v3079
    %3106 = vmatprep.subr.mxu0 0.0
    %3107 = vmatpush1.msra.mxu0 %v3080
    %3108 = vmatprep.subr.mxu0 0.0
    %3109 = vmatpush1.msra.mxu0 %v3081
    %3110 = vmatprep.subr.mxu0 0.0
    %3111 = vmatpush1.msra.mxu0 %v3082
    %3112 = vmatprep.subr.mxu0 0.0
    %3113 = vmatpush1.msra.mxu0 %v3083
    %3114 = vmatprep.subr.mxu0 0.0
    %3115 = vmatpush1.msra.mxu0 0.0
    %3116 = vmatprep.subr.mxu0 0.0
    %3117 = vmatpush1.msra.mxu0 0.0
    %3118 = vmatprep.subr.mxu0 0.0
    %3119 = vmatpush1.msra.mxu0 0.0
    %3120 = vmatprep.subr.mxu0 0.0
    %3121 = vmatpush1.msra.mxu0 0.0
    %3122 = vmatprep.subr.mxu0 0.0
    %3123 = vmatpush1.msra.mxu0 0.0
    %3124 = vmatprep.subr.mxu0 0.0
    %3125 = vmatpush1.msra.mxu0 0.0
    %3126 = vmatprep.subr.mxu0 0.0
    %3127 = vmatpush1.msra.mxu0 0.0
    %3128 = vmatprep.subr.mxu0 0.0
    %3129 = vmatpush1.msra.mxu0 0.0
    %3130 = vmatprep.subr.mxu0 0.0
    %3131 = vmatpush1.msra.mxu0 0.0
    %3132 = vmatprep.subr.mxu0 0.0
    %3133 = vmatpush1.msra.mxu0 0.0
    %3134 = vmatprep.subr.mxu0 0.0
    %3135 = vmatpush1.msra.mxu0 0.0
    %3136 = vmatprep.subr.mxu0 0.0
    %3137 = vmatpush1.msra.mxu0 0.0
    %3138 = vmatprep.subr.mxu0 0.0
    %3139 = vmatpush1.msra.mxu0 0.0
    %3140 = vmatprep.subr.mxu0 0.0
    %3141 = vmatpush1.msra.mxu0 0.0
    %3142 = vmatprep.subr.mxu0 0.0
    %3143 = vmatpush1.msra.mxu0 0.0
    %3144 = vmatprep.subr.mxu0 0.0
    %3145 = vmatpush1.msra.mxu0 0.0
    %3146 = vmatprep.subr.mxu0 0.0
    %3147 = vmatpush1.msra.mxu0 0.0
    %3148 = vmatprep.subr.mxu0 0.0
    %3149 = vmatpush1.msra.mxu0 0.0
    %3150 = vmatprep.subr.mxu0 0.0
    %3151 = vmatpush1.msra.mxu0 0.0
    %3152 = vmatprep.subr.mxu0 0.0
    %3153 = vmatpush1.msra.mxu0 0.0
    %3154 = vmatprep.subr.mxu0 0.0
    %3155 = vmatpush1.msra.mxu0 0.0
    %3156 = vmatprep.subr.mxu0 0.0
    %3157 = vmatpush1.msra.mxu0 0.0
    %3158 = vmatprep.subr.mxu0 0.0
    %3159 = vmatpush1.msra.mxu0 0.0
    %3160 = vmatprep.subr.mxu0 0.0
    %3161 = vmatpush1.msra.mxu0 0.0
    %3162 = vmatprep.mubr.f32.mxu0 0.0
    %3163 = vmatmul.mubr.f32.gmra.mrb[0].mxu0 %v3093
    %v3164 = vpop.f32.mrb[0].mxu0
    %v3165 = vadd.f32 %v3090, %v3164
    %v3166 = vpop.f32.mrb[0].mxu0
    %3167 = vmatprep.mubr.f32.mxu0 0.0
    %3168 = vmatmul.mubr.f32.gmra.mrb[0].mxu0 %v3096
    %v3169 = vpop.f32.mrb[0].mxu0
    %v3170 = vadd.f32 %v3090, %v3169
    %v3171 = vpop.f32.mrb[0].mxu0
    %3172 = vdwg.mxu0
    %v3173 = vadd.f32 %v3165, %v2961
    %v3174 = vadd.f32 %v3170, %v2962
    %s3175 = scalar_lea.vmem %s14, 1
    %v3176 = vld [vmem:[%s3175] sm:$0x1]
    %s3177 = scalar_lea.vmem %s15, 1
    %v3178 = vld [vmem:[%s3177] sm:$0x1]
    %v3179 = vsel %vm72, %v3173, 0.0
    %3180 = vadd.xlane.f32.xlu0 %v3179
    %v3181 = vpop.xlane.xlu0 %3180
    %v3182 = vsel %vm72, %v3174, 0.0
    %3183 = vadd.xlane.f32.xlu0 %v3182
    %v3184 = vpop.xlane.xlu0 %3183
    %v3185 = vmul.f32 %v3181, %v79
    %v3186 = vmul.f32 %v3184, %v79
    %v3187 = vsub.f32 %v3173, %v3185
    %v3188 = vsub.f32 %v3174, %v3186
    %v3189 = vmul.f32 %v3187, %v3187
    %v3190 = vmul.f32 %v3188, %v3188
    %v3191 = vsel %vm72, %v3189, 0.0
    %3192 = vadd.xlane.f32.xlu0 %v3191
    %v3193 = vpop.xlane.xlu0 %3192
    %v3194 = vsel %vm72, %v3190, 0.0
    %3195 = vadd.xlane.f32.xlu0 %v3194
    %v3196 = vpop.xlane.xlu0 %3195
    %v3197 = vmul.f32 %v3193, %v79
    %v3198 = vmul.f32 %v3196, %v79
    %v3199 = vadd.f32 %v3197, 1e-12
    %v3200 = vadd.f32 %v3198, 1e-12
    %v3201 = vrsqrt.pop %v3199
    %v3202 = vrsqrt.pop %v3200
    %v3203 = vmul.f32 %v3187, %v3201
    %v3204 = vmul.f32 %v3188, %v3202
    %v3206 = vlaneseq
    %v3207 = vshrl.u32 %v3206, 7
    %v3208 = vsub.s32 0, %v3207
    %v3209 = vrot.slane %v3176, %v3208
    %v3211 = vmul.f32 %v3203, %v3209
    %v3212 = vmul.f32 %v3204, %v3209
    %v3214 = vlaneseq
    %v3215 = vshrl.u32 %v3214, 7
    %v3216 = vsub.s32 0, %v3215
    %v3217 = vrot.slane %v3178, %v3216
    %v3219 = vadd.f32 %v3211, %v3217
    %v3220 = vadd.f32 %v3212, %v3217
    %v3221 = vlaneseq
    %v3222 = vand.u32 %v3221, 127
    %v3223 = vlaneseq
    %v3224 = vshrl.u32 %v3223, 7
    %v3225 = vmul.u32 %v3224, 8
    %vm3226 = vcmp.eq.s32.totalorder %v3222, %v3225
    %v3227 = vsel %vm3226, 1, 0
    %v3228 = vcvt.s32.f32 %v3227
    %v3230 = vsel %vm306, %v3228, 0
    %3232 = vmatprep.subr.mxu0 0.0
    %3233 = vmatpush1.msra.mxu0 %v3219
    %3234 = vmatprep.subr.mxu0 0.0
    %3235 = vmatpush1.msra.mxu0 %v3220
    %3236 = vmatprep.subr.mxu0 0.0
    %3237 = vmatpush1.msra.mxu0 0.0
    %3238 = vmatprep.subr.mxu0 0.0
    %3239 = vmatpush1.msra.mxu0 0.0
    %3240 = vmatprep.subr.mxu0 0.0
    %3241 = vmatpush1.msra.mxu0 0.0
    %3242 = vmatprep.subr.mxu0 0.0
    %3243 = vmatpush1.msra.mxu0 0.0
    %3244 = vmatprep.subr.mxu0 0.0
    %3245 = vmatpush1.msra.mxu0 0.0
    %3246 = vmatprep.subr.mxu0 0.0
    %3247 = vmatpush1.msra.mxu0 0.0
    %3248 = vmatprep.subr.mxu0 0.0
    %3249 = vmatpush1.msra.mxu0 0.0
    %3250 = vmatprep.subr.mxu0 0.0
    %3251 = vmatpush1.msra.mxu0 0.0
    %3252 = vmatprep.subr.mxu0 0.0
    %3253 = vmatpush1.msra.mxu0 0.0
    %3254 = vmatprep.subr.mxu0 0.0
    %3255 = vmatpush1.msra.mxu0 0.0
    %3256 = vmatprep.subr.mxu0 0.0
    %3257 = vmatpush1.msra.mxu0 0.0
    %3258 = vmatprep.subr.mxu0 0.0
    %3259 = vmatpush1.msra.mxu0 0.0
    %3260 = vmatprep.subr.mxu0 0.0
    %3261 = vmatpush1.msra.mxu0 0.0
    %3262 = vmatprep.subr.mxu0 0.0
    %3263 = vmatpush1.msra.mxu0 0.0
    %3264 = vmatprep.subr.mxu0 0.0
    %3265 = vmatpush1.msra.mxu0 0.0
    %3266 = vmatprep.subr.mxu0 0.0
    %3267 = vmatpush1.msra.mxu0 0.0
    %3268 = vmatprep.subr.mxu0 0.0
    %3269 = vmatpush1.msra.mxu0 0.0
    %3270 = vmatprep.subr.mxu0 0.0
    %3271 = vmatpush1.msra.mxu0 0.0
    %3272 = vmatprep.subr.mxu0 0.0
    %3273 = vmatpush1.msra.mxu0 0.0
    %3274 = vmatprep.subr.mxu0 0.0
    %3275 = vmatpush1.msra.mxu0 0.0
    %3276 = vmatprep.subr.mxu0 0.0
    %3277 = vmatpush1.msra.mxu0 0.0
    %3278 = vmatprep.subr.mxu0 0.0
    %3279 = vmatpush1.msra.mxu0 0.0
    %3280 = vmatprep.subr.mxu0 0.0
    %3281 = vmatpush1.msra.mxu0 0.0
    %3282 = vmatprep.subr.mxu0 0.0
    %3283 = vmatpush1.msra.mxu0 0.0
    %3284 = vmatprep.subr.mxu0 0.0
    %3285 = vmatpush1.msra.mxu0 0.0
    %3286 = vmatprep.subr.mxu0 0.0
    %3287 = vmatpush1.msra.mxu0 0.0
    %3288 = vmatprep.subr.mxu0 0.0
    %3289 = vmatpush1.msra.mxu0 0.0
    %3290 = vmatprep.subr.mxu0 0.0
    %3291 = vmatpush1.msra.mxu0 0.0
    %3292 = vmatprep.subr.mxu0 0.0
    %3293 = vmatpush1.msra.mxu0 0.0
    %3294 = vmatprep.subr.mxu0 0.0
    %3295 = vmatpush1.msra.mxu0 0.0
    %3296 = vmatprep.mubr.f32.mxu0 0.0
    %3297 = vmatmul.mubr.f32.gmra.mrb[0].mxu0 %v3230
    %v3298 = vpop.f32.mrb[0].mxu0
    %v3299 = vadd.f32 0.0, %v3298
    %v3300 = vpop.f32.mrb[0].mxu0
    %3301 = vdwg.mxu0
    %v3302 = vld [vmem:[%s16] sm:$0xff]
    %v3303 = vld [vmem:[%s16 + $0x8] sm:$0xff]
    %v3304 = vld [vmem:[%s16 + $0x10] sm:$0xff]
    %v3305 = vld [vmem:[%s16 + $0x18] sm:$0xff]
    %v3306 = vld [vmem:[%s17] sm:$0x1]
    %v3308 = vlaneseq
    %v3309 = vshrl.u32 %v3308, 7
    %v3310 = vsub.s32 0, %v3309
    %v3311 = vrot.slane %v3306, %v3310
    %v3314 = vsel %vm72, %v3299, 0
    %3316 = vmatprep.subr.mxu0 0.0
    %3317 = vmatpush1.msra.mxu0 %v3302
    %3318 = vmatprep.subr.mxu0 0.0
    %3319 = vmatpush1.msra.mxu0 %v3303
    %3320 = vmatprep.subr.mxu0 0.0
    %3321 = vmatpush1.msra.mxu0 %v3304
    %3322 = vmatprep.subr.mxu0 0.0
    %3323 = vmatpush1.msra.mxu0 %v3305
    %3324 = vmatprep.subr.mxu0 0.0
    %3325 = vmatpush1.msra.mxu0 0.0
    %3326 = vmatprep.subr.mxu0 0.0
    %3327 = vmatpush1.msra.mxu0 0.0
    %3328 = vmatprep.subr.mxu0 0.0
    %3329 = vmatpush1.msra.mxu0 0.0
    %3330 = vmatprep.subr.mxu0 0.0
    %3331 = vmatpush1.msra.mxu0 0.0
    %3332 = vmatprep.subr.mxu0 0.0
    %3333 = vmatpush1.msra.mxu0 0.0
    %3334 = vmatprep.subr.mxu0 0.0
    %3335 = vmatpush1.msra.mxu0 0.0
    %3336 = vmatprep.subr.mxu0 0.0
    %3337 = vmatpush1.msra.mxu0 0.0
    %3338 = vmatprep.subr.mxu0 0.0
    %3339 = vmatpush1.msra.mxu0 0.0
    %3340 = vmatprep.subr.mxu0 0.0
    %3341 = vmatpush1.msra.mxu0 0.0
    %3342 = vmatprep.subr.mxu0 0.0
    %3343 = vmatpush1.msra.mxu0 0.0
    %3344 = vmatprep.subr.mxu0 0.0
    %3345 = vmatpush1.msra.mxu0 0.0
    %3346 = vmatprep.subr.mxu0 0.0
    %3347 = vmatpush1.msra.mxu0 0.0
    %3348 = vmatprep.subr.mxu0 0.0
    %3349 = vmatpush1.msra.mxu0 0.0
    %3350 = vmatprep.subr.mxu0 0.0
    %3351 = vmatpush1.msra.mxu0 0.0
    %3352 = vmatprep.subr.mxu0 0.0
    %3353 = vmatpush1.msra.mxu0 0.0
    %3354 = vmatprep.subr.mxu0 0.0
    %3355 = vmatpush1.msra.mxu0 0.0
    %3356 = vmatprep.subr.mxu0 0.0
    %3357 = vmatpush1.msra.mxu0 0.0
    %3358 = vmatprep.subr.mxu0 0.0
    %3359 = vmatpush1.msra.mxu0 0.0
    %3360 = vmatprep.subr.mxu0 0.0
    %3361 = vmatpush1.msra.mxu0 0.0
    %3362 = vmatprep.subr.mxu0 0.0
    %3363 = vmatpush1.msra.mxu0 0.0
    %3364 = vmatprep.subr.mxu0 0.0
    %3365 = vmatpush1.msra.mxu0 0.0
    %3366 = vmatprep.subr.mxu0 0.0
    %3367 = vmatpush1.msra.mxu0 0.0
    %3368 = vmatprep.subr.mxu0 0.0
    %3369 = vmatpush1.msra.mxu0 0.0
    %3370 = vmatprep.subr.mxu0 0.0
    %3371 = vmatpush1.msra.mxu0 0.0
    %3372 = vmatprep.subr.mxu0 0.0
    %3373 = vmatpush1.msra.mxu0 0.0
    %3374 = vmatprep.subr.mxu0 0.0
    %3375 = vmatpush1.msra.mxu0 0.0
    %3376 = vmatprep.subr.mxu0 0.0
    %3377 = vmatpush1.msra.mxu0 0.0
    %3378 = vmatprep.subr.mxu0 0.0
    %3379 = vmatpush1.msra.mxu0 0.0
    %3380 = vmatprep.mubr.f32.mxu0 0.0
    %3381 = vmatmul.mubr.f32.gmra.mrb[0].mxu0 %v3314
    %v3382 = vpop.f32.mrb[0].mxu0
    %v3383 = vadd.f32 %v3311, %v3382
    %v3384 = vpop.f32.mrb[0].mxu0
    %3385 = vdwg.mxu0
    %v3386 = vtanh.pop %v3383
    %v3387 = vld [vmem:[%s18] sm:$0xff]
    %v3388 = vld [vmem:[%s18 + $0x8] sm:$0xff]
    %v3389 = vld [vmem:[%s18 + $0x10] sm:$0xff]
    %v3390 = vld [vmem:[%s18 + $0x18] sm:$0xff]
    %v3391 = vld [vmem:[%s19] sm:$0x1]
    %v3393 = vlaneseq
    %v3394 = vshrl.u32 %v3393, 7
    %v3395 = vsub.s32 0, %v3394
    %v3396 = vrot.slane %v3391, %v3395
    %v3399 = vsel %vm72, %v3386, 0
    %3401 = vmatprep.subr.mxu0 0.0
    %3402 = vmatpush1.msra.mxu0 %v3387
    %3403 = vmatprep.subr.mxu0 0.0
    %3404 = vmatpush1.msra.mxu0 %v3388
    %3405 = vmatprep.subr.mxu0 0.0
    %3406 = vmatpush1.msra.mxu0 %v3389
    %3407 = vmatprep.subr.mxu0 0.0
    %3408 = vmatpush1.msra.mxu0 %v3390
    %3409 = vmatprep.subr.mxu0 0.0
    %3410 = vmatpush1.msra.mxu0 0.0
    %3411 = vmatprep.subr.mxu0 0.0
    %3412 = vmatpush1.msra.mxu0 0.0
    %3413 = vmatprep.subr.mxu0 0.0
    %3414 = vmatpush1.msra.mxu0 0.0
    %3415 = vmatprep.subr.mxu0 0.0
    %3416 = vmatpush1.msra.mxu0 0.0
    %3417 = vmatprep.subr.mxu0 0.0
    %3418 = vmatpush1.msra.mxu0 0.0
    %3419 = vmatprep.subr.mxu0 0.0
    %3420 = vmatpush1.msra.mxu0 0.0
    %3421 = vmatprep.subr.mxu0 0.0
    %3422 = vmatpush1.msra.mxu0 0.0
    %3423 = vmatprep.subr.mxu0 0.0
    %3424 = vmatpush1.msra.mxu0 0.0
    %3425 = vmatprep.subr.mxu0 0.0
    %3426 = vmatpush1.msra.mxu0 0.0
    %3427 = vmatprep.subr.mxu0 0.0
    %3428 = vmatpush1.msra.mxu0 0.0
    %3429 = vmatprep.subr.mxu0 0.0
    %3430 = vmatpush1.msra.mxu0 0.0
    %3431 = vmatprep.subr.mxu0 0.0
    %3432 = vmatpush1.msra.mxu0 0.0
    %3433 = vmatprep.subr.mxu0 0.0
    %3434 = vmatpush1.msra.mxu0 0.0
    %3435 = vmatprep.subr.mxu0 0.0
    %3436 = vmatpush1.msra.mxu0 0.0
    %3437 = vmatprep.subr.mxu0 0.0
    %3438 = vmatpush1.msra.mxu0 0.0
    %3439 = vmatprep.subr.mxu0 0.0
    %3440 = vmatpush1.msra.mxu0 0.0
    %3441 = vmatprep.subr.mxu0 0.0
    %3442 = vmatpush1.msra.mxu0 0.0
    %3443 = vmatprep.subr.mxu0 0.0
    %3444 = vmatpush1.msra.mxu0 0.0
    %3445 = vmatprep.subr.mxu0 0.0
    %3446 = vmatpush1.msra.mxu0 0.0
    %3447 = vmatprep.subr.mxu0 0.0
    %3448 = vmatpush1.msra.mxu0 0.0
    %3449 = vmatprep.subr.mxu0 0.0
    %3450 = vmatpush1.msra.mxu0 0.0
    %3451 = vmatprep.subr.mxu0 0.0
    %3452 = vmatpush1.msra.mxu0 0.0
    %3453 = vmatprep.subr.mxu0 0.0
    %3454 = vmatpush1.msra.mxu0 0.0
    %3455 = vmatprep.subr.mxu0 0.0
    %3456 = vmatpush1.msra.mxu0 0.0
    %3457 = vmatprep.subr.mxu0 0.0
    %3458 = vmatpush1.msra.mxu0 0.0
    %3459 = vmatprep.subr.mxu0 0.0
    %3460 = vmatpush1.msra.mxu0 0.0
    %3461 = vmatprep.subr.mxu0 0.0
    %3462 = vmatpush1.msra.mxu0 0.0
    %3463 = vmatprep.subr.mxu0 0.0
    %3464 = vmatpush1.msra.mxu0 0.0
    %3465 = vmatprep.mubr.f32.mxu0 0.0
    %3466 = vmatmul.mubr.f32.gmra.mrb[0].mxu0 %v3399
    %v3467 = vpop.f32.mrb[0].mxu0
    %v3468 = vadd.f32 %v3396, %v3467
    %v3469 = vpop.f32.mrb[0].mxu0
    %3470 = vdwg.mxu0
    %3471 = vst [vmem:[#allocation2] sm:$0x3] %v3468
    // Predicated region
    $region82: #{bert_for_classification.1} parent=1 // pred_check
      _
    $region83: #{bert_for_classification.1} parent=1 // pred_check_branch
      %3473 = sbr.rel (0) target = $region85
    $region84: #{bert_for_classification.1} parent=1 // pred_region
      %s3475 = ssub.s32 32, 32
      %3476 = vsyncadd [#allocation3], %s3475
      %s3478 = sshll.u32 [#allocation2], 4
      %s3479 = int_to_ptr.vmem [resolvable:$true] %s3478
      %3481 = dma.vmem_to_hbm [thread:$0]  %s3479, 32, %s20, [#allocation3]
    $region85: #{bert_for_classification.1} parent=1 // pred_fallthru
      _
    // Predicated region
    $region86: #{bert_for_classification.1} parent=1 // pred_check
      _
    $region87: #{bert_for_classification.1} parent=1 // pred_check_branch
      %3483 = sbr.rel (0) target = $region89
    $region88: #{bert_for_classification.1} parent=1 // pred_region
      %3484 = dma.done [#allocation3], 32
    $region89: #{bert_for_classification.1} parent=1 // pred_fallthru
      _
    %3485 = vsyncpa [#allocation3], 1

</llo_original>
